<compile_context>
chip_gen: v5e
topology: v5e:2x2
jax: 0.10.0
libtpu: 0.0.40
codegen_flags: <defaults>
</compile_context>

<pallas_src>
import functools
import warnings
import numpy as np

import jax
import jax.numpy as jnp
from jax.experimental import pallas as pl
from jax.experimental.pallas import tpu as pltpu

warnings.filterwarnings("ignore", message="Some donated buffers were not usable")


# ---------------------------------------------------------------------------
# In-kernel helper (traced inside the fused Pallas kernel)
# ---------------------------------------------------------------------------
def _conv3x3_im2col(pad_ref, w_ref, b_ref, H, W, Cin, relu):
    """3x3 'same' conv as a single im2col matmul on the MXU.

    pad_ref: VMEM scratch (H+2, W+2, Cin) f32 with a zero halo already in place.
    w_ref:   (9*Cin, Cout) bf16 (im2col-reshaped weights).
    b_ref:   (1, Cout) f32.
    Returns (H*W, Cout) f32.
    """
    taps = []
    for dy in range(3):
        for dx in range(3):
            taps.append(pad_ref[dy:dy + H, dx:dx + W, :].reshape(H * W, Cin))
    # One K = 9*Cin contraction (bf16 operands, f32 accumulation) instead of 9 tiny-K dots.
    patches = jnp.concatenate(taps, axis=1).astype(jnp.bfloat16)
    acc = jnp.dot(patches, w_ref[...], preferred_element_type=jnp.float32)
    acc = acc + b_ref[...]
    if relu:
        acc = jnp.maximum(acc, 0.0)
    return acc


# ---------------------------------------------------------------------------
# Fused DiffPIR iteration kernel: denoiser + L2 prox + stochastic DDIM step
# ---------------------------------------------------------------------------
def _fused_step_kernel(scal_ref, xt_ref, y_ref, noise_ref,
                       w1_ref, b1_ref, w2_ref, b2_ref, w3_ref, b3_ref,
                       xnext_ref, x0_ref, pad1_ref, pad2_ref, *, H, W, C, F):
    # SMEM scalars (reciprocals precomputed on the host -> only multiplies in-kernel).
    inv_sab_t = scal_ref[0]   # 1/sqrt(alpha_bar_t)
    sigma_t = scal_ref[1]     # equivalent denoiser noise level
    gamma = scal_ref[2]       # sigma_t^2 / (lambda * sigma_y^2)
    inv_1pg = scal_ref[3]     # 1/(1+gamma)
    sab_t = scal_ref[4]       # sqrt(alpha_bar_t)
    inv_s1m_t = scal_ref[5]   # 1/sqrt(1-alpha_bar_t)
    sab_p = scal_ref[6]       # sqrt(alpha_bar_prev)
    s1m_p = scal_ref[7]       # sqrt(1-alpha_bar_prev)
    szeta = scal_ref[8]       # sqrt(zeta)
    s1mz = scal_ref[9]        # sqrt(1-zeta)

    xt = xt_ref[0]            # (H, W, C) f32
    y = y_ref[0]
    noise = noise_ref[0]      # pre-generated N(0,1), same shape as xt

    # --- synthetic DRUNet denoiser: x0hat = xin - net([xin, sigma]) -------------
    xin = xt * inv_sab_t      # current iterate rescaled to its equivalent noise level

    # conv1 input: [xin, sigma channel]; zero halo built in VMEM scratch (no jnp.pad).
    pad1_ref[...] = jnp.zeros(pad1_ref.shape, jnp.float32)
    sig = jnp.ones((H, W, 1), jnp.float32) * sigma_t
    pad1_ref[1:H + 1, 1:W + 1, :] = jnp.concatenate([xin, sig], axis=-1)
    h1 = _conv3x3_im2col(pad1_ref, w1_ref, b1_ref, H, W, C + 1, relu=True)

    pad2_ref[...] = jnp.zeros(pad2_ref.shape, jnp.float32)
    pad2_ref[1:H + 1, 1:W + 1, :] = h1.reshape(H, W, F)
    h2 = _conv3x3_im2col(pad2_ref, w2_ref, b2_ref, H, W, F, relu=True)

    pad2_ref[1:H + 1, 1:W + 1, :] = h2.reshape(H, W, F)
    r = _conv3x3_im2col(pad2_ref, w3_ref, b3_ref, H, W, F, relu=False)

    x0hat = xin - r.reshape(H, W, C)          # residual prediction of the clean image

    # --- L2 data-fidelity prox (A = Identity) + stochastic DDIM resampling ------
    x0 = (x0hat + gamma * y) * inv_1pg
    eps_hat = (xt - sab_t * x0) * inv_s1m_t

    xnext_ref[0] = sab_p * x0 + s1m_p * (s1mz * eps_hat + szeta * noise)
    x0_ref[0] = x0


def _fused_step(scalars, xt, y, noise, w1, b1, w2, b2, w3, b3):
    N, H, W, C = xt.shape
    F = w2.shape[1]
    kern = functools.partial(_fused_step_kernel, H=H, W=W, C=C, F=F)

    smem = pl.BlockSpec(memory_space=pltpu.MemorySpace.SMEM)
    img = pl.BlockSpec((1, H, W, C), lambda n: (n, 0, 0, 0))

    def full(arr):
        return pl.BlockSpec(arr.shape, lambda n: (0,) * arr.ndim)

    return pl.pallas_call(
        kern,
        out_shape=(jax.ShapeDtypeStruct((N, H, W, C), jnp.float32),
                   jax.ShapeDtypeStruct((N, H, W, C), jnp.float32)),
        grid=(N,),
        in_specs=[smem, img, img, img,
                  full(w1), full(b1), full(w2), full(b2), full(w3), full(b3)],
        out_specs=(img, img),
        scratch_shapes=[pltpu.VMEM((H + 2, W + 2, C + 1), jnp.float32),
                        pltpu.VMEM((H + 2, W + 2, F), jnp.float32)],
        input_output_aliases={1: 0},          # xnext overwrites xt's HBM buffer
        compiler_params=pltpu.CompilerParams(
            dimension_semantics=("parallel",)),   # v7x: shard batch across both TCs
    )(scalars, xt, y, noise, w1, b1, w2, b2, w3, b3)


_fused_step_jit = jax.jit(_fused_step, donate_argnums=(1,))


# ---------------------------------------------------------------------------
# Synthetic DRUNet-style denoiser parameters (deterministic, bf16 im2col weights)
# ---------------------------------------------------------------------------
class SyntheticDRUNet:
    def __init__(self, key, in_ch=3, feat=32):
        self.in_ch = in_ch
        self.feat = feat
        k1, k2, k3 = jax.random.split(key, 3)

        def init(k, cin, cout):
            w = jax.random.normal(k, (3, 3, cin, cout), jnp.float32) * np.sqrt(2.0 / (9 * cin))
            # pre-reshaped to im2col layout (9*Cin, Cout), MXU-native bf16
            return (w.reshape(9 * cin, cout).astype(jnp.bfloat16),
                    jnp.zeros((1, cout), jnp.float32))

        self.w1, self.b1 = init(k1, in_ch + 1, feat)   # +1: noise-level channel
        self.w2, self.b2 = init(k2, feat, feat)
        self.w3, self.b3 = init(k3, feat, in_ch)


# ---------------------------------------------------------------------------
# DiffPIR (denoising physics, L2 data fidelity), mirroring the torch forward():
#   reflect-pad H,W to multiples of 16 (DiffUNet branch) -> backbone loop -> crop.
# ---------------------------------------------------------------------------
class DiffPIRPallas:
    def __init__(self, key, sigma_noise=0.05, max_iter=3, zeta=0.3, lambda_=7.0,
                 T=1000, in_ch=3, feat=32):
        self.sigma_noise = float(sigma_noise)
        self.zeta = float(zeta)
        self.lambda_ = float(lambda_)
        self.diffunet = True       # exercise the DiffUNet pad/crop branch
        betas = np.linspace(1e-4, 0.02, T, dtype=np.float64)
        self.alpha_bar = np.cumprod(1.0 - betas)
        self.timesteps = np.unique(np.linspace(T - 1, 1, max_iter).astype(int))[::-1]
        self.denoiser = SyntheticDRUNet(key, in_ch=in_ch, feat=feat)

    def forward(self, y_nchw, key):
        N, C, H0, W0 = y_nchw.shape
        # --- DiffUNet branch: reflect pad to multiples of 16 (matches F.pad reflect) ---
        pad_h = (16 - H0 % 16) % 16
        pad_w = (16 - W0 % 16) % 16
        y = jnp.pad(y_nchw, ((0, 0), (0, 0), (0, pad_h), (0, pad_w)), mode="reflect")

        # NCHW -> NHWC for the kernels
        y_nhwc = jnp.transpose(y, (0, 2, 3, 1)).astype(jnp.float32)

        ab, ts = self.alpha_bar, self.timesteps
        t0 = int(ts[0])

        keys = jax.random.split(key, 1 + len(ts))
        noise0 = jax.random.normal(keys[0], y_nhwc.shape, jnp.float32)
        xt = np.float32(np.sqrt(ab[t0])) * y_nhwc + np.float32(np.sqrt(1.0 - ab[t0])) * noise0
        x0 = y_nhwc
        d = self.denoiser

        for i, t in enumerate(ts):
            ab_t = float(ab[int(t)])
            ab_prev = float(ab[int(ts[i + 1])]) if i + 1 < len(ts) else 1.0
            sigma_t = float(np.sqrt((1.0 - ab_t) / ab_t))
            gamma = sigma_t ** 2 / (self.lambda_ * self.sigma_noise ** 2)

            # all divisions precomputed host-side (exact reciprocals)
            scalars = jnp.array(
                [1.0 / np.sqrt(ab_t), sigma_t, gamma, 1.0 / (1.0 + gamma),
                 np.sqrt(ab_t), 1.0 / np.sqrt(1.0 - ab_t),
                 np.sqrt(ab_prev), np.sqrt(1.0 - ab_prev),
                 np.sqrt(self.zeta), np.sqrt(1.0 - self.zeta)],
                dtype=jnp.float32)

            # Gaussian noise for the stochastic resampling (host-side generation:
            # the TPU in-kernel PRNG primitive has no interpret/CPU lowering).
            noise_i = jax.random.normal(keys[1 + i], y_nhwc.shape, jnp.float32)

            xt, x0 = _fused_step_jit(scalars, xt, y_nhwc, noise_i,
                                     d.w1, d.b1, d.w2, d.b2, d.w3, d.b3)

        # NHWC -> NCHW
        x_hat = jnp.transpose(x0, (0, 3, 1, 2))

        # --- DiffUNet branch: crop (physics has no `rate` attribute -> r = 1) ---
        out_h = 1 * (y.shape[2] - pad_h)
        out_w = 1 * (y.shape[3] - pad_w)
        return x_hat[:, :, :out_h, :out_w]


if __name__ == "__main__":
    key = jax.random.PRNGKey(0)
    k_model, k_data, k_run = jax.random.split(key, 3)

    model = DiffPIRPallas(k_model, sigma_noise=0.05, max_iter=3, in_ch=3, feat=32)

    # small measurement y (NCHW); 14x15 exercises the reflect-pad-to-16 path
    y = jax.random.uniform(k_data, (2, 3, 14, 15), jnp.float32)

    x_hat = model.forward(y, k_run)
    x_hat = jax.block_until_ready(x_hat)

    assert x_hat.shape == (2, 3, 14, 15), x_hat.shape
    assert bool(jnp.all(jnp.isfinite(x_hat)))
    print("KERNEL_OK")
</pallas_src>

<mosaic_0001>
module attributes {stable_mosaic.version = 11 : i64} {
  func.func @_fused_step_kernel(%arg0: i32, %arg1: memref<10xf32, #tpu.memory_space<smem>>, %arg2: memref<1x16x16x3xf32, #tpu.memory_space<vmem>>, %arg3: memref<1x16x16x3xf32, #tpu.memory_space<vmem>>, %arg4: memref<1x16x16x3xf32, #tpu.memory_space<vmem>>, %arg5: memref<36x32xbf16, #tpu.memory_space<vmem>>, %arg6: memref<1x32xf32, #tpu.memory_space<vmem>>, %arg7: memref<288x32xbf16, #tpu.memory_space<vmem>>, %arg8: memref<1x32xf32, #tpu.memory_space<vmem>>, %arg9: memref<288x3xbf16, #tpu.memory_space<vmem>>, %arg10: memref<1x3xf32, #tpu.memory_space<vmem>>, %arg11: memref<1x16x16x3xf32, #tpu.memory_space<vmem>>, %arg12: memref<1x16x16x3xf32, #tpu.memory_space<vmem>>, %arg13: memref<18x18x4xf32, #tpu.memory_space<vmem>>, %arg14: memref<18x18x32xf32, #tpu.memory_space<vmem>>) attributes {dimension_semantics = [#tpu.dimension_semantics<parallel>], iteration_bounds = array<i64: 2>, scalar_prefetch = 0 : i64, scratch_operands = 2 : i64, tpu.core_type = #tpu.core_type<tc>, window_params = [{transform_indices = @transform_0, window_bounds = array<i64: 10>}, {transform_indices = @transform_1, window_bounds = array<i64: 1, 16, 16, 3>}, {transform_indices = @transform_2, window_bounds = array<i64: 1, 16, 16, 3>}, {transform_indices = @transform_3, window_bounds = array<i64: 1, 16, 16, 3>}, {pipeline_mode = #tpu.pipeline_mode<synchronous>, transform_indices = @transform_4, window_bounds = array<i64: 36, 32>}, {pipeline_mode = #tpu.pipeline_mode<synchronous>, transform_indices = @transform_5, window_bounds = array<i64: 1, 32>}, {pipeline_mode = #tpu.pipeline_mode<synchronous>, transform_indices = @transform_6, window_bounds = array<i64: 288, 32>}, {pipeline_mode = #tpu.pipeline_mode<synchronous>, transform_indices = @transform_7, window_bounds = array<i64: 1, 32>}, {pipeline_mode = #tpu.pipeline_mode<synchronous>, transform_indices = @transform_8, window_bounds = array<i64: 288, 3>}, {pipeline_mode = #tpu.pipeline_mode<synchronous>, transform_indices = @transform_9, window_bounds = array<i64: 1, 3>}, {transform_indices = @transform_10, window_bounds = array<i64: 1, 16, 16, 3>}, {transform_indices = @transform_11, window_bounds = array<i64: 1, 16, 16, 3>}]} {
    %c0 = arith.constant 0 : index
    %0 = memref.load %arg1[%c0] : memref<10xf32, #tpu.memory_space<smem>>
    %c1 = arith.constant 1 : index
    %1 = memref.load %arg1[%c1] : memref<10xf32, #tpu.memory_space<smem>>
    %c2 = arith.constant 2 : index
    %2 = memref.load %arg1[%c2] : memref<10xf32, #tpu.memory_space<smem>>
    %c3 = arith.constant 3 : index
    %3 = memref.load %arg1[%c3] : memref<10xf32, #tpu.memory_space<smem>>
    %c4 = arith.constant 4 : index
    %4 = memref.load %arg1[%c4] : memref<10xf32, #tpu.memory_space<smem>>
    %c5 = arith.constant 5 : index
    %5 = memref.load %arg1[%c5] : memref<10xf32, #tpu.memory_space<smem>>
    %c6 = arith.constant 6 : index
    %6 = memref.load %arg1[%c6] : memref<10xf32, #tpu.memory_space<smem>>
    %c7 = arith.constant 7 : index
    %7 = memref.load %arg1[%c7] : memref<10xf32, #tpu.memory_space<smem>>
    %c8 = arith.constant 8 : index
    %8 = memref.load %arg1[%c8] : memref<10xf32, #tpu.memory_space<smem>>
    %c9 = arith.constant 9 : index
    %9 = memref.load %arg1[%c9] : memref<10xf32, #tpu.memory_space<smem>>
    %c0_0 = arith.constant 0 : index
    %c0_1 = arith.constant 0 : index
    %c0_2 = arith.constant 0 : index
    %c0_3 = arith.constant 0 : index
    %10 = vector.load %arg2[%c0_0, %c0_1, %c0_2, %c0_3] : memref<1x16x16x3xf32, #tpu.memory_space<vmem>>, vector<1x16x16x3xf32>
    %11 = vector.shape_cast %10 : vector<1x16x16x3xf32> to vector<16x16x3xf32>
    %c0_4 = arith.constant 0 : index
    %c0_5 = arith.constant 0 : index
    %c0_6 = arith.constant 0 : index
    %c0_7 = arith.constant 0 : index
    %12 = vector.load %arg3[%c0_4, %c0_5, %c0_6, %c0_7] : memref<1x16x16x3xf32, #tpu.memory_space<vmem>>, vector<1x16x16x3xf32>
    %13 = vector.shape_cast %12 : vector<1x16x16x3xf32> to vector<16x16x3xf32>
    %c0_8 = arith.constant 0 : index
    %c0_9 = arith.constant 0 : index
    %c0_10 = arith.constant 0 : index
    %c0_11 = arith.constant 0 : index
    %14 = vector.load %arg4[%c0_8, %c0_9, %c0_10, %c0_11] : memref<1x16x16x3xf32, #tpu.memory_space<vmem>>, vector<1x16x16x3xf32>
    %15 = vector.shape_cast %14 : vector<1x16x16x3xf32> to vector<16x16x3xf32>
    %16 = vector.broadcast %0 : f32 to vector<16x16x3xf32>
    %17 = arith.mulf %11, %16 : vector<16x16x3xf32>
    %cst = arith.constant 0.000000e+00 : f32
    %18 = vector.broadcast %cst : f32 to vector<18x18x4xf32>
    %c0_12 = arith.constant 0 : index
    %c0_13 = arith.constant 0 : index
    %c0_14 = arith.constant 0 : index
    %19 = vector.load %arg13[%c0_12, %c0_13, %c0_14] : memref<18x18x4xf32, #tpu.memory_space<vmem>>, vector<18x18x4xf32>
    tpu.vector_store %arg13[%c0_12, %c0_13, %c0_14], %18 {strides = array<i32>} : memref<18x18x4xf32, #tpu.memory_space<vmem>>, vector<18x18x4xf32>,
    %cst_15 = arith.constant 1.000000e+00 : f32
    %20 = vector.broadcast %cst_15 : f32 to vector<16x16x1xf32>
    %21 = vector.broadcast %1 : f32 to vector<16x16x1xf32>
    %22 = arith.mulf %20, %21 : vector<16x16x1xf32>
    %23 = tpu.concatenate %17, %22 in 2 : vector<16x16x3xf32>, vector<16x16x1xf32> -> vector<16x16x4xf32>
    %c1_16 = arith.constant 1 : index
    %c1_17 = arith.constant 1 : index
    %c0_18 = arith.constant 0 : index
    %24 = vector.load %arg13[%c1_16, %c1_17, %c0_18] : memref<18x18x4xf32, #tpu.memory_space<vmem>>, vector<16x16x4xf32>
    tpu.vector_store %arg13[%c1_16, %c1_17, %c0_18], %23 {strides = array<i32>} : memref<18x18x4xf32, #tpu.memory_space<vmem>>, vector<16x16x4xf32>,
    %c0_19 = arith.constant 0 : index
    %c0_20 = arith.constant 0 : index
    %c0_21 = arith.constant 0 : index
    %25 = vector.load %arg13[%c0_19, %c0_20, %c0_21] : memref<18x18x4xf32, #tpu.memory_space<vmem>>, vector<16x16x4xf32>
    %26 = vector.shape_cast %25 : vector<16x16x4xf32> to vector<256x4xf32>
    %c0_22 = arith.constant 0 : index
    %c1_23 = arith.constant 1 : index
    %c0_24 = arith.constant 0 : index
    %27 = vector.load %arg13[%c0_22, %c1_23, %c0_24] : memref<18x18x4xf32, #tpu.memory_space<vmem>>, vector<16x16x4xf32>
    %28 = vector.shape_cast %27 : vector<16x16x4xf32> to vector<256x4xf32>
    %c0_25 = arith.constant 0 : index
    %c2_26 = arith.constant 2 : index
    %c0_27 = arith.constant 0 : index
    %29 = vector.load %arg13[%c0_25, %c2_26, %c0_27] : memref<18x18x4xf32, #tpu.memory_space<vmem>>, vector<16x16x4xf32>
    %30 = vector.shape_cast %29 : vector<16x16x4xf32> to vector<256x4xf32>
    %c1_28 = arith.constant 1 : index
    %c0_29 = arith.constant 0 : index
    %c0_30 = arith.constant 0 : index
    %31 = vector.load %arg13[%c1_28, %c0_29, %c0_30] : memref<18x18x4xf32, #tpu.memory_space<vmem>>, vector<16x16x4xf32>
    %32 = vector.shape_cast %31 : vector<16x16x4xf32> to vector<256x4xf32>
    %c1_31 = arith.constant 1 : index
    %c1_32 = arith.constant 1 : index
    %c0_33 = arith.constant 0 : index
    %33 = vector.load %arg13[%c1_31, %c1_32, %c0_33] : memref<18x18x4xf32, #tpu.memory_space<vmem>>, vector<16x16x4xf32>
    %34 = vector.shape_cast %33 : vector<16x16x4xf32> to vector<256x4xf32>
    %c1_34 = arith.constant 1 : index
    %c2_35 = arith.constant 2 : index
    %c0_36 = arith.constant 0 : index
    %35 = vector.load %arg13[%c1_34, %c2_35, %c0_36] : memref<18x18x4xf32, #tpu.memory_space<vmem>>, vector<16x16x4xf32>
    %36 = vector.shape_cast %35 : vector<16x16x4xf32> to vector<256x4xf32>
    %c2_37 = arith.constant 2 : index
    %c0_38 = arith.constant 0 : index
    %c0_39 = arith.constant 0 : index
    %37 = vector.load %arg13[%c2_37, %c0_38, %c0_39] : memref<18x18x4xf32, #tpu.memory_space<vmem>>, vector<16x16x4xf32>
    %38 = vector.shape_cast %37 : vector<16x16x4xf32> to vector<256x4xf32>
    %c2_40 = arith.constant 2 : index
    %c1_41 = arith.constant 1 : index
    %c0_42 = arith.constant 0 : index
    %39 = vector.load %arg13[%c2_40, %c1_41, %c0_42] : memref<18x18x4xf32, #tpu.memory_space<vmem>>, vector<16x16x4xf32>
    %40 = vector.shape_cast %39 : vector<16x16x4xf32> to vector<256x4xf32>
    %c2_43 = arith.constant 2 : index
    %c2_44 = arith.constant 2 : index
    %c0_45 = arith.constant 0 : index
    %41 = vector.load %arg13[%c2_43, %c2_44, %c0_45] : memref<18x18x4xf32, #tpu.memory_space<vmem>>, vector<16x16x4xf32>
    %42 = vector.shape_cast %41 : vector<16x16x4xf32> to vector<256x4xf32>
    %43 = tpu.concatenate %26, %28, %30, %32, %34, %36, %38, %40, %42 in 1 : vector<256x4xf32>, vector<256x4xf32>, vector<256x4xf32>, vector<256x4xf32>, vector<256x4xf32>, vector<256x4xf32>, vector<256x4xf32>, vector<256x4xf32>, vector<256x4xf32> -> vector<256x36xf32>
    %44 = arith.truncf %43 : vector<256x36xf32> to vector<256x36xbf16>
    %c0_46 = arith.constant 0 : index
    %c0_47 = arith.constant 0 : index
    %45 = vector.load %arg5[%c0_46, %c0_47] : memref<36x32xbf16, #tpu.memory_space<vmem>>, vector<36x32xbf16>
    %cst_48 = arith.constant dense<0.000000e+00> : vector<256x32xf32>
    %46 = tpu.matmul %44, %45, %cst_48 {dimension_numbers = #tpu.dot_dimension_numbers<[1], [0], [0], [1], [0, 0, 1, 1], [], []>} : vector<256x36xbf16>, vector<36x32xbf16>, vector<256x32xf32> -> vector<256x32xf32>
    %c0_49 = arith.constant 0 : index
    %c0_50 = arith.constant 0 : index
    %47 = vector.load %arg6[%c0_49, %c0_50] : memref<1x32xf32, #tpu.memory_space<vmem>>, vector<1x32xf32>
    %48 = vector.broadcast %47 : vector<1x32xf32> to vector<256x32xf32>
    %49 = arith.addf %46, %48 : vector<256x32xf32>
    %cst_51 = arith.constant 0.000000e+00 : f32
    %50 = vector.broadcast %cst_51 : f32 to vector<256x32xf32>
    %51 = arith.maximumf %49, %50 : vector<256x32xf32>
    %cst_52 = arith.constant 0.000000e+00 : f32
    %52 = vector.broadcast %cst_52 : f32 to vector<18x18x32xf32>
    %c0_53 = arith.constant 0 : index
    %c0_54 = arith.constant 0 : index
    %c0_55 = arith.constant 0 : index
    %53 = vector.load %arg14[%c0_53, %c0_54, %c0_55] : memref<18x18x32xf32, #tpu.memory_space<vmem>>, vector<18x18x32xf32>
    tpu.vector_store %arg14[%c0_53, %c0_54, %c0_55], %52 {strides = array<i32>} : memref<18x18x32xf32, #tpu.memory_space<vmem>>, vector<18x18x32xf32>,
    %54 = vector.shape_cast %51 : vector<256x32xf32> to vector<16x16x32xf32>
    %c1_56 = arith.constant 1 : index
    %c1_57 = arith.constant 1 : index
    %c0_58 = arith.constant 0 : index
    %55 = vector.load %arg14[%c1_56, %c1_57, %c0_58] : memref<18x18x32xf32, #tpu.memory_space<vmem>>, vector<16x16x32xf32>
    tpu.vector_store %arg14[%c1_56, %c1_57, %c0_58], %54 {strides = array<i32>} : memref<18x18x32xf32, #tpu.memory_space<vmem>>, vector<16x16x32xf32>,
    %c0_59 = arith.constant 0 : index
    %c0_60 = arith.constant 0 : index
    %c0_61 = arith.constant 0 : index
    %56 = vector.load %arg14[%c0_59, %c0_60, %c0_61] : memref<18x18x32xf32, #tpu.memory_space<vmem>>, vector<16x16x32xf32>
    %57 = vector.shape_cast %56 : vector<16x16x32xf32> to vector<256x32xf32>
    %c0_62 = arith.constant 0 : index
    %c1_63 = arith.constant 1 : index
    %c0_64 = arith.constant 0 : index
    %58 = vector.load %arg14[%c0_62, %c1_63, %c0_64] : memref<18x18x32xf32, #tpu.memory_space<vmem>>, vector<16x16x32xf32>
    %59 = vector.shape_cast %58 : vector<16x16x32xf32> to vector<256x32xf32>
    %c0_65 = arith.constant 0 : index
    %c2_66 = arith.constant 2 : index
    %c0_67 = arith.constant 0 : index
    %60 = vector.load %arg14[%c0_65, %c2_66, %c0_67] : memref<18x18x32xf32, #tpu.memory_space<vmem>>, vector<16x16x32xf32>
    %61 = vector.shape_cast %60 : vector<16x16x32xf32> to vector<256x32xf32>
    %c1_68 = arith.constant 1 : index
    %c0_69 = arith.constant 0 : index
    %c0_70 = arith.constant 0 : index
    %62 = vector.load %arg14[%c1_68, %c0_69, %c0_70] : memref<18x18x32xf32, #tpu.memory_space<vmem>>, vector<16x16x32xf32>
    %63 = vector.shape_cast %62 : vector<16x16x32xf32> to vector<256x32xf32>
    %c1_71 = arith.constant 1 : index
    %c1_72 = arith.constant 1 : index
    %c0_73 = arith.constant 0 : index
    %64 = vector.load %arg14[%c1_71, %c1_72, %c0_73] : memref<18x18x32xf32, #tpu.memory_space<vmem>>, vector<16x16x32xf32>
    %65 = vector.shape_cast %64 : vector<16x16x32xf32> to vector<256x32xf32>
    %c1_74 = arith.constant 1 : index
    %c2_75 = arith.constant 2 : index
    %c0_76 = arith.constant 0 : index
    %66 = vector.load %arg14[%c1_74, %c2_75, %c0_76] : memref<18x18x32xf32, #tpu.memory_space<vmem>>, vector<16x16x32xf32>
    %67 = vector.shape_cast %66 : vector<16x16x32xf32> to vector<256x32xf32>
    %c2_77 = arith.constant 2 : index
    %c0_78 = arith.constant 0 : index
    %c0_79 = arith.constant 0 : index
    %68 = vector.load %arg14[%c2_77, %c0_78, %c0_79] : memref<18x18x32xf32, #tpu.memory_space<vmem>>, vector<16x16x32xf32>
    %69 = vector.shape_cast %68 : vector<16x16x32xf32> to vector<256x32xf32>
    %c2_80 = arith.constant 2 : index
    %c1_81 = arith.constant 1 : index
    %c0_82 = arith.constant 0 : index
    %70 = vector.load %arg14[%c2_80, %c1_81, %c0_82] : memref<18x18x32xf32, #tpu.memory_space<vmem>>, vector<16x16x32xf32>
    %71 = vector.shape_cast %70 : vector<16x16x32xf32> to vector<256x32xf32>
    %c2_83 = arith.constant 2 : index
    %c2_84 = arith.constant 2 : index
    %c0_85 = arith.constant 0 : index
    %72 = vector.load %arg14[%c2_83, %c2_84, %c0_85] : memref<18x18x32xf32, #tpu.memory_space<vmem>>, vector<16x16x32xf32>
    %73 = vector.shape_cast %72 : vector<16x16x32xf32> to vector<256x32xf32>
    %74 = tpu.concatenate %57, %59, %61, %63, %65, %67, %69, %71, %73 in 1 : vector<256x32xf32>, vector<256x32xf32>, vector<256x32xf32>, vector<256x32xf32>, vector<256x32xf32>, vector<256x32xf32>, vector<256x32xf32>, vector<256x32xf32>, vector<256x32xf32> -> vector<256x288xf32>
    %75 = arith.truncf %74 : vector<256x288xf32> to vector<256x288xbf16>
    %c0_86 = arith.constant 0 : index
    %c0_87 = arith.constant 0 : index
    %76 = vector.load %arg7[%c0_86, %c0_87] : memref<288x32xbf16, #tpu.memory_space<vmem>>, vector<288x32xbf16>
    %cst_88 = arith.constant dense<0.000000e+00> : vector<256x32xf32>
    %77 = tpu.matmul %75, %76, %cst_88 {dimension_numbers = #tpu.dot_dimension_numbers<[1], [0], [0], [1], [0, 0, 1, 1], [], []>} : vector<256x288xbf16>, vector<288x32xbf16>, vector<256x32xf32> -> vector<256x32xf32>
    %c0_89 = arith.constant 0 : index
    %c0_90 = arith.constant 0 : index
    %78 = vector.load %arg8[%c0_89, %c0_90] : memref<1x32xf32, #tpu.memory_space<vmem>>, vector<1x32xf32>
    %79 = vector.broadcast %78 : vector<1x32xf32> to vector<256x32xf32>
    %80 = arith.addf %77, %79 : vector<256x32xf32>
    %cst_91 = arith.constant 0.000000e+00 : f32
    %81 = vector.broadcast %cst_91 : f32 to vector<256x32xf32>
    %82 = arith.maximumf %80, %81 : vector<256x32xf32>
    %83 = vector.shape_cast %82 : vector<256x32xf32> to vector<16x16x32xf32>
    %c1_92 = arith.constant 1 : index
    %c1_93 = arith.constant 1 : index
    %c0_94 = arith.constant 0 : index
    %84 = vector.load %arg14[%c1_92, %c1_93, %c0_94] : memref<18x18x32xf32, #tpu.memory_space<vmem>>, vector<16x16x32xf32>
    tpu.vector_store %arg14[%c1_92, %c1_93, %c0_94], %83 {strides = array<i32>} : memref<18x18x32xf32, #tpu.memory_space<vmem>>, vector<16x16x32xf32>,
    %c0_95 = arith.constant 0 : index
    %c0_96 = arith.constant 0 : index
    %c0_97 = arith.constant 0 : index
    %85 = vector.load %arg14[%c0_95, %c0_96, %c0_97] : memref<18x18x32xf32, #tpu.memory_space<vmem>>, vector<16x16x32xf32>
    %86 = vector.shape_cast %85 : vector<16x16x32xf32> to vector<256x32xf32>
    %c0_98 = arith.constant 0 : index
    %c1_99 = arith.constant 1 : index
    %c0_100 = arith.constant 0 : index
    %87 = vector.load %arg14[%c0_98, %c1_99, %c0_100] : memref<18x18x32xf32, #tpu.memory_space<vmem>>, vector<16x16x32xf32>
    %88 = vector.shape_cast %87 : vector<16x16x32xf32> to vector<256x32xf32>
    %c0_101 = arith.constant 0 : index
    %c2_102 = arith.constant 2 : index
    %c0_103 = arith.constant 0 : index
    %89 = vector.load %arg14[%c0_101, %c2_102, %c0_103] : memref<18x18x32xf32, #tpu.memory_space<vmem>>, vector<16x16x32xf32>
    %90 = vector.shape_cast %89 : vector<16x16x32xf32> to vector<256x32xf32>
    %c1_104 = arith.constant 1 : index
    %c0_105 = arith.constant 0 : index
    %c0_106 = arith.constant 0 : index
    %91 = vector.load %arg14[%c1_104, %c0_105, %c0_106] : memref<18x18x32xf32, #tpu.memory_space<vmem>>, vector<16x16x32xf32>
    %92 = vector.shape_cast %91 : vector<16x16x32xf32> to vector<256x32xf32>
    %c1_107 = arith.constant 1 : index
    %c1_108 = arith.constant 1 : index
    %c0_109 = arith.constant 0 : index
    %93 = vector.load %arg14[%c1_107, %c1_108, %c0_109] : memref<18x18x32xf32, #tpu.memory_space<vmem>>, vector<16x16x32xf32>
    %94 = vector.shape_cast %93 : vector<16x16x32xf32> to vector<256x32xf32>
    %c1_110 = arith.constant 1 : index
    %c2_111 = arith.constant 2 : index
    %c0_112 = arith.constant 0 : index
    %95 = vector.load %arg14[%c1_110, %c2_111, %c0_112] : memref<18x18x32xf32, #tpu.memory_space<vmem>>, vector<16x16x32xf32>
    %96 = vector.shape_cast %95 : vector<16x16x32xf32> to vector<256x32xf32>
    %c2_113 = arith.constant 2 : index
    %c0_114 = arith.constant 0 : index
    %c0_115 = arith.constant 0 : index
    %97 = vector.load %arg14[%c2_113, %c0_114, %c0_115] : memref<18x18x32xf32, #tpu.memory_space<vmem>>, vector<16x16x32xf32>
    %98 = vector.shape_cast %97 : vector<16x16x32xf32> to vector<256x32xf32>
    %c2_116 = arith.constant 2 : index
    %c1_117 = arith.constant 1 : index
    %c0_118 = arith.constant 0 : index
    %99 = vector.load %arg14[%c2_116, %c1_117, %c0_118] : memref<18x18x32xf32, #tpu.memory_space<vmem>>, vector<16x16x32xf32>
    %100 = vector.shape_cast %99 : vector<16x16x32xf32> to vector<256x32xf32>
    %c2_119 = arith.constant 2 : index
    %c2_120 = arith.constant 2 : index
    %c0_121 = arith.constant 0 : index
    %101 = vector.load %arg14[%c2_119, %c2_120, %c0_121] : memref<18x18x32xf32, #tpu.memory_space<vmem>>, vector<16x16x32xf32>
    %102 = vector.shape_cast %101 : vector<16x16x32xf32> to vector<256x32xf32>
    %103 = tpu.concatenate %86, %88, %90, %92, %94, %96, %98, %100, %102 in 1 : vector<256x32xf32>, vector<256x32xf32>, vector<256x32xf32>, vector<256x32xf32>, vector<256x32xf32>, vector<256x32xf32>, vector<256x32xf32>, vector<256x32xf32>, vector<256x32xf32> -> vector<256x288xf32>
    %104 = arith.truncf %103 : vector<256x288xf32> to vector<256x288xbf16>
    %c0_122 = arith.constant 0 : index
    %c0_123 = arith.constant 0 : index
    %105 = vector.load %arg9[%c0_122, %c0_123] : memref<288x3xbf16, #tpu.memory_space<vmem>>, vector<288x3xbf16>
    %cst_124 = arith.constant dense<0.000000e+00> : vector<256x3xf32>
    %106 = tpu.matmul %104, %105, %cst_124 {dimension_numbers = #tpu.dot_dimension_numbers<[1], [0], [0], [1], [0, 0, 1, 1], [], []>} : vector<256x288xbf16>, vector<288x3xbf16>, vector<256x3xf32> -> vector<256x3xf32>
    %c0_125 = arith.constant 0 : index
    %c0_126 = arith.constant 0 : index
    %107 = vector.load %arg10[%c0_125, %c0_126] : memref<1x3xf32, #tpu.memory_space<vmem>>, vector<1x3xf32>
    %108 = vector.broadcast %107 : vector<1x3xf32> to vector<256x3xf32>
    %109 = arith.addf %106, %108 : vector<256x3xf32>
    %110 = vector.shape_cast %109 : vector<256x3xf32> to vector<16x16x3xf32>
    %111 = arith.subf %17, %110 : vector<16x16x3xf32>
    %112 = vector.broadcast %2 : f32 to vector<16x16x3xf32>
    %113 = arith.mulf %112, %13 : vector<16x16x3xf32>
    %114 = arith.addf %111, %113 : vector<16x16x3xf32>
    %115 = vector.broadcast %3 : f32 to vector<16x16x3xf32>
    %116 = arith.mulf %114, %115 : vector<16x16x3xf32>
    %117 = vector.broadcast %4 : f32 to vector<16x16x3xf32>
    %118 = arith.mulf %117, %116 : vector<16x16x3xf32>
    %119 = arith.subf %11, %118 : vector<16x16x3xf32>
    %120 = vector.broadcast %5 : f32 to vector<16x16x3xf32>
    %121 = arith.mulf %119, %120 : vector<16x16x3xf32>
    %122 = vector.broadcast %6 : f32 to vector<16x16x3xf32>
    %123 = arith.mulf %122, %116 : vector<16x16x3xf32>
    %124 = vector.broadcast %9 : f32 to vector<16x16x3xf32>
    %125 = arith.mulf %124, %121 : vector<16x16x3xf32>
    %126 = vector.broadcast %8 : f32 to vector<16x16x3xf32>
    %127 = arith.mulf %126, %15 : vector<16x16x3xf32>
    %128 = arith.addf %125, %127 : vector<16x16x3xf32>
    %129 = vector.broadcast %7 : f32 to vector<16x16x3xf32>
    %130 = arith.mulf %129, %128 : vector<16x16x3xf32>
    %131 = arith.addf %123, %130 : vector<16x16x3xf32>
    %c0_127 = arith.constant 0 : index
    %c0_128 = arith.constant 0 : index
    %c0_129 = arith.constant 0 : index
    %c0_130 = arith.constant 0 : index
    %132 = vector.load %arg11[%c0_127, %c0_128, %c0_129, %c0_130] : memref<1x16x16x3xf32, #tpu.memory_space<vmem>>, vector<1x16x16x3xf32>
    %133 = vector.shape_cast %132 : vector<1x16x16x3xf32> to vector<16x16x3xf32>
    %134 = vector.shape_cast %131 : vector<16x16x3xf32> to vector<1x16x16x3xf32>
    tpu.vector_store %arg11[%c0_127, %c0_128, %c0_129, %c0_130], %134 {strides = array<i32>} : memref<1x16x16x3xf32, #tpu.memory_space<vmem>>, vector<1x16x16x3xf32>,
    %c0_131 = arith.constant 0 : index
    %c0_132 = arith.constant 0 : index
    %c0_133 = arith.constant 0 : index
    %c0_134 = arith.constant 0 : index
    %135 = vector.load %arg12[%c0_131, %c0_132, %c0_133, %c0_134] : memref<1x16x16x3xf32, #tpu.memory_space<vmem>>, vector<1x16x16x3xf32>
    %136 = vector.shape_cast %135 : vector<1x16x16x3xf32> to vector<16x16x3xf32>
    %137 = vector.shape_cast %116 : vector<16x16x3xf32> to vector<1x16x16x3xf32>
    tpu.vector_store %arg12[%c0_131, %c0_132, %c0_133, %c0_134], %137 {strides = array<i32>} : memref<1x16x16x3xf32, #tpu.memory_space<vmem>>, vector<1x16x16x3xf32>,
    return
  }
  func.func @transform_0(%arg0: i32) -> i32 {
    %c0_i32 = arith.constant 0 : i32
    %c0_i32_0 = arith.constant 0 : i32
    return %c0_i32 : i32
  }
  func.func @transform_1(%arg0: i32) -> (i32, i32, i32, i32) {
    %c0_i32 = arith.constant 0 : i32
    %c0_i32_0 = arith.constant 0 : i32
    %c0_i32_1 = arith.constant 0 : i32
    %c0_i32_2 = arith.constant 0 : i32
    return %arg0, %c0_i32, %c0_i32_0, %c0_i32_1 : i32, i32, i32, i32
  }
  func.func @transform_2(%arg0: i32) -> (i32, i32, i32, i32) {
    %c0_i32 = arith.constant 0 : i32
    %c0_i32_0 = arith.constant 0 : i32
    %c0_i32_1 = arith.constant 0 : i32
    %c0_i32_2 = arith.constant 0 : i32
    return %arg0, %c0_i32, %c0_i32_0, %c0_i32_1 : i32, i32, i32, i32
  }
  func.func @transform_3(%arg0: i32) -> (i32, i32, i32, i32) {
    %c0_i32 = arith.constant 0 : i32
    %c0_i32_0 = arith.constant 0 : i32
    %c0_i32_1 = arith.constant 0 : i32
    %c0_i32_2 = arith.constant 0 : i32
    return %arg0, %c0_i32, %c0_i32_0, %c0_i32_1 : i32, i32, i32, i32
  }
  func.func @transform_4(%arg0: i32) -> (i32, i32) {
    %c0_i32 = arith.constant 0 : i32
    %c0_i32_0 = arith.constant 0 : i32
    %c0_i32_1 = arith.constant 0 : i32
    return %c0_i32, %c0_i32_0 : i32, i32
  }
  func.func @transform_5(%arg0: i32) -> (i32, i32) {
    %c0_i32 = arith.constant 0 : i32
    %c0_i32_0 = arith.constant 0 : i32
    %c0_i32_1 = arith.constant 0 : i32
    return %c0_i32, %c0_i32_0 : i32, i32
  }
  func.func @transform_6(%arg0: i32) -> (i32, i32) {
    %c0_i32 = arith.constant 0 : i32
    %c0_i32_0 = arith.constant 0 : i32
    %c0_i32_1 = arith.constant 0 : i32
    return %c0_i32, %c0_i32_0 : i32, i32
  }
  func.func @transform_7(%arg0: i32) -> (i32, i32) {
    %c0_i32 = arith.constant 0 : i32
    %c0_i32_0 = arith.constant 0 : i32
    %c0_i32_1 = arith.constant 0 : i32
    return %c0_i32, %c0_i32_0 : i32, i32
  }
  func.func @transform_8(%arg0: i32) -> (i32, i32) {
    %c0_i32 = arith.constant 0 : i32
    %c0_i32_0 = arith.constant 0 : i32
    %c0_i32_1 = arith.constant 0 : i32
    return %c0_i32, %c0_i32_0 : i32, i32
  }
  func.func @transform_9(%arg0: i32) -> (i32, i32) {
    %c0_i32 = arith.constant 0 : i32
    %c0_i32_0 = arith.constant 0 : i32
    %c0_i32_1 = arith.constant 0 : i32
    return %c0_i32, %c0_i32_0 : i32, i32
  }
  func.func @transform_10(%arg0: i32) -> (i32, i32, i32, i32) {
    %c0_i32 = arith.constant 0 : i32
    %c0_i32_0 = arith.constant 0 : i32
    %c0_i32_1 = arith.constant 0 : i32
    %c0_i32_2 = arith.constant 0 : i32
    return %arg0, %c0_i32, %c0_i32_0, %c0_i32_1 : i32, i32, i32, i32
  }
  func.func @transform_11(%arg0: i32) -> (i32, i32, i32, i32) {
    %c0_i32 = arith.constant 0 : i32
    %c0_i32_0 = arith.constant 0 : i32
    %c0_i32_1 = arith.constant 0 : i32
    %c0_i32_2 = arith.constant 0 : i32
    return %arg0, %c0_i32, %c0_i32_0, %c0_i32_1 : i32, i32, i32, i32
  }
}

</mosaic_0001>

<llo_original>
// kernel: _fused_step.1
$region0: #{_fused_step.1}
  #allocation0 [shape = 'u32[]', space=smem, size = 0x4, offset = 0x4, fixed_abs, tag = 'smem constant byte address 0x4 - core index']
  #allocation1 [shape = 'u32[72,128]{1,0:T(1,128)}', space=vmem, size = 0x9000, scoped, tag = 'internal scratch']
  #allocation2 [shape = 'f32[18,18,4]{2,1,0:T(8,128)}', space=vmem, size = 0x36000, scoped, tag = 'scratch operand']
  #allocation3 [shape = 'f32[18,18,32]{2,1,0:T(8,128)}', space=vmem, size = 0x36000, scoped, tag = 'scratch operand']
  %s0 = inlined_call_operand.vmem [shape: f32[10], index: 0, kind: input, shape index: {}]
  %s1 = inlined_call_operand.vmem [shape: f32[2,16,16,3], index: 1, kind: input, shape index: {}, may-alias: {1,10}]
  %s2 = inlined_call_operand.vmem [shape: f32[2,16,16,3], index: 2, kind: input, shape index: {}]
  %s3 = inlined_call_operand.vmem [shape: f32[2,16,16,3], index: 3, kind: input, shape index: {}]
  %s4 = inlined_call_operand.vmem [shape: bf16[36,32], index: 4, kind: input, shape index: {}]
  %s5 = inlined_call_operand.vmem [shape: f32[1,32], index: 5, kind: input, shape index: {}]
  %s6 = inlined_call_operand.vmem [shape: bf16[288,32], index: 6, kind: input, shape index: {}]
  %s7 = inlined_call_operand.vmem [shape: f32[1,32], index: 7, kind: input, shape index: {}]
  %s8 = inlined_call_operand.vmem [shape: bf16[288,3], index: 8, kind: input, shape index: {}]
  %s9 = inlined_call_operand.vmem [shape: f32[1,3], index: 9, kind: input, shape index: {}]
  %s10 = inlined_call_operand.vmem [shape: f32[2,16,16,3], index: 10, kind: output, shape index: {0}, may-alias: {1,10}]
  %s11 = inlined_call_operand.vmem [shape: f32[2,16,16,3], index: 11, kind: output, shape index: {1}]
  %12 = xla_tuple %s10, %s11
  %s13 = sld [smem:[#allocation0]]
  $region85: #{_fused_step.1} parent=0
    _
  %s15 = ssub.s32 1, %s13
  %s16 = scalar_select 0, %s15, %s13
  $region1: #{_fused_step.1} parent=0
    #allocation4 [shape = 'u8[512]{0}', space=smem, size = 0x200, scoped, tag = 'input window, operand 0, single buffered']
    #allocation5 [shape = 's32[2]{0}', space=sflag, size = 0x8, scoped, tag = 'scoped memory for _fused_step.1']
    %17 = vsyncpa [#allocation5], 0
    loop: start=0, step=1, limit=4
    $region2: #{_fused_step.1} parent=1 // loop_pre_header
      _
    $region3: #{_fused_step.1} parent=1 // loop_header
      %s19 = sphi 0, %s23
      %p20 = scmp.ge.s32.totalorder %s19, 4
      %s27 = sphi 0, %s27
      %s29 = sphi 0, %s27
      %s30 = sphi 0, %s29
      %s44 = sphi 0, %s30
      %s50 = sphi 0, %s52
      %s53 = sphi 0, %s50
      %s54 = sphi 0, %s53
      %s70 = sphi 0, %s54
      %s76 = sphi 0, %s78
      %s79 = sphi 0, %s76
      %s80 = sphi 0, %s79
      %s96 = sphi 0, %s80
      %s102 = sphi 0, %s104
      %s105 = sphi 0, %s102
      %s106 = sphi 0, %s105
      %s122 = sphi 0, %s106
      %s126 = sphi 0, %s126
      %s128 = sphi 0, %s126
      %s129 = sphi 0, %s128
      %s143 = sphi 0, %s129
      %s147 = sphi 0, %s147
      %s149 = sphi 0, %s147
      %s150 = sphi 0, %s149
      %s164 = sphi 0, %s150
      %s168 = sphi 0, %s168
      %s170 = sphi 0, %s168
      %s171 = sphi 0, %s170
      %s185 = sphi 0, %s171
      %s189 = sphi 0, %s189
      %s191 = sphi 0, %s189
      %s192 = sphi 0, %s191
      %s206 = sphi 0, %s192
      %s210 = sphi 0, %s210
      %s212 = sphi 0, %s210
      %s213 = sphi 0, %s212
      %s227 = sphi 0, %s213
      %s231 = sphi 0, %s231
      %s233 = sphi 0, %s231
      %s234 = sphi 0, %s233
      %s248 = sphi 0, %s234
      %s254 = sphi 0, %s256
      %s257 = sphi 0, %s254
      %s258 = sphi 0, %s257
      %s274 = sphi 0, %s258
      %s280 = sphi 0, %s282
      %s283 = sphi 0, %s280
      %s284 = sphi 0, %s283
      %s300 = sphi 0, %s284
    $region4: #{_fused_step.1} parent=1 // loop_header_branch
      %22 = sbr.rel (%p20) target = $region8
    $region5: #{_fused_step.1} parent=1 // loop_body
      %s24 = ssub.s32 %s19, 1
      %s25 = ssub.s32 %s19, 2
      %s26 = sadd.s32 %s19, 1
      %s28 = sadd.s32 %s27, 1
      %p31 = scmp.eq.s32.totalorder %s19, 1
      %p32 = scmp.ne.s32.totalorder %s27, %s29
      %p33 = scmp.eq.s32.totalorder %s19, 0
      %p34 = por %p32, %p33
      %p35 = scmp.ne.s32.totalorder %s27, %s29
      %p36 = scmp.eq.s32.totalorder %s24, 1
      %p37 = por %p35, %p36
      %p38 = scmp.ne.s32.totalorder %s29, %s30
      %p39 = scmp.eq.s32.totalorder %s24, 0
      %p40 = por %p38, %p39
      %p41 = scmp.ne.s32.totalorder %s29, %s30
      %p42 = scmp.eq.s32.totalorder %s25, 1
      %p43 = por %p41, %p42
      %p45 = scmp.ne.s32.totalorder %s30, %s44
      %p46 = scmp.eq.s32.totalorder %s25, 0
      %p47 = por %p45, %p46
      %s48 = ssub.s32 %s19, %s26
      %p49 = scmp.eq.s32.totalorder %s48, 0
      %s51 = sadd.s32 %s50, 1
      %s52 = scalar_select %p49, %s50, %s51
      %p55 = pneg %p49
      %p56 = scmp.eq.s32.totalorder %s19, 1
      %p57 = por %p55, %p56
      %p58 = scmp.ne.s32.totalorder %s50, %s53
      %p59 = scmp.eq.s32.totalorder %s19, 0
      %p60 = por %p58, %p59
      %p61 = scmp.ne.s32.totalorder %s50, %s53
      %p62 = scmp.eq.s32.totalorder %s24, 1
      %p63 = por %p61, %p62
      %p64 = scmp.ne.s32.totalorder %s53, %s54
      %p65 = scmp.eq.s32.totalorder %s24, 0
      %p66 = por %p64, %p65
      %p67 = scmp.ne.s32.totalorder %s53, %s54
      %p68 = scmp.eq.s32.totalorder %s25, 1
      %p69 = por %p67, %p68
      %p71 = scmp.ne.s32.totalorder %s54, %s70
      %p72 = scmp.eq.s32.totalorder %s25, 0
      %p73 = por %p71, %p72
      %s74 = ssub.s32 %s19, %s26
      %p75 = scmp.eq.s32.totalorder %s74, 0
      %s77 = sadd.s32 %s76, 1
      %s78 = scalar_select %p75, %s76, %s77
      %p81 = pneg %p75
      %p82 = scmp.eq.s32.totalorder %s19, 1
      %p83 = por %p81, %p82
      %p84 = scmp.ne.s32.totalorder %s76, %s79
      %p85 = scmp.eq.s32.totalorder %s19, 0
      %p86 = por %p84, %p85
      %p87 = scmp.ne.s32.totalorder %s76, %s79
      %p88 = scmp.eq.s32.totalorder %s24, 1
      %p89 = por %p87, %p88
      %p90 = scmp.ne.s32.totalorder %s79, %s80
      %p91 = scmp.eq.s32.totalorder %s24, 0
      %p92 = por %p90, %p91
      %p93 = scmp.ne.s32.totalorder %s79, %s80
      %p94 = scmp.eq.s32.totalorder %s25, 1
      %p95 = por %p93, %p94
      %p97 = scmp.ne.s32.totalorder %s80, %s96
      %p98 = scmp.eq.s32.totalorder %s25, 0
      %p99 = por %p97, %p98
      %s100 = ssub.s32 %s19, %s26
      %p101 = scmp.eq.s32.totalorder %s100, 0
      %s103 = sadd.s32 %s102, 1
      %s104 = scalar_select %p101, %s102, %s103
      %p107 = pneg %p101
      %p108 = scmp.eq.s32.totalorder %s19, 1
      %p109 = por %p107, %p108
      %p110 = scmp.ne.s32.totalorder %s102, %s105
      %p111 = scmp.eq.s32.totalorder %s19, 0
      %p112 = por %p110, %p111
      %p113 = scmp.ne.s32.totalorder %s102, %s105
      %p114 = scmp.eq.s32.totalorder %s24, 1
      %p115 = por %p113, %p114
      %p116 = scmp.ne.s32.totalorder %s105, %s106
      %p117 = scmp.eq.s32.totalorder %s24, 0
      %p118 = por %p116, %p117
      %p119 = scmp.ne.s32.totalorder %s105, %s106
      %p120 = scmp.eq.s32.totalorder %s25, 1
      %p121 = por %p119, %p120
      %p123 = scmp.ne.s32.totalorder %s106, %s122
      %p124 = scmp.eq.s32.totalorder %s25, 0
      %p125 = por %p123, %p124
      %s127 = sadd.s32 %s126, 1
      %p130 = scmp.eq.s32.totalorder %s19, 1
      %p131 = scmp.ne.s32.totalorder %s126, %s128
      %p132 = scmp.eq.s32.totalorder %s19, 0
      %p133 = por %p131, %p132
      %p134 = scmp.ne.s32.totalorder %s126, %s128
      %p135 = scmp.eq.s32.totalorder %s24, 1
      %p136 = por %p134, %p135
      %p137 = scmp.ne.s32.totalorder %s128, %s129
      %p138 = scmp.eq.s32.totalorder %s24, 0
      %p139 = por %p137, %p138
      %p140 = scmp.ne.s32.totalorder %s128, %s129
      %p141 = scmp.eq.s32.totalorder %s25, 1
      %p142 = por %p140, %p141
      %p144 = scmp.ne.s32.totalorder %s129, %s143
      %p145 = scmp.eq.s32.totalorder %s25, 0
      %p146 = por %p144, %p145
      %s148 = sadd.s32 %s147, 1
      %p151 = scmp.eq.s32.totalorder %s19, 1
      %p152 = scmp.ne.s32.totalorder %s147, %s149
      %p153 = scmp.eq.s32.totalorder %s19, 0
      %p154 = por %p152, %p153
      %p155 = scmp.ne.s32.totalorder %s147, %s149
      %p156 = scmp.eq.s32.totalorder %s24, 1
      %p157 = por %p155, %p156
      %p158 = scmp.ne.s32.totalorder %s149, %s150
      %p159 = scmp.eq.s32.totalorder %s24, 0
      %p160 = por %p158, %p159
      %p161 = scmp.ne.s32.totalorder %s149, %s150
      %p162 = scmp.eq.s32.totalorder %s25, 1
      %p163 = por %p161, %p162
      %p165 = scmp.ne.s32.totalorder %s150, %s164
      %p166 = scmp.eq.s32.totalorder %s25, 0
      %p167 = por %p165, %p166
      %s169 = sadd.s32 %s168, 1
      %p172 = scmp.eq.s32.totalorder %s19, 1
      %p173 = scmp.ne.s32.totalorder %s168, %s170
      %p174 = scmp.eq.s32.totalorder %s19, 0
      %p175 = por %p173, %p174
      %p176 = scmp.ne.s32.totalorder %s168, %s170
      %p177 = scmp.eq.s32.totalorder %s24, 1
      %p178 = por %p176, %p177
      %p179 = scmp.ne.s32.totalorder %s170, %s171
      %p180 = scmp.eq.s32.totalorder %s24, 0
      %p181 = por %p179, %p180
      %p182 = scmp.ne.s32.totalorder %s170, %s171
      %p183 = scmp.eq.s32.totalorder %s25, 1
      %p184 = por %p182, %p183
      %p186 = scmp.ne.s32.totalorder %s171, %s185
      %p187 = scmp.eq.s32.totalorder %s25, 0
      %p188 = por %p186, %p187
      %s190 = sadd.s32 %s189, 1
      %p193 = scmp.eq.s32.totalorder %s19, 1
      %p194 = scmp.ne.s32.totalorder %s189, %s191
      %p195 = scmp.eq.s32.totalorder %s19, 0
      %p196 = por %p194, %p195
      %p197 = scmp.ne.s32.totalorder %s189, %s191
      %p198 = scmp.eq.s32.totalorder %s24, 1
      %p199 = por %p197, %p198
      %p200 = scmp.ne.s32.totalorder %s191, %s192
      %p201 = scmp.eq.s32.totalorder %s24, 0
      %p202 = por %p200, %p201
      %p203 = scmp.ne.s32.totalorder %s191, %s192
      %p204 = scmp.eq.s32.totalorder %s25, 1
      %p205 = por %p203, %p204
      %p207 = scmp.ne.s32.totalorder %s192, %s206
      %p208 = scmp.eq.s32.totalorder %s25, 0
      %p209 = por %p207, %p208
      %s211 = sadd.s32 %s210, 1
      %p214 = scmp.eq.s32.totalorder %s19, 1
      %p215 = scmp.ne.s32.totalorder %s210, %s212
      %p216 = scmp.eq.s32.totalorder %s19, 0
      %p217 = por %p215, %p216
      %p218 = scmp.ne.s32.totalorder %s210, %s212
      %p219 = scmp.eq.s32.totalorder %s24, 1
      %p220 = por %p218, %p219
      %p221 = scmp.ne.s32.totalorder %s212, %s213
      %p222 = scmp.eq.s32.totalorder %s24, 0
      %p223 = por %p221, %p222
      %p224 = scmp.ne.s32.totalorder %s212, %s213
      %p225 = scmp.eq.s32.totalorder %s25, 1
      %p226 = por %p224, %p225
      %p228 = scmp.ne.s32.totalorder %s213, %s227
      %p229 = scmp.eq.s32.totalorder %s25, 0
      %p230 = por %p228, %p229
      %s232 = sadd.s32 %s231, 1
      %p235 = scmp.eq.s32.totalorder %s19, 1
      %p236 = scmp.ne.s32.totalorder %s231, %s233
      %p237 = scmp.eq.s32.totalorder %s19, 0
      %p238 = por %p236, %p237
      %p239 = scmp.ne.s32.totalorder %s231, %s233
      %p240 = scmp.eq.s32.totalorder %s24, 1
      %p241 = por %p239, %p240
      %p242 = scmp.ne.s32.totalorder %s233, %s234
      %p243 = scmp.eq.s32.totalorder %s24, 0
      %p244 = por %p242, %p243
      %p245 = scmp.ne.s32.totalorder %s233, %s234
      %p246 = scmp.eq.s32.totalorder %s25, 1
      %p247 = por %p245, %p246
      %p249 = scmp.ne.s32.totalorder %s234, %s248
      %p250 = scmp.eq.s32.totalorder %s25, 0
      %p251 = por %p249, %p250
      %s252 = ssub.s32 %s19, %s26
      %p253 = scmp.eq.s32.totalorder %s252, 0
      %s255 = sadd.s32 %s254, 1
      %s256 = scalar_select %p253, %s254, %s255
      %p259 = pneg %p253
      %p260 = scmp.eq.s32.totalorder %s19, 1
      %p261 = por %p259, %p260
      %p262 = scmp.ne.s32.totalorder %s254, %s257
      %p263 = scmp.eq.s32.totalorder %s19, 0
      %p264 = por %p262, %p263
      %p265 = scmp.ne.s32.totalorder %s254, %s257
      %p266 = scmp.eq.s32.totalorder %s24, 1
      %p267 = por %p265, %p266
      %p268 = scmp.ne.s32.totalorder %s257, %s258
      %p269 = scmp.eq.s32.totalorder %s24, 0
      %p270 = por %p268, %p269
      %p271 = scmp.ne.s32.totalorder %s257, %s258
      %p272 = scmp.eq.s32.totalorder %s25, 1
      %p273 = por %p271, %p272
      %p275 = scmp.ne.s32.totalorder %s258, %s274
      %p276 = scmp.eq.s32.totalorder %s25, 0
      %p277 = por %p275, %p276
      %s278 = ssub.s32 %s19, %s26
      %p279 = scmp.eq.s32.totalorder %s278, 0
      %s281 = sadd.s32 %s280, 1
      %s282 = scalar_select %p279, %s280, %s281
      %p285 = pneg %p279
      %p286 = scmp.eq.s32.totalorder %s19, 1
      %p287 = por %p285, %p286
      %p288 = scmp.ne.s32.totalorder %s280, %s283
      %p289 = scmp.eq.s32.totalorder %s19, 0
      %p290 = por %p288, %p289
      %p291 = scmp.ne.s32.totalorder %s280, %s283
      %p292 = scmp.eq.s32.totalorder %s24, 1
      %p293 = por %p291, %p292
      %p294 = scmp.ne.s32.totalorder %s283, %s284
      %p295 = scmp.eq.s32.totalorder %s24, 0
      %p296 = por %p294, %p295
      %p297 = scmp.ne.s32.totalorder %s283, %s284
      %p298 = scmp.eq.s32.totalorder %s25, 1
      %p299 = por %p297, %p298
      %p301 = scmp.ne.s32.totalorder %s284, %s300
      %p302 = scmp.eq.s32.totalorder %s25, 0
      %p303 = por %p301, %p302
      %p304 = scmp.le.s32.totalorder 1, %s19
      %p305 = scmp.lt.s32.totalorder %s19, 3
      %p306 = pnand %p304, %p305
      %p307 = pneg %p306
      // Predicated region
      $region9: #{_fused_step.1} parent=5 // pred_check
        _
      $region10: #{_fused_step.1} parent=5 // pred_check_branch
        %309 = sbr.rel (%p306) target = $region12
      $region11: #{_fused_step.1} parent=5 // pred_region
        %s310 = ssub.s32 %s19, 1
        // Predicated region
        $region13: #{_fused_step.1} parent=11 // pred_check
          %p311 = pneg %p40
        $region14: #{_fused_step.1} parent=11 // pred_check_branch
          %313 = sbr.rel (%p311) target = $region16
        $region15: #{_fused_step.1} parent=11 // pred_region
          %315 = vsyncadd [#allocation5], 0
          %s317 = sshll.u32 %s0, 4
          %s318 = int_to_ptr.vmem [resolvable:$true] %s317
          %320 = dma.vmem_to_smem %s318, 16, [#allocation4], [#allocation5]
        $region16: #{_fused_step.1} parent=11 // pred_fallthru
          _
        // Predicated region
        $region17: #{_fused_step.1} parent=11 // pred_check
          %p321 = pneg %p139
        $region18: #{_fused_step.1} parent=11 // pred_check_branch
          %323 = sbr.rel (%p321) target = $region20
        $region19: #{_fused_step.1} parent=11 // pred_region
          _
        $region20: #{_fused_step.1} parent=11 // pred_fallthru
          _
        // Predicated region
        $region21: #{_fused_step.1} parent=11 // pred_check
          %p324 = pneg %p160
        $region22: #{_fused_step.1} parent=11 // pred_check_branch
          %326 = sbr.rel (%p324) target = $region24
        $region23: #{_fused_step.1} parent=11 // pred_region
          _
        $region24: #{_fused_step.1} parent=11 // pred_fallthru
          _
        // Predicated region
        $region25: #{_fused_step.1} parent=11 // pred_check
          %p327 = pneg %p181
        $region26: #{_fused_step.1} parent=11 // pred_check_branch
          %329 = sbr.rel (%p327) target = $region28
        $region27: #{_fused_step.1} parent=11 // pred_region
          _
        $region28: #{_fused_step.1} parent=11 // pred_fallthru
          _
        // Predicated region
        $region29: #{_fused_step.1} parent=11 // pred_check
          %p330 = pneg %p202
        $region30: #{_fused_step.1} parent=11 // pred_check_branch
          %332 = sbr.rel (%p330) target = $region32
        $region31: #{_fused_step.1} parent=11 // pred_region
          _
        $region32: #{_fused_step.1} parent=11 // pred_fallthru
          _
        // Predicated region
        $region33: #{_fused_step.1} parent=11 // pred_check
          %p333 = pneg %p223
        $region34: #{_fused_step.1} parent=11 // pred_check_branch
          %335 = sbr.rel (%p333) target = $region36
        $region35: #{_fused_step.1} parent=11 // pred_region
          _
        $region36: #{_fused_step.1} parent=11 // pred_fallthru
          _
        // Predicated region
        $region37: #{_fused_step.1} parent=11 // pred_check
          %p336 = pneg %p244
        $region38: #{_fused_step.1} parent=11 // pred_check_branch
          %338 = sbr.rel (%p336) target = $region40
        $region39: #{_fused_step.1} parent=11 // pred_region
          _
        $region40: #{_fused_step.1} parent=11 // pred_fallthru
          _
      $region12: #{_fused_step.1} parent=5 // pred_fallthru
        _
      %p339 = scmp.lt.s32.totalorder %s19, 2
      // Predicated region
      $region41: #{_fused_step.1} parent=5 // pred_check
        %p340 = pneg %p339
      $region42: #{_fused_step.1} parent=5 // pred_check_branch
        %342 = sbr.rel (%p340) target = $region44
      $region43: #{_fused_step.1} parent=5 // pred_region
        // Predicated region
        $region45: #{_fused_step.1} parent=43 // pred_check
          %p343 = pneg %p60
        $region46: #{_fused_step.1} parent=43 // pred_check_branch
          %345 = sbr.rel (%p343) target = $region48
        $region47: #{_fused_step.1} parent=43 // pred_region
          %p346 = scmp.lt.s32.totalorder %s19, 1
          %s347 = scalar_select %p346, %s19, 1
          %s348 = smul.addr %s347, 32
          %s349 = smul.addr %s348, 8
          %s350 = scalar_lea.vmem %s1, %s349
        $region48: #{_fused_step.1} parent=43 // pred_fallthru
          _
        // Predicated region
        $region49: #{_fused_step.1} parent=43 // pred_check
          %p351 = pneg %p86
        $region50: #{_fused_step.1} parent=43 // pred_check_branch
          %353 = sbr.rel (%p351) target = $region52
        $region51: #{_fused_step.1} parent=43 // pred_region
          %p354 = scmp.lt.s32.totalorder %s19, 1
          %s355 = scalar_select %p354, %s19, 1
          %s356 = smul.addr %s355, 32
          %s357 = smul.addr %s356, 8
          %s358 = scalar_lea.vmem %s2, %s357
        $region52: #{_fused_step.1} parent=43 // pred_fallthru
          _
        // Predicated region
        $region53: #{_fused_step.1} parent=43 // pred_check
          %p359 = pneg %p112
        $region54: #{_fused_step.1} parent=43 // pred_check_branch
          %361 = sbr.rel (%p359) target = $region56
        $region55: #{_fused_step.1} parent=43 // pred_region
          %p362 = scmp.lt.s32.totalorder %s19, 1
          %s363 = scalar_select %p362, %s19, 1
          %s364 = smul.addr %s363, 32
          %s365 = smul.addr %s364, 8
          %s366 = scalar_lea.vmem %s3, %s365
        $region56: #{_fused_step.1} parent=43 // pred_fallthru
          _
      $region44: #{_fused_step.1} parent=5 // pred_fallthru
        _
      %p367 = scmp.le.s32.totalorder 1, %s19
      %p368 = scmp.lt.s32.totalorder %s19, 3
      %p369 = pnand %p367, %p368
      %p370 = pneg %p369
      // Predicated region
      $region57: #{_fused_step.1} parent=5 // pred_check
        _
      $region58: #{_fused_step.1} parent=5 // pred_check_branch
        %372 = sbr.rel (%p369) target = $region60
      $region59: #{_fused_step.1} parent=5 // pred_region
        %s373 = ssub.s32 %s19, 1
        // Predicated region
        $region61: #{_fused_step.1} parent=59 // pred_check
          %p374 = pneg %p40
        $region62: #{_fused_step.1} parent=59 // pred_check_branch
          %376 = sbr.rel (%p374) target = $region64
        $region63: #{_fused_step.1} parent=59 // pred_region
          %378 = dma.done [#allocation5], 16
        $region64: #{_fused_step.1} parent=59 // pred_fallthru
          _
        %379 = sfence
        %p380 = pneg %p40
        %p381 = pneg %p37
        %p382 = scmp.lt.s32.totalorder %s24, 1
        %s383 = scalar_select %p382, %s24, 1
        %s384 = smul.addr %s383, 32
        %s385 = smul.addr %s384, 8
        %s386 = scalar_lea.vmem %s1, %s385
        %p387 = pneg %p66
        %p388 = pneg %p63
        %p389 = scmp.lt.s32.totalorder %s24, 1
        %s390 = scalar_select %p389, %s24, 1
        %s391 = smul.addr %s390, 32
        %s392 = smul.addr %s391, 8
        %s393 = scalar_lea.vmem %s2, %s392
        %p394 = pneg %p92
        %p395 = pneg %p89
        %p396 = scmp.lt.s32.totalorder %s24, 1
        %s397 = scalar_select %p396, %s24, 1
        %s398 = smul.addr %s397, 32
        %s399 = smul.addr %s398, 8
        %s400 = scalar_lea.vmem %s3, %s399
        %p401 = pneg %p118
        %p402 = pneg %p115
        %p403 = pneg %p139
        %p404 = pneg %p136
        %p405 = pneg %p160
        %p406 = pneg %p157
        %p407 = pneg %p181
        %p408 = pneg %p178
        %p409 = pneg %p202
        %p410 = pneg %p199
        %p411 = pneg %p223
        %p412 = pneg %p220
        %p413 = pneg %p244
        %p414 = pneg %p241
        %p415 = pneg %p270
        %p416 = pneg %p267
        %p417 = scmp.lt.s32.totalorder %s24, 1
        %s418 = scalar_select %p417, %s24, 1
        %s419 = smul.addr %s418, 32
        %s420 = smul.addr %s419, 8
        %s421 = scalar_lea.vmem %s10, %s420
        %p422 = pneg %p296
        %p423 = pneg %p293
        %p424 = scmp.lt.s32.totalorder %s24, 1
        %s425 = scalar_select %p424, %s24, 1
        %s426 = smul.addr %s425, 32
        %s427 = smul.addr %s426, 8
        %s428 = scalar_lea.vmem %s11, %s427
        %p429 = scmp.lt.s32.totalorder %s24, 1
        %s430 = scalar_select %p429, %s24, 1
        %s431 = smul.addr %s430, 32
        %s432 = smul.addr %s431, 8
        %s433 = scalar_lea.vmem %s1, %s432
        %p434 = scmp.lt.s32.totalorder %s24, 1
        %s435 = scalar_select %p434, %s24, 1
        %s436 = smul.addr %s435, 32
        %s437 = smul.addr %s436, 8
        %s438 = scalar_lea.vmem %s2, %s437
        %p439 = scmp.lt.s32.totalorder %s24, 1
        %s440 = scalar_select %p439, %s24, 1
        %s441 = smul.addr %s440, 32
        %s442 = smul.addr %s441, 8
        %s443 = scalar_lea.vmem %s3, %s442
        %p444 = scmp.lt.s32.totalorder %s24, 1
        %s445 = scalar_select %p444, %s24, 1
        %s446 = smul.addr %s445, 32
        %s447 = smul.addr %s446, 8
        %s448 = scalar_lea.vmem %s10, %s447
        %p449 = scmp.lt.s32.totalorder %s24, 1
        %s450 = scalar_select %p449, %s24, 1
        %s451 = smul.addr %s450, 32
        %s452 = smul.addr %s451, 8
        %s453 = scalar_lea.vmem %s11, %s452
        %s455 = sld [smem:[#allocation4]]
        %s456 = sld [smem:[#allocation4 + $0x1]]
        %s457 = sld [smem:[#allocation4 + $0x2]]
        %s458 = sld [smem:[#allocation4 + $0x3]]
        %s459 = sld [smem:[#allocation4 + $0x4]]
        %s460 = sld [smem:[#allocation4 + $0x5]]
        %s461 = sld [smem:[#allocation4 + $0x6]]
        %s462 = sld [smem:[#allocation4 + $0x7]]
        %s463 = sld [smem:[#allocation4 + $0x8]]
        %s464 = sld [smem:[#allocation4 + $0x9]]
        %v465 = vld [vmem:[%s433] sm:$0xff]
        %v466 = vld [vmem:[%s433 + $0x8] sm:$0xff]
        %v467 = vld [vmem:[%s433 + $0x10] sm:$0xff]
        %v468 = vld [vmem:[%s433 + $0x18] sm:$0xff]
        %v469 = vld [vmem:[%s433 + $0x20] sm:$0xff]
        %v470 = vld [vmem:[%s433 + $0x28] sm:$0xff]
        %v471 = vld [vmem:[%s433 + $0x30] sm:$0xff]
        %v472 = vld [vmem:[%s433 + $0x38] sm:$0xff]
        %v473 = vld [vmem:[%s433 + $0x40] sm:$0xff]
        %v474 = vld [vmem:[%s433 + $0x48] sm:$0xff]
        %v475 = vld [vmem:[%s433 + $0x50] sm:$0xff]
        %v476 = vld [vmem:[%s433 + $0x58] sm:$0xff]
        %v477 = vld [vmem:[%s433 + $0x60] sm:$0xff]
        %v478 = vld [vmem:[%s433 + $0x68] sm:$0xff]
        %v479 = vld [vmem:[%s433 + $0x70] sm:$0xff]
        %v480 = vld [vmem:[%s433 + $0x78] sm:$0xff]
        %v481 = vld [vmem:[%s433 + $0x80] sm:$0xff]
        %v482 = vld [vmem:[%s433 + $0x88] sm:$0xff]
        %v483 = vld [vmem:[%s433 + $0x90] sm:$0xff]
        %v484 = vld [vmem:[%s433 + $0x98] sm:$0xff]
        %v485 = vld [vmem:[%s433 + $0xa0] sm:$0xff]
        %v486 = vld [vmem:[%s433 + $0xa8] sm:$0xff]
        %v487 = vld [vmem:[%s433 + $0xb0] sm:$0xff]
        %v488 = vld [vmem:[%s433 + $0xb8] sm:$0xff]
        %v489 = vld [vmem:[%s433 + $0xc0] sm:$0xff]
        %v490 = vld [vmem:[%s433 + $0xc8] sm:$0xff]
        %v491 = vld [vmem:[%s433 + $0xd0] sm:$0xff]
        %v492 = vld [vmem:[%s433 + $0xd8] sm:$0xff]
        %v493 = vld [vmem:[%s433 + $0xe0] sm:$0xff]
        %v494 = vld [vmem:[%s433 + $0xe8] sm:$0xff]
        %v495 = vld [vmem:[%s433 + $0xf0] sm:$0xff]
        %v496 = vld [vmem:[%s433 + $0xf8] sm:$0xff]
        %v497 = vld [vmem:[%s438] sm:$0xff]
        %v498 = vld [vmem:[%s438 + $0x8] sm:$0xff]
        %v499 = vld [vmem:[%s438 + $0x10] sm:$0xff]
        %v500 = vld [vmem:[%s438 + $0x18] sm:$0xff]
        %v501 = vld [vmem:[%s438 + $0x20] sm:$0xff]
        %v502 = vld [vmem:[%s438 + $0x28] sm:$0xff]
        %v503 = vld [vmem:[%s438 + $0x30] sm:$0xff]
        %v504 = vld [vmem:[%s438 + $0x38] sm:$0xff]
        %v505 = vld [vmem:[%s438 + $0x40] sm:$0xff]
        %v506 = vld [vmem:[%s438 + $0x48] sm:$0xff]
        %v507 = vld [vmem:[%s438 + $0x50] sm:$0xff]
        %v508 = vld [vmem:[%s438 + $0x58] sm:$0xff]
        %v509 = vld [vmem:[%s438 + $0x60] sm:$0xff]
        %v510 = vld [vmem:[%s438 + $0x68] sm:$0xff]
        %v511 = vld [vmem:[%s438 + $0x70] sm:$0xff]
        %v512 = vld [vmem:[%s438 + $0x78] sm:$0xff]
        %v513 = vld [vmem:[%s438 + $0x80] sm:$0xff]
        %v514 = vld [vmem:[%s438 + $0x88] sm:$0xff]
        %v515 = vld [vmem:[%s438 + $0x90] sm:$0xff]
        %v516 = vld [vmem:[%s438 + $0x98] sm:$0xff]
        %v517 = vld [vmem:[%s438 + $0xa0] sm:$0xff]
        %v518 = vld [vmem:[%s438 + $0xa8] sm:$0xff]
        %v519 = vld [vmem:[%s438 + $0xb0] sm:$0xff]
        %v520 = vld [vmem:[%s438 + $0xb8] sm:$0xff]
        %v521 = vld [vmem:[%s438 + $0xc0] sm:$0xff]
        %v522 = vld [vmem:[%s438 + $0xc8] sm:$0xff]
        %v523 = vld [vmem:[%s438 + $0xd0] sm:$0xff]
        %v524 = vld [vmem:[%s438 + $0xd8] sm:$0xff]
        %v525 = vld [vmem:[%s438 + $0xe0] sm:$0xff]
        %v526 = vld [vmem:[%s438 + $0xe8] sm:$0xff]
        %v527 = vld [vmem:[%s438 + $0xf0] sm:$0xff]
        %v528 = vld [vmem:[%s438 + $0xf8] sm:$0xff]
        %v529 = vld [vmem:[%s443] sm:$0xff]
        %v530 = vld [vmem:[%s443 + $0x8] sm:$0xff]
        %v531 = vld [vmem:[%s443 + $0x10] sm:$0xff]
        %v532 = vld [vmem:[%s443 + $0x18] sm:$0xff]
        %v533 = vld [vmem:[%s443 + $0x20] sm:$0xff]
        %v534 = vld [vmem:[%s443 + $0x28] sm:$0xff]
        %v535 = vld [vmem:[%s443 + $0x30] sm:$0xff]
        %v536 = vld [vmem:[%s443 + $0x38] sm:$0xff]
        %v537 = vld [vmem:[%s443 + $0x40] sm:$0xff]
        %v538 = vld [vmem:[%s443 + $0x48] sm:$0xff]
        %v539 = vld [vmem:[%s443 + $0x50] sm:$0xff]
        %v540 = vld [vmem:[%s443 + $0x58] sm:$0xff]
        %v541 = vld [vmem:[%s443 + $0x60] sm:$0xff]
        %v542 = vld [vmem:[%s443 + $0x68] sm:$0xff]
        %v543 = vld [vmem:[%s443 + $0x70] sm:$0xff]
        %v544 = vld [vmem:[%s443 + $0x78] sm:$0xff]
        %v545 = vld [vmem:[%s443 + $0x80] sm:$0xff]
        %v546 = vld [vmem:[%s443 + $0x88] sm:$0xff]
        %v547 = vld [vmem:[%s443 + $0x90] sm:$0xff]
        %v548 = vld [vmem:[%s443 + $0x98] sm:$0xff]
        %v549 = vld [vmem:[%s443 + $0xa0] sm:$0xff]
        %v550 = vld [vmem:[%s443 + $0xa8] sm:$0xff]
        %v551 = vld [vmem:[%s443 + $0xb0] sm:$0xff]
        %v552 = vld [vmem:[%s443 + $0xb8] sm:$0xff]
        %v553 = vld [vmem:[%s443 + $0xc0] sm:$0xff]
        %v554 = vld [vmem:[%s443 + $0xc8] sm:$0xff]
        %v555 = vld [vmem:[%s443 + $0xd0] sm:$0xff]
        %v556 = vld [vmem:[%s443 + $0xd8] sm:$0xff]
        %v557 = vld [vmem:[%s443 + $0xe0] sm:$0xff]
        %v558 = vld [vmem:[%s443 + $0xe8] sm:$0xff]
        %v559 = vld [vmem:[%s443 + $0xf0] sm:$0xff]
        %v560 = vld [vmem:[%s443 + $0xf8] sm:$0xff]
        %v561 = vstv %s455
        %v562 = vmul.f32 %v465, %v561
        %v563 = vmul.f32 %v466, %v561
        %v564 = vmul.f32 %v467, %v561
        %v565 = vmul.f32 %v468, %v561
        %v566 = vmul.f32 %v469, %v561
        %v567 = vmul.f32 %v470, %v561
        %v568 = vmul.f32 %v471, %v561
        %v569 = vmul.f32 %v472, %v561
        %v570 = vmul.f32 %v473, %v561
        %v571 = vmul.f32 %v474, %v561
        %v572 = vmul.f32 %v475, %v561
        %v573 = vmul.f32 %v476, %v561
        %v574 = vmul.f32 %v477, %v561
        %v575 = vmul.f32 %v478, %v561
        %v576 = vmul.f32 %v479, %v561
        %v577 = vmul.f32 %v480, %v561
        %v578 = vmul.f32 %v481, %v561
        %v579 = vmul.f32 %v482, %v561
        %v580 = vmul.f32 %v483, %v561
        %v581 = vmul.f32 %v484, %v561
        %v582 = vmul.f32 %v485, %v561
        %v583 = vmul.f32 %v486, %v561
        %v584 = vmul.f32 %v487, %v561
        %v585 = vmul.f32 %v488, %v561
        %v586 = vmul.f32 %v489, %v561
        %v587 = vmul.f32 %v490, %v561
        %v588 = vmul.f32 %v491, %v561
        %v589 = vmul.f32 %v492, %v561
        %v590 = vmul.f32 %v493, %v561
        %v591 = vmul.f32 %v494, %v561
        %v592 = vmul.f32 %v495, %v561
        %v593 = vmul.f32 %v496, %v561
        %vm594 = vcmask 31744
        %595 = vst.msk [vmem:[#allocation2] sm:$0xff] %vm594, 0.0
        %596 = vst.msk [vmem:[#allocation2 + $0x8] sm:$0xff] %vm594, 0.0
        %vm597 = vcmask 25600
        %598 = vst.msk [vmem:[#allocation2 + $0x10] sm:$0x3] %vm597, 0.0
        %599 = vst.msk [vmem:[#allocation2 + $0x18] sm:$0xff] %vm594, 0.0
        %600 = vst.msk [vmem:[#allocation2 + $0x20] sm:$0xff] %vm594, 0.0
        %601 = vst.msk [vmem:[#allocation2 + $0x28] sm:$0x3] %vm597, 0.0
        %602 = vst.msk [vmem:[#allocation2 + $0x30] sm:$0xff] %vm594, 0.0
        %603 = vst.msk [vmem:[#allocation2 + $0x38] sm:$0xff] %vm594, 0.0
        %604 = vst.msk [vmem:[#allocation2 + $0x40] sm:$0x3] %vm597, 0.0
        %605 = vst.msk [vmem:[#allocation2 + $0x48] sm:$0xff] %vm594, 0.0
        %606 = vst.msk [vmem:[#allocation2 + $0x50] sm:$0xff] %vm594, 0.0
        %607 = vst.msk [vmem:[#allocation2 + $0x58] sm:$0x3] %vm597, 0.0
        %608 = vst.msk [vmem:[#allocation2 + $0x60] sm:$0xff] %vm594, 0.0
        %609 = vst.msk [vmem:[#allocation2 + $0x68] sm:$0xff] %vm594, 0.0
        %610 = vst.msk [vmem:[#allocation2 + $0x70] sm:$0x3] %vm597, 0.0
        %611 = vst.msk [vmem:[#allocation2 + $0x78] sm:$0xff] %vm594, 0.0
        %612 = vst.msk [vmem:[#allocation2 + $0x80] sm:$0xff] %vm594, 0.0
        %613 = vst.msk [vmem:[#allocation2 + $0x88] sm:$0x3] %vm597, 0.0
        %614 = vst.msk [vmem:[#allocation2 + $0x90] sm:$0xff] %vm594, 0.0
        %615 = vst.msk [vmem:[#allocation2 + $0x98] sm:$0xff] %vm594, 0.0
        %616 = vst.msk [vmem:[#allocation2 + $0xa0] sm:$0x3] %vm597, 0.0
        %617 = vst.msk [vmem:[#allocation2 + $0xa8] sm:$0xff] %vm594, 0.0
        %618 = vst.msk [vmem:[#allocation2 + $0xb0] sm:$0xff] %vm594, 0.0
        %619 = vst.msk [vmem:[#allocation2 + $0xb8] sm:$0x3] %vm597, 0.0
        %620 = vst.msk [vmem:[#allocation2 + $0xc0] sm:$0xff] %vm594, 0.0
        %621 = vst.msk [vmem:[#allocation2 + $0xc8] sm:$0xff] %vm594, 0.0
        %622 = vst.msk [vmem:[#allocation2 + $0xd0] sm:$0x3] %vm597, 0.0
        %623 = vst.msk [vmem:[#allocation2 + $0xd8] sm:$0xff] %vm594, 0.0
        %624 = vst.msk [vmem:[#allocation2 + $0xe0] sm:$0xff] %vm594, 0.0
        %625 = vst.msk [vmem:[#allocation2 + $0xe8] sm:$0x3] %vm597, 0.0
        %626 = vst.msk [vmem:[#allocation2 + $0xf0] sm:$0xff] %vm594, 0.0
        %627 = vst.msk [vmem:[#allocation2 + $0xf8] sm:$0xff] %vm594, 0.0
        %628 = vst.msk [vmem:[#allocation2 + $0x100] sm:$0x3] %vm597, 0.0
        %629 = vst.msk [vmem:[#allocation2 + $0x108] sm:$0xff] %vm594, 0.0
        %630 = vst.msk [vmem:[#allocation2 + $0x110] sm:$0xff] %vm594, 0.0
        %631 = vst.msk [vmem:[#allocation2 + $0x118] sm:$0x3] %vm597, 0.0
        %632 = vst.msk [vmem:[#allocation2 + $0x120] sm:$0xff] %vm594, 0.0
        %633 = vst.msk [vmem:[#allocation2 + $0x128] sm:$0xff] %vm594, 0.0
        %634 = vst.msk [vmem:[#allocation2 + $0x130] sm:$0x3] %vm597, 0.0
        %635 = vst.msk [vmem:[#allocation2 + $0x138] sm:$0xff] %vm594, 0.0
        %636 = vst.msk [vmem:[#allocation2 + $0x140] sm:$0xff] %vm594, 0.0
        %637 = vst.msk [vmem:[#allocation2 + $0x148] sm:$0x3] %vm597, 0.0
        %638 = vst.msk [vmem:[#allocation2 + $0x150] sm:$0xff] %vm594, 0.0
        %639 = vst.msk [vmem:[#allocation2 + $0x158] sm:$0xff] %vm594, 0.0
        %640 = vst.msk [vmem:[#allocation2 + $0x160] sm:$0x3] %vm597, 0.0
        %641 = vst.msk [vmem:[#allocation2 + $0x168] sm:$0xff] %vm594, 0.0
        %642 = vst.msk [vmem:[#allocation2 + $0x170] sm:$0xff] %vm594, 0.0
        %643 = vst.msk [vmem:[#allocation2 + $0x178] sm:$0x3] %vm597, 0.0
        %644 = vst.msk [vmem:[#allocation2 + $0x180] sm:$0xff] %vm594, 0.0
        %645 = vst.msk [vmem:[#allocation2 + $0x188] sm:$0xff] %vm594, 0.0
        %646 = vst.msk [vmem:[#allocation2 + $0x190] sm:$0x3] %vm597, 0.0
        %647 = vst.msk [vmem:[#allocation2 + $0x198] sm:$0xff] %vm594, 0.0
        %648 = vst.msk [vmem:[#allocation2 + $0x1a0] sm:$0xff] %vm594, 0.0
        %649 = vst.msk [vmem:[#allocation2 + $0x1a8] sm:$0x3] %vm597, 0.0
        %v650 = vstv %s456
        %vm651 = vcmask 23552
        %v652 = vsel %vm651, %v562, %v650
        %v653 = vsel %vm651, %v563, %v650
        %v654 = vsel %vm651, %v564, %v650
        %v655 = vsel %vm651, %v565, %v650
        %v656 = vsel %vm651, %v566, %v650
        %v657 = vsel %vm651, %v567, %v650
        %v658 = vsel %vm651, %v568, %v650
        %v659 = vsel %vm651, %v569, %v650
        %v660 = vsel %vm651, %v570, %v650
        %v661 = vsel %vm651, %v571, %v650
        %v662 = vsel %vm651, %v572, %v650
        %v663 = vsel %vm651, %v573, %v650
        %v664 = vsel %vm651, %v574, %v650
        %v665 = vsel %vm651, %v575, %v650
        %v666 = vsel %vm651, %v576, %v650
        %v667 = vsel %vm651, %v577, %v650
        %v668 = vsel %vm651, %v578, %v650
        %v669 = vsel %vm651, %v579, %v650
        %v670 = vsel %vm651, %v580, %v650
        %v671 = vsel %vm651, %v581, %v650
        %v672 = vsel %vm651, %v582, %v650
        %v673 = vsel %vm651, %v583, %v650
        %v674 = vsel %vm651, %v584, %v650
        %v675 = vsel %vm651, %v585, %v650
        %v676 = vsel %vm651, %v586, %v650
        %v677 = vsel %vm651, %v587, %v650
        %v678 = vsel %vm651, %v588, %v650
        %v679 = vsel %vm651, %v589, %v650
        %v680 = vsel %vm651, %v590, %v650
        %v681 = vsel %vm651, %v591, %v650
        %v682 = vsel %vm651, %v592, %v650
        %v683 = vsel %vm651, %v593, %v650
        %s684 = scalar_lea.vmem [#allocation2], 24
        %685 = vst.msk [vmem:[%s684 + $0x1] sm:$0xff] %vm594, %v652
        %686 = vst.msk [vmem:[%s684 + $0x9] sm:$0xff] %vm594, %v653
        %687 = vst.msk [vmem:[%s684 + $0x19] sm:$0xff] %vm594, %v654
        %688 = vst.msk [vmem:[%s684 + $0x21] sm:$0xff] %vm594, %v655
        %689 = vst.msk [vmem:[%s684 + $0x31] sm:$0xff] %vm594, %v656
        %690 = vst.msk [vmem:[%s684 + $0x39] sm:$0xff] %vm594, %v657
        %691 = vst.msk [vmem:[%s684 + $0x49] sm:$0xff] %vm594, %v658
        %692 = vst.msk [vmem:[%s684 + $0x51] sm:$0xff] %vm594, %v659
        %693 = vst.msk [vmem:[%s684 + $0x61] sm:$0xff] %vm594, %v660
        %694 = vst.msk [vmem:[%s684 + $0x69] sm:$0xff] %vm594, %v661
        %695 = vst.msk [vmem:[%s684 + $0x79] sm:$0xff] %vm594, %v662
        %696 = vst.msk [vmem:[%s684 + $0x81] sm:$0xff] %vm594, %v663
        %697 = vst.msk [vmem:[%s684 + $0x91] sm:$0xff] %vm594, %v664
        %698 = vst.msk [vmem:[%s684 + $0x99] sm:$0xff] %vm594, %v665
        %699 = vst.msk [vmem:[%s684 + $0xa9] sm:$0xff] %vm594, %v666
        %700 = vst.msk [vmem:[%s684 + $0xb1] sm:$0xff] %vm594, %v667
        %701 = vst.msk [vmem:[%s684 + $0xc1] sm:$0xff] %vm594, %v668
        %702 = vst.msk [vmem:[%s684 + $0xc9] sm:$0xff] %vm594, %v669
        %703 = vst.msk [vmem:[%s684 + $0xd9] sm:$0xff] %vm594, %v670
        %704 = vst.msk [vmem:[%s684 + $0xe1] sm:$0xff] %vm594, %v671
        %705 = vst.msk [vmem:[%s684 + $0xf1] sm:$0xff] %vm594, %v672
        %706 = vst.msk [vmem:[%s684 + $0xf9] sm:$0xff] %vm594, %v673
        %707 = vst.msk [vmem:[%s684 + $0x109] sm:$0xff] %vm594, %v674
        %708 = vst.msk [vmem:[%s684 + $0x111] sm:$0xff] %vm594, %v675
        %709 = vst.msk [vmem:[%s684 + $0x121] sm:$0xff] %vm594, %v676
        %710 = vst.msk [vmem:[%s684 + $0x129] sm:$0xff] %vm594, %v677
        %711 = vst.msk [vmem:[%s684 + $0x139] sm:$0xff] %vm594, %v678
        %712 = vst.msk [vmem:[%s684 + $0x141] sm:$0xff] %vm594, %v679
        %713 = vst.msk [vmem:[%s684 + $0x151] sm:$0xff] %vm594, %v680
        %714 = vst.msk [vmem:[%s684 + $0x159] sm:$0xff] %vm594, %v681
        %715 = vst.msk [vmem:[%s684 + $0x169] sm:$0xff] %vm594, %v682
        %716 = vst.msk [vmem:[%s684 + $0x171] sm:$0xff] %vm594, %v683
        %v717 = vld [vmem:[#allocation2] sm:$0xff]
        %v718 = vld [vmem:[#allocation2 + $0x8] sm:$0xff]
        %v719 = vld [vmem:[#allocation2 + $0x18] sm:$0xff]
        %v720 = vld [vmem:[#allocation2 + $0x20] sm:$0xff]
        %v721 = vld [vmem:[#allocation2 + $0x30] sm:$0xff]
        %v722 = vld [vmem:[#allocation2 + $0x38] sm:$0xff]
        %v723 = vld [vmem:[#allocation2 + $0x48] sm:$0xff]
        %v724 = vld [vmem:[#allocation2 + $0x50] sm:$0xff]
        %v725 = vld [vmem:[#allocation2 + $0x60] sm:$0xff]
        %v726 = vld [vmem:[#allocation2 + $0x68] sm:$0xff]
        %v727 = vld [vmem:[#allocation2 + $0x78] sm:$0xff]
        %v728 = vld [vmem:[#allocation2 + $0x80] sm:$0xff]
        %v729 = vld [vmem:[#allocation2 + $0x90] sm:$0xff]
        %v730 = vld [vmem:[#allocation2 + $0x98] sm:$0xff]
        %v731 = vld [vmem:[#allocation2 + $0xa8] sm:$0xff]
        %v732 = vld [vmem:[#allocation2 + $0xb0] sm:$0xff]
        %v733 = vld [vmem:[#allocation2 + $0xc0] sm:$0xff]
        %v734 = vld [vmem:[#allocation2 + $0xc8] sm:$0xff]
        %v735 = vld [vmem:[#allocation2 + $0xd8] sm:$0xff]
        %v736 = vld [vmem:[#allocation2 + $0xe0] sm:$0xff]
        %v737 = vld [vmem:[#allocation2 + $0xf0] sm:$0xff]
        %v738 = vld [vmem:[#allocation2 + $0xf8] sm:$0xff]
        %v739 = vld [vmem:[#allocation2 + $0x108] sm:$0xff]
        %v740 = vld [vmem:[#allocation2 + $0x110] sm:$0xff]
        %v741 = vld [vmem:[#allocation2 + $0x120] sm:$0xff]
        %v742 = vld [vmem:[#allocation2 + $0x128] sm:$0xff]
        %v743 = vld [vmem:[#allocation2 + $0x138] sm:$0xff]
        %v744 = vld [vmem:[#allocation2 + $0x140] sm:$0xff]
        %v745 = vld [vmem:[#allocation2 + $0x150] sm:$0xff]
        %v746 = vld [vmem:[#allocation2 + $0x158] sm:$0xff]
        %v747 = vld [vmem:[#allocation2 + $0x168] sm:$0xff]
        %v748 = vld [vmem:[#allocation2 + $0x170] sm:$0xff]
        %v749 = vld [vmem:[#allocation2 + $0x1] sm:$0xff]
        %v750 = vld [vmem:[#allocation2 + $0x9] sm:$0xff]
        %v751 = vld [vmem:[#allocation2 + $0x19] sm:$0xff]
        %v752 = vld [vmem:[#allocation2 + $0x21] sm:$0xff]
        %v753 = vld [vmem:[#allocation2 + $0x31] sm:$0xff]
        %v754 = vld [vmem:[#allocation2 + $0x39] sm:$0xff]
        %v755 = vld [vmem:[#allocation2 + $0x49] sm:$0xff]
        %v756 = vld [vmem:[#allocation2 + $0x51] sm:$0xff]
        %v757 = vld [vmem:[#allocation2 + $0x61] sm:$0xff]
        %v758 = vld [vmem:[#allocation2 + $0x69] sm:$0xff]
        %v759 = vld [vmem:[#allocation2 + $0x79] sm:$0xff]
        %v760 = vld [vmem:[#allocation2 + $0x81] sm:$0xff]
        %v761 = vld [vmem:[#allocation2 + $0x91] sm:$0xff]
        %v762 = vld [vmem:[#allocation2 + $0x99] sm:$0xff]
        %v763 = vld [vmem:[#allocation2 + $0xa9] sm:$0xff]
        %v764 = vld [vmem:[#allocation2 + $0xb1] sm:$0xff]
        %v765 = vld [vmem:[#allocation2 + $0xc1] sm:$0xff]
        %v766 = vld [vmem:[#allocation2 + $0xc9] sm:$0xff]
        %v767 = vld [vmem:[#allocation2 + $0xd9] sm:$0xff]
        %v768 = vld [vmem:[#allocation2 + $0xe1] sm:$0xff]
        %v769 = vld [vmem:[#allocation2 + $0xf1] sm:$0xff]
        %v770 = vld [vmem:[#allocation2 + $0xf9] sm:$0xff]
        %v771 = vld [vmem:[#allocation2 + $0x109] sm:$0xff]
        %v772 = vld [vmem:[#allocation2 + $0x111] sm:$0xff]
        %v773 = vld [vmem:[#allocation2 + $0x121] sm:$0xff]
        %v774 = vld [vmem:[#allocation2 + $0x129] sm:$0xff]
        %v775 = vld [vmem:[#allocation2 + $0x139] sm:$0xff]
        %v776 = vld [vmem:[#allocation2 + $0x141] sm:$0xff]
        %v777 = vld [vmem:[#allocation2 + $0x151] sm:$0xff]
        %v778 = vld [vmem:[#allocation2 + $0x159] sm:$0xff]
        %v779 = vld [vmem:[#allocation2 + $0x169] sm:$0xff]
        %v780 = vld [vmem:[#allocation2 + $0x171] sm:$0xff]
        %v781 = vld [vmem:[#allocation2 + $0x2] sm:$0xff]
        %v782 = vld [vmem:[#allocation2 + $0xa] sm:$0xff]
        %v783 = vld [vmem:[#allocation2 + $0x1a] sm:$0xff]
        %v784 = vld [vmem:[#allocation2 + $0x22] sm:$0xff]
        %v785 = vld [vmem:[#allocation2 + $0x32] sm:$0xff]
        %v786 = vld [vmem:[#allocation2 + $0x3a] sm:$0xff]
        %v787 = vld [vmem:[#allocation2 + $0x4a] sm:$0xff]
        %v788 = vld [vmem:[#allocation2 + $0x52] sm:$0xff]
        %v789 = vld [vmem:[#allocation2 + $0x62] sm:$0xff]
        %v790 = vld [vmem:[#allocation2 + $0x6a] sm:$0xff]
        %v791 = vld [vmem:[#allocation2 + $0x7a] sm:$0xff]
        %v792 = vld [vmem:[#allocation2 + $0x82] sm:$0xff]
        %v793 = vld [vmem:[#allocation2 + $0x92] sm:$0xff]
        %v794 = vld [vmem:[#allocation2 + $0x9a] sm:$0xff]
        %v795 = vld [vmem:[#allocation2 + $0xaa] sm:$0xff]
        %v796 = vld [vmem:[#allocation2 + $0xb2] sm:$0xff]
        %v797 = vld [vmem:[#allocation2 + $0xc2] sm:$0xff]
        %v798 = vld [vmem:[#allocation2 + $0xca] sm:$0xff]
        %v799 = vld [vmem:[#allocation2 + $0xda] sm:$0xff]
        %v800 = vld [vmem:[#allocation2 + $0xe2] sm:$0xff]
        %v801 = vld [vmem:[#allocation2 + $0xf2] sm:$0xff]
        %v802 = vld [vmem:[#allocation2 + $0xfa] sm:$0xff]
        %v803 = vld [vmem:[#allocation2 + $0x10a] sm:$0xff]
        %v804 = vld [vmem:[#allocation2 + $0x112] sm:$0xff]
        %v805 = vld [vmem:[#allocation2 + $0x122] sm:$0xff]
        %v806 = vld [vmem:[#allocation2 + $0x12a] sm:$0xff]
        %v807 = vld [vmem:[#allocation2 + $0x13a] sm:$0xff]
        %v808 = vld [vmem:[#allocation2 + $0x142] sm:$0xff]
        %v809 = vld [vmem:[#allocation2 + $0x152] sm:$0xff]
        %v810 = vld [vmem:[#allocation2 + $0x15a] sm:$0xff]
        %v811 = vld [vmem:[#allocation2 + $0x16a] sm:$0xff]
        %v812 = vld [vmem:[#allocation2 + $0x172] sm:$0xff]
        %v813 = vld [vmem:[%s684] sm:$0xff]
        %v814 = vld [vmem:[%s684 + $0x8] sm:$0xff]
        %v815 = vld [vmem:[%s684 + $0x18] sm:$0xff]
        %v816 = vld [vmem:[%s684 + $0x20] sm:$0xff]
        %v817 = vld [vmem:[%s684 + $0x30] sm:$0xff]
        %v818 = vld [vmem:[%s684 + $0x38] sm:$0xff]
        %v819 = vld [vmem:[%s684 + $0x48] sm:$0xff]
        %v820 = vld [vmem:[%s684 + $0x50] sm:$0xff]
        %v821 = vld [vmem:[%s684 + $0x60] sm:$0xff]
        %v822 = vld [vmem:[%s684 + $0x68] sm:$0xff]
        %v823 = vld [vmem:[%s684 + $0x78] sm:$0xff]
        %v824 = vld [vmem:[%s684 + $0x80] sm:$0xff]
        %v825 = vld [vmem:[%s684 + $0x90] sm:$0xff]
        %v826 = vld [vmem:[%s684 + $0x98] sm:$0xff]
        %v827 = vld [vmem:[%s684 + $0xa8] sm:$0xff]
        %v828 = vld [vmem:[%s684 + $0xb0] sm:$0xff]
        %v829 = vld [vmem:[%s684 + $0xc0] sm:$0xff]
        %v830 = vld [vmem:[%s684 + $0xc8] sm:$0xff]
        %v831 = vld [vmem:[%s684 + $0xd8] sm:$0xff]
        %v832 = vld [vmem:[%s684 + $0xe0] sm:$0xff]
        %v833 = vld [vmem:[%s684 + $0xf0] sm:$0xff]
        %v834 = vld [vmem:[%s684 + $0xf8] sm:$0xff]
        %v835 = vld [vmem:[%s684 + $0x108] sm:$0xff]
        %v836 = vld [vmem:[%s684 + $0x110] sm:$0xff]
        %v837 = vld [vmem:[%s684 + $0x120] sm:$0xff]
        %v838 = vld [vmem:[%s684 + $0x128] sm:$0xff]
        %v839 = vld [vmem:[%s684 + $0x138] sm:$0xff]
        %v840 = vld [vmem:[%s684 + $0x140] sm:$0xff]
        %v841 = vld [vmem:[%s684 + $0x150] sm:$0xff]
        %v842 = vld [vmem:[%s684 + $0x158] sm:$0xff]
        %v843 = vld [vmem:[%s684 + $0x168] sm:$0xff]
        %v844 = vld [vmem:[%s684 + $0x170] sm:$0xff]
        %v845 = vld [vmem:[%s684 + $0x1] sm:$0xff]
        %v846 = vld [vmem:[%s684 + $0x9] sm:$0xff]
        %v847 = vld [vmem:[%s684 + $0x19] sm:$0xff]
        %v848 = vld [vmem:[%s684 + $0x21] sm:$0xff]
        %v849 = vld [vmem:[%s684 + $0x31] sm:$0xff]
        %v850 = vld [vmem:[%s684 + $0x39] sm:$0xff]
        %v851 = vld [vmem:[%s684 + $0x49] sm:$0xff]
        %v852 = vld [vmem:[%s684 + $0x51] sm:$0xff]
        %v853 = vld [vmem:[%s684 + $0x61] sm:$0xff]
        %v854 = vld [vmem:[%s684 + $0x69] sm:$0xff]
        %v855 = vld [vmem:[%s684 + $0x79] sm:$0xff]
        %v856 = vld [vmem:[%s684 + $0x81] sm:$0xff]
        %v857 = vld [vmem:[%s684 + $0x91] sm:$0xff]
        %v858 = vld [vmem:[%s684 + $0x99] sm:$0xff]
        %v859 = vld [vmem:[%s684 + $0xa9] sm:$0xff]
        %v860 = vld [vmem:[%s684 + $0xb1] sm:$0xff]
        %v861 = vld [vmem:[%s684 + $0xc1] sm:$0xff]
        %v862 = vld [vmem:[%s684 + $0xc9] sm:$0xff]
        %v863 = vld [vmem:[%s684 + $0xd9] sm:$0xff]
        %v864 = vld [vmem:[%s684 + $0xe1] sm:$0xff]
        %v865 = vld [vmem:[%s684 + $0xf1] sm:$0xff]
        %v866 = vld [vmem:[%s684 + $0xf9] sm:$0xff]
        %v867 = vld [vmem:[%s684 + $0x109] sm:$0xff]
        %v868 = vld [vmem:[%s684 + $0x111] sm:$0xff]
        %v869 = vld [vmem:[%s684 + $0x121] sm:$0xff]
        %v870 = vld [vmem:[%s684 + $0x129] sm:$0xff]
        %v871 = vld [vmem:[%s684 + $0x139] sm:$0xff]
        %v872 = vld [vmem:[%s684 + $0x141] sm:$0xff]
        %v873 = vld [vmem:[%s684 + $0x151] sm:$0xff]
        %v874 = vld [vmem:[%s684 + $0x159] sm:$0xff]
        %v875 = vld [vmem:[%s684 + $0x169] sm:$0xff]
        %v876 = vld [vmem:[%s684 + $0x171] sm:$0xff]
        %v877 = vld [vmem:[%s684 + $0x2] sm:$0xff]
        %v878 = vld [vmem:[%s684 + $0xa] sm:$0xff]
        %v879 = vld [vmem:[%s684 + $0x1a] sm:$0xff]
        %v880 = vld [vmem:[%s684 + $0x22] sm:$0xff]
        %v881 = vld [vmem:[%s684 + $0x32] sm:$0xff]
        %v882 = vld [vmem:[%s684 + $0x3a] sm:$0xff]
        %v883 = vld [vmem:[%s684 + $0x4a] sm:$0xff]
        %v884 = vld [vmem:[%s684 + $0x52] sm:$0xff]
        %v885 = vld [vmem:[%s684 + $0x62] sm:$0xff]
        %v886 = vld [vmem:[%s684 + $0x6a] sm:$0xff]
        %v887 = vld [vmem:[%s684 + $0x7a] sm:$0xff]
        %v888 = vld [vmem:[%s684 + $0x82] sm:$0xff]
        %v889 = vld [vmem:[%s684 + $0x92] sm:$0xff]
        %v890 = vld [vmem:[%s684 + $0x9a] sm:$0xff]
        %v891 = vld [vmem:[%s684 + $0xaa] sm:$0xff]
        %v892 = vld [vmem:[%s684 + $0xb2] sm:$0xff]
        %v893 = vld [vmem:[%s684 + $0xc2] sm:$0xff]
        %v894 = vld [vmem:[%s684 + $0xca] sm:$0xff]
        %v895 = vld [vmem:[%s684 + $0xda] sm:$0xff]
        %v896 = vld [vmem:[%s684 + $0xe2] sm:$0xff]
        %v897 = vld [vmem:[%s684 + $0xf2] sm:$0xff]
        %v898 = vld [vmem:[%s684 + $0xfa] sm:$0xff]
        %v899 = vld [vmem:[%s684 + $0x10a] sm:$0xff]
        %v900 = vld [vmem:[%s684 + $0x112] sm:$0xff]
        %v901 = vld [vmem:[%s684 + $0x122] sm:$0xff]
        %v902 = vld [vmem:[%s684 + $0x12a] sm:$0xff]
        %v903 = vld [vmem:[%s684 + $0x13a] sm:$0xff]
        %v904 = vld [vmem:[%s684 + $0x142] sm:$0xff]
        %v905 = vld [vmem:[%s684 + $0x152] sm:$0xff]
        %v906 = vld [vmem:[%s684 + $0x15a] sm:$0xff]
        %v907 = vld [vmem:[%s684 + $0x16a] sm:$0xff]
        %v908 = vld [vmem:[%s684 + $0x172] sm:$0xff]
        %s909 = scalar_lea.vmem [#allocation2], 48
        %v910 = vld [vmem:[%s909] sm:$0xff]
        %v911 = vld [vmem:[%s909 + $0x8] sm:$0xff]
        %v912 = vld [vmem:[%s909 + $0x18] sm:$0xff]
        %v913 = vld [vmem:[%s909 + $0x20] sm:$0xff]
        %v914 = vld [vmem:[%s909 + $0x30] sm:$0xff]
        %v915 = vld [vmem:[%s909 + $0x38] sm:$0xff]
        %v916 = vld [vmem:[%s909 + $0x48] sm:$0xff]
        %v917 = vld [vmem:[%s909 + $0x50] sm:$0xff]
        %v918 = vld [vmem:[%s909 + $0x60] sm:$0xff]
        %v919 = vld [vmem:[%s909 + $0x68] sm:$0xff]
        %v920 = vld [vmem:[%s909 + $0x78] sm:$0xff]
        %v921 = vld [vmem:[%s909 + $0x80] sm:$0xff]
        %v922 = vld [vmem:[%s909 + $0x90] sm:$0xff]
        %v923 = vld [vmem:[%s909 + $0x98] sm:$0xff]
        %v924 = vld [vmem:[%s909 + $0xa8] sm:$0xff]
        %v925 = vld [vmem:[%s909 + $0xb0] sm:$0xff]
        %v926 = vld [vmem:[%s909 + $0xc0] sm:$0xff]
        %v927 = vld [vmem:[%s909 + $0xc8] sm:$0xff]
        %v928 = vld [vmem:[%s909 + $0xd8] sm:$0xff]
        %v929 = vld [vmem:[%s909 + $0xe0] sm:$0xff]
        %v930 = vld [vmem:[%s909 + $0xf0] sm:$0xff]
        %v931 = vld [vmem:[%s909 + $0xf8] sm:$0xff]
        %v932 = vld [vmem:[%s909 + $0x108] sm:$0xff]
        %v933 = vld [vmem:[%s909 + $0x110] sm:$0xff]
        %v934 = vld [vmem:[%s909 + $0x120] sm:$0xff]
        %v935 = vld [vmem:[%s909 + $0x128] sm:$0xff]
        %v936 = vld [vmem:[%s909 + $0x138] sm:$0xff]
        %v937 = vld [vmem:[%s909 + $0x140] sm:$0xff]
        %v938 = vld [vmem:[%s909 + $0x150] sm:$0xff]
        %v939 = vld [vmem:[%s909 + $0x158] sm:$0xff]
        %v940 = vld [vmem:[%s909 + $0x168] sm:$0xff]
        %v941 = vld [vmem:[%s909 + $0x170] sm:$0xff]
        %v942 = vld [vmem:[%s909 + $0x1] sm:$0xff]
        %v943 = vld [vmem:[%s909 + $0x9] sm:$0xff]
        %v944 = vld [vmem:[%s909 + $0x19] sm:$0xff]
        %v945 = vld [vmem:[%s909 + $0x21] sm:$0xff]
        %v946 = vld [vmem:[%s909 + $0x31] sm:$0xff]
        %v947 = vld [vmem:[%s909 + $0x39] sm:$0xff]
        %v948 = vld [vmem:[%s909 + $0x49] sm:$0xff]
        %v949 = vld [vmem:[%s909 + $0x51] sm:$0xff]
        %v950 = vld [vmem:[%s909 + $0x61] sm:$0xff]
        %v951 = vld [vmem:[%s909 + $0x69] sm:$0xff]
        %v952 = vld [vmem:[%s909 + $0x79] sm:$0xff]
        %v953 = vld [vmem:[%s909 + $0x81] sm:$0xff]
        %v954 = vld [vmem:[%s909 + $0x91] sm:$0xff]
        %v955 = vld [vmem:[%s909 + $0x99] sm:$0xff]
        %v956 = vld [vmem:[%s909 + $0xa9] sm:$0xff]
        %v957 = vld [vmem:[%s909 + $0xb1] sm:$0xff]
        %v958 = vld [vmem:[%s909 + $0xc1] sm:$0xff]
        %v959 = vld [vmem:[%s909 + $0xc9] sm:$0xff]
        %v960 = vld [vmem:[%s909 + $0xd9] sm:$0xff]
        %v961 = vld [vmem:[%s909 + $0xe1] sm:$0xff]
        %v962 = vld [vmem:[%s909 + $0xf1] sm:$0xff]
        %v963 = vld [vmem:[%s909 + $0xf9] sm:$0xff]
        %v964 = vld [vmem:[%s909 + $0x109] sm:$0xff]
        %v965 = vld [vmem:[%s909 + $0x111] sm:$0xff]
        %v966 = vld [vmem:[%s909 + $0x121] sm:$0xff]
        %v967 = vld [vmem:[%s909 + $0x129] sm:$0xff]
        %v968 = vld [vmem:[%s909 + $0x139] sm:$0xff]
        %v969 = vld [vmem:[%s909 + $0x141] sm:$0xff]
        %v970 = vld [vmem:[%s909 + $0x151] sm:$0xff]
        %v971 = vld [vmem:[%s909 + $0x159] sm:$0xff]
        %v972 = vld [vmem:[%s909 + $0x169] sm:$0xff]
        %v973 = vld [vmem:[%s909 + $0x171] sm:$0xff]
        %v974 = vld [vmem:[%s909 + $0x2] sm:$0xff]
        %v975 = vld [vmem:[%s909 + $0xa] sm:$0xff]
        %v976 = vld [vmem:[%s909 + $0x1a] sm:$0xff]
        %v977 = vld [vmem:[%s909 + $0x22] sm:$0xff]
        %v978 = vld [vmem:[%s909 + $0x32] sm:$0xff]
        %v979 = vld [vmem:[%s909 + $0x3a] sm:$0xff]
        %v980 = vld [vmem:[%s909 + $0x4a] sm:$0xff]
        %v981 = vld [vmem:[%s909 + $0x52] sm:$0xff]
        %v982 = vld [vmem:[%s909 + $0x62] sm:$0xff]
        %v983 = vld [vmem:[%s909 + $0x6a] sm:$0xff]
        %v984 = vld [vmem:[%s909 + $0x7a] sm:$0xff]
        %v985 = vld [vmem:[%s909 + $0x82] sm:$0xff]
        %v986 = vld [vmem:[%s909 + $0x92] sm:$0xff]
        %v987 = vld [vmem:[%s909 + $0x9a] sm:$0xff]
        %v988 = vld [vmem:[%s909 + $0xaa] sm:$0xff]
        %v989 = vld [vmem:[%s909 + $0xb2] sm:$0xff]
        %v990 = vld [vmem:[%s909 + $0xc2] sm:$0xff]
        %v991 = vld [vmem:[%s909 + $0xca] sm:$0xff]
        %v992 = vld [vmem:[%s909 + $0xda] sm:$0xff]
        %v993 = vld [vmem:[%s909 + $0xe2] sm:$0xff]
        %v994 = vld [vmem:[%s909 + $0xf2] sm:$0xff]
        %v995 = vld [vmem:[%s909 + $0xfa] sm:$0xff]
        %v996 = vld [vmem:[%s909 + $0x10a] sm:$0xff]
        %v997 = vld [vmem:[%s909 + $0x112] sm:$0xff]
        %v998 = vld [vmem:[%s909 + $0x122] sm:$0xff]
        %v999 = vld [vmem:[%s909 + $0x12a] sm:$0xff]
        %v1000 = vld [vmem:[%s909 + $0x13a] sm:$0xff]
        %v1001 = vld [vmem:[%s909 + $0x142] sm:$0xff]
        %v1002 = vld [vmem:[%s909 + $0x152] sm:$0xff]
        %v1003 = vld [vmem:[%s909 + $0x15a] sm:$0xff]
        %v1004 = vld [vmem:[%s909 + $0x16a] sm:$0xff]
        %v1005 = vld [vmem:[%s909 + $0x172] sm:$0xff]
        %1038 = vrot.lane.b32.xlu0 %v749, 4
        %v1039 = vpop.permute.xlu0 %1038
        %1040 = vrot.lane.b32.xlu0 %v750, 4
        %v1041 = vpop.permute.xlu0 %1040
        %1042 = vrot.lane.b32.xlu0 %v751, 4
        %v1043 = vpop.permute.xlu0 %1042
        %1044 = vrot.lane.b32.xlu0 %v752, 4
        %v1045 = vpop.permute.xlu0 %1044
        %1046 = vrot.lane.b32.xlu0 %v753, 4
        %v1047 = vpop.permute.xlu0 %1046
        %1048 = vrot.lane.b32.xlu0 %v754, 4
        %v1049 = vpop.permute.xlu0 %1048
        %1050 = vrot.lane.b32.xlu0 %v755, 4
        %v1051 = vpop.permute.xlu0 %1050
        %1052 = vrot.lane.b32.xlu0 %v756, 4
        %v1053 = vpop.permute.xlu0 %1052
        %1054 = vrot.lane.b32.xlu0 %v757, 4
        %v1055 = vpop.permute.xlu0 %1054
        %1056 = vrot.lane.b32.xlu0 %v758, 4
        %v1057 = vpop.permute.xlu0 %1056
        %1058 = vrot.lane.b32.xlu0 %v759, 4
        %v1059 = vpop.permute.xlu0 %1058
        %1060 = vrot.lane.b32.xlu0 %v760, 4
        %v1061 = vpop.permute.xlu0 %1060
        %1062 = vrot.lane.b32.xlu0 %v761, 4
        %v1063 = vpop.permute.xlu0 %1062
        %1064 = vrot.lane.b32.xlu0 %v762, 4
        %v1065 = vpop.permute.xlu0 %1064
        %1066 = vrot.lane.b32.xlu0 %v763, 4
        %v1067 = vpop.permute.xlu0 %1066
        %1068 = vrot.lane.b32.xlu0 %v764, 4
        %v1069 = vpop.permute.xlu0 %1068
        %1070 = vrot.lane.b32.xlu0 %v765, 4
        %v1071 = vpop.permute.xlu0 %1070
        %1072 = vrot.lane.b32.xlu0 %v766, 4
        %v1073 = vpop.permute.xlu0 %1072
        %1074 = vrot.lane.b32.xlu0 %v767, 4
        %v1075 = vpop.permute.xlu0 %1074
        %1076 = vrot.lane.b32.xlu0 %v768, 4
        %v1077 = vpop.permute.xlu0 %1076
        %1078 = vrot.lane.b32.xlu0 %v769, 4
        %v1079 = vpop.permute.xlu0 %1078
        %1080 = vrot.lane.b32.xlu0 %v770, 4
        %v1081 = vpop.permute.xlu0 %1080
        %1082 = vrot.lane.b32.xlu0 %v771, 4
        %v1083 = vpop.permute.xlu0 %1082
        %1084 = vrot.lane.b32.xlu0 %v772, 4
        %v1085 = vpop.permute.xlu0 %1084
        %1086 = vrot.lane.b32.xlu0 %v773, 4
        %v1087 = vpop.permute.xlu0 %1086
        %1088 = vrot.lane.b32.xlu0 %v774, 4
        %v1089 = vpop.permute.xlu0 %1088
        %1090 = vrot.lane.b32.xlu0 %v775, 4
        %v1091 = vpop.permute.xlu0 %1090
        %1092 = vrot.lane.b32.xlu0 %v776, 4
        %v1093 = vpop.permute.xlu0 %1092
        %1094 = vrot.lane.b32.xlu0 %v777, 4
        %v1095 = vpop.permute.xlu0 %1094
        %1096 = vrot.lane.b32.xlu0 %v778, 4
        %v1097 = vpop.permute.xlu0 %1096
        %1098 = vrot.lane.b32.xlu0 %v779, 4
        %v1099 = vpop.permute.xlu0 %1098
        %1100 = vrot.lane.b32.xlu0 %v780, 4
        %v1101 = vpop.permute.xlu0 %1100
        %1166 = vrot.lane.b32.xlu0 %v781, 8
        %v1167 = vpop.permute.xlu0 %1166
        %1168 = vrot.lane.b32.xlu0 %v782, 8
        %v1169 = vpop.permute.xlu0 %1168
        %1170 = vrot.lane.b32.xlu0 %v783, 8
        %v1171 = vpop.permute.xlu0 %1170
        %1172 = vrot.lane.b32.xlu0 %v784, 8
        %v1173 = vpop.permute.xlu0 %1172
        %1174 = vrot.lane.b32.xlu0 %v785, 8
        %v1175 = vpop.permute.xlu0 %1174
        %1176 = vrot.lane.b32.xlu0 %v786, 8
        %v1177 = vpop.permute.xlu0 %1176
        %1178 = vrot.lane.b32.xlu0 %v787, 8
        %v1179 = vpop.permute.xlu0 %1178
        %1180 = vrot.lane.b32.xlu0 %v788, 8
        %v1181 = vpop.permute.xlu0 %1180
        %1182 = vrot.lane.b32.xlu0 %v789, 8
        %v1183 = vpop.permute.xlu0 %1182
        %1184 = vrot.lane.b32.xlu0 %v790, 8
        %v1185 = vpop.permute.xlu0 %1184
        %1186 = vrot.lane.b32.xlu0 %v791, 8
        %v1187 = vpop.permute.xlu0 %1186
        %1188 = vrot.lane.b32.xlu0 %v792, 8
        %v1189 = vpop.permute.xlu0 %1188
        %1190 = vrot.lane.b32.xlu0 %v793, 8
        %v1191 = vpop.permute.xlu0 %1190
        %1192 = vrot.lane.b32.xlu0 %v794, 8
        %v1193 = vpop.permute.xlu0 %1192
        %1194 = vrot.lane.b32.xlu0 %v795, 8
        %v1195 = vpop.permute.xlu0 %1194
        %1196 = vrot.lane.b32.xlu0 %v796, 8
        %v1197 = vpop.permute.xlu0 %1196
        %1198 = vrot.lane.b32.xlu0 %v797, 8
        %v1199 = vpop.permute.xlu0 %1198
        %1200 = vrot.lane.b32.xlu0 %v798, 8
        %v1201 = vpop.permute.xlu0 %1200
        %1202 = vrot.lane.b32.xlu0 %v799, 8
        %v1203 = vpop.permute.xlu0 %1202
        %1204 = vrot.lane.b32.xlu0 %v800, 8
        %v1205 = vpop.permute.xlu0 %1204
        %1206 = vrot.lane.b32.xlu0 %v801, 8
        %v1207 = vpop.permute.xlu0 %1206
        %1208 = vrot.lane.b32.xlu0 %v802, 8
        %v1209 = vpop.permute.xlu0 %1208
        %1210 = vrot.lane.b32.xlu0 %v803, 8
        %v1211 = vpop.permute.xlu0 %1210
        %1212 = vrot.lane.b32.xlu0 %v804, 8
        %v1213 = vpop.permute.xlu0 %1212
        %1214 = vrot.lane.b32.xlu0 %v805, 8
        %v1215 = vpop.permute.xlu0 %1214
        %1216 = vrot.lane.b32.xlu0 %v806, 8
        %v1217 = vpop.permute.xlu0 %1216
        %1218 = vrot.lane.b32.xlu0 %v807, 8
        %v1219 = vpop.permute.xlu0 %1218
        %1220 = vrot.lane.b32.xlu0 %v808, 8
        %v1221 = vpop.permute.xlu0 %1220
        %1222 = vrot.lane.b32.xlu0 %v809, 8
        %v1223 = vpop.permute.xlu0 %1222
        %1224 = vrot.lane.b32.xlu0 %v810, 8
        %v1225 = vpop.permute.xlu0 %1224
        %1226 = vrot.lane.b32.xlu0 %v811, 8
        %v1227 = vpop.permute.xlu0 %1226
        %1228 = vrot.lane.b32.xlu0 %v812, 8
        %v1229 = vpop.permute.xlu0 %1228
        %1294 = vrot.lane.b32.xlu0 %v813, 12
        %v1295 = vpop.permute.xlu0 %1294
        %1296 = vrot.lane.b32.xlu0 %v814, 12
        %v1297 = vpop.permute.xlu0 %1296
        %1298 = vrot.lane.b32.xlu0 %v815, 12
        %v1299 = vpop.permute.xlu0 %1298
        %1300 = vrot.lane.b32.xlu0 %v816, 12
        %v1301 = vpop.permute.xlu0 %1300
        %1302 = vrot.lane.b32.xlu0 %v817, 12
        %v1303 = vpop.permute.xlu0 %1302
        %1304 = vrot.lane.b32.xlu0 %v818, 12
        %v1305 = vpop.permute.xlu0 %1304
        %1306 = vrot.lane.b32.xlu0 %v819, 12
        %v1307 = vpop.permute.xlu0 %1306
        %1308 = vrot.lane.b32.xlu0 %v820, 12
        %v1309 = vpop.permute.xlu0 %1308
        %1310 = vrot.lane.b32.xlu0 %v821, 12
        %v1311 = vpop.permute.xlu0 %1310
        %1312 = vrot.lane.b32.xlu0 %v822, 12
        %v1313 = vpop.permute.xlu0 %1312
        %1314 = vrot.lane.b32.xlu0 %v823, 12
        %v1315 = vpop.permute.xlu0 %1314
        %1316 = vrot.lane.b32.xlu0 %v824, 12
        %v1317 = vpop.permute.xlu0 %1316
        %1318 = vrot.lane.b32.xlu0 %v825, 12
        %v1319 = vpop.permute.xlu0 %1318
        %1320 = vrot.lane.b32.xlu0 %v826, 12
        %v1321 = vpop.permute.xlu0 %1320
        %1322 = vrot.lane.b32.xlu0 %v827, 12
        %v1323 = vpop.permute.xlu0 %1322
        %1324 = vrot.lane.b32.xlu0 %v828, 12
        %v1325 = vpop.permute.xlu0 %1324
        %1326 = vrot.lane.b32.xlu0 %v829, 12
        %v1327 = vpop.permute.xlu0 %1326
        %1328 = vrot.lane.b32.xlu0 %v830, 12
        %v1329 = vpop.permute.xlu0 %1328
        %1330 = vrot.lane.b32.xlu0 %v831, 12
        %v1331 = vpop.permute.xlu0 %1330
        %1332 = vrot.lane.b32.xlu0 %v832, 12
        %v1333 = vpop.permute.xlu0 %1332
        %1334 = vrot.lane.b32.xlu0 %v833, 12
        %v1335 = vpop.permute.xlu0 %1334
        %1336 = vrot.lane.b32.xlu0 %v834, 12
        %v1337 = vpop.permute.xlu0 %1336
        %1338 = vrot.lane.b32.xlu0 %v835, 12
        %v1339 = vpop.permute.xlu0 %1338
        %1340 = vrot.lane.b32.xlu0 %v836, 12
        %v1341 = vpop.permute.xlu0 %1340
        %1342 = vrot.lane.b32.xlu0 %v837, 12
        %v1343 = vpop.permute.xlu0 %1342
        %1344 = vrot.lane.b32.xlu0 %v838, 12
        %v1345 = vpop.permute.xlu0 %1344
        %1346 = vrot.lane.b32.xlu0 %v839, 12
        %v1347 = vpop.permute.xlu0 %1346
        %1348 = vrot.lane.b32.xlu0 %v840, 12
        %v1349 = vpop.permute.xlu0 %1348
        %1350 = vrot.lane.b32.xlu0 %v841, 12
        %v1351 = vpop.permute.xlu0 %1350
        %1352 = vrot.lane.b32.xlu0 %v842, 12
        %v1353 = vpop.permute.xlu0 %1352
        %1354 = vrot.lane.b32.xlu0 %v843, 12
        %v1355 = vpop.permute.xlu0 %1354
        %1356 = vrot.lane.b32.xlu0 %v844, 12
        %v1357 = vpop.permute.xlu0 %1356
        %1422 = vrot.lane.b32.xlu0 %v845, 16
        %v1423 = vpop.permute.xlu0 %1422
        %1424 = vrot.lane.b32.xlu0 %v846, 16
        %v1425 = vpop.permute.xlu0 %1424
        %1426 = vrot.lane.b32.xlu0 %v847, 16
        %v1427 = vpop.permute.xlu0 %1426
        %1428 = vrot.lane.b32.xlu0 %v848, 16
        %v1429 = vpop.permute.xlu0 %1428
        %1430 = vrot.lane.b32.xlu0 %v849, 16
        %v1431 = vpop.permute.xlu0 %1430
        %1432 = vrot.lane.b32.xlu0 %v850, 16
        %v1433 = vpop.permute.xlu0 %1432
        %1434 = vrot.lane.b32.xlu0 %v851, 16
        %v1435 = vpop.permute.xlu0 %1434
        %1436 = vrot.lane.b32.xlu0 %v852, 16
        %v1437 = vpop.permute.xlu0 %1436
        %1438 = vrot.lane.b32.xlu0 %v853, 16
        %v1439 = vpop.permute.xlu0 %1438
        %1440 = vrot.lane.b32.xlu0 %v854, 16
        %v1441 = vpop.permute.xlu0 %1440
        %1442 = vrot.lane.b32.xlu0 %v855, 16
        %v1443 = vpop.permute.xlu0 %1442
        %1444 = vrot.lane.b32.xlu0 %v856, 16
        %v1445 = vpop.permute.xlu0 %1444
        %1446 = vrot.lane.b32.xlu0 %v857, 16
        %v1447 = vpop.permute.xlu0 %1446
        %1448 = vrot.lane.b32.xlu0 %v858, 16
        %v1449 = vpop.permute.xlu0 %1448
        %1450 = vrot.lane.b32.xlu0 %v859, 16
        %v1451 = vpop.permute.xlu0 %1450
        %1452 = vrot.lane.b32.xlu0 %v860, 16
        %v1453 = vpop.permute.xlu0 %1452
        %1454 = vrot.lane.b32.xlu0 %v861, 16
        %v1455 = vpop.permute.xlu0 %1454
        %1456 = vrot.lane.b32.xlu0 %v862, 16
        %v1457 = vpop.permute.xlu0 %1456
        %1458 = vrot.lane.b32.xlu0 %v863, 16
        %v1459 = vpop.permute.xlu0 %1458
        %1460 = vrot.lane.b32.xlu0 %v864, 16
        %v1461 = vpop.permute.xlu0 %1460
        %1462 = vrot.lane.b32.xlu0 %v865, 16
        %v1463 = vpop.permute.xlu0 %1462
        %1464 = vrot.lane.b32.xlu0 %v866, 16
        %v1465 = vpop.permute.xlu0 %1464
        %1466 = vrot.lane.b32.xlu0 %v867, 16
        %v1467 = vpop.permute.xlu0 %1466
        %1468 = vrot.lane.b32.xlu0 %v868, 16
        %v1469 = vpop.permute.xlu0 %1468
        %1470 = vrot.lane.b32.xlu0 %v869, 16
        %v1471 = vpop.permute.xlu0 %1470
        %1472 = vrot.lane.b32.xlu0 %v870, 16
        %v1473 = vpop.permute.xlu0 %1472
        %1474 = vrot.lane.b32.xlu0 %v871, 16
        %v1475 = vpop.permute.xlu0 %1474
        %1476 = vrot.lane.b32.xlu0 %v872, 16
        %v1477 = vpop.permute.xlu0 %1476
        %1478 = vrot.lane.b32.xlu0 %v873, 16
        %v1479 = vpop.permute.xlu0 %1478
        %1480 = vrot.lane.b32.xlu0 %v874, 16
        %v1481 = vpop.permute.xlu0 %1480
        %1482 = vrot.lane.b32.xlu0 %v875, 16
        %v1483 = vpop.permute.xlu0 %1482
        %1484 = vrot.lane.b32.xlu0 %v876, 16
        %v1485 = vpop.permute.xlu0 %1484
        %1550 = vrot.lane.b32.xlu0 %v877, 20
        %v1551 = vpop.permute.xlu0 %1550
        %1552 = vrot.lane.b32.xlu0 %v878, 20
        %v1553 = vpop.permute.xlu0 %1552
        %1554 = vrot.lane.b32.xlu0 %v879, 20
        %v1555 = vpop.permute.xlu0 %1554
        %1556 = vrot.lane.b32.xlu0 %v880, 20
        %v1557 = vpop.permute.xlu0 %1556
        %1558 = vrot.lane.b32.xlu0 %v881, 20
        %v1559 = vpop.permute.xlu0 %1558
        %1560 = vrot.lane.b32.xlu0 %v882, 20
        %v1561 = vpop.permute.xlu0 %1560
        %1562 = vrot.lane.b32.xlu0 %v883, 20
        %v1563 = vpop.permute.xlu0 %1562
        %1564 = vrot.lane.b32.xlu0 %v884, 20
        %v1565 = vpop.permute.xlu0 %1564
        %1566 = vrot.lane.b32.xlu0 %v885, 20
        %v1567 = vpop.permute.xlu0 %1566
        %1568 = vrot.lane.b32.xlu0 %v886, 20
        %v1569 = vpop.permute.xlu0 %1568
        %1570 = vrot.lane.b32.xlu0 %v887, 20
        %v1571 = vpop.permute.xlu0 %1570
        %1572 = vrot.lane.b32.xlu0 %v888, 20
        %v1573 = vpop.permute.xlu0 %1572
        %1574 = vrot.lane.b32.xlu0 %v889, 20
        %v1575 = vpop.permute.xlu0 %1574
        %1576 = vrot.lane.b32.xlu0 %v890, 20
        %v1577 = vpop.permute.xlu0 %1576
        %1578 = vrot.lane.b32.xlu0 %v891, 20
        %v1579 = vpop.permute.xlu0 %1578
        %1580 = vrot.lane.b32.xlu0 %v892, 20
        %v1581 = vpop.permute.xlu0 %1580
        %1582 = vrot.lane.b32.xlu0 %v893, 20
        %v1583 = vpop.permute.xlu0 %1582
        %1584 = vrot.lane.b32.xlu0 %v894, 20
        %v1585 = vpop.permute.xlu0 %1584
        %1586 = vrot.lane.b32.xlu0 %v895, 20
        %v1587 = vpop.permute.xlu0 %1586
        %1588 = vrot.lane.b32.xlu0 %v896, 20
        %v1589 = vpop.permute.xlu0 %1588
        %1590 = vrot.lane.b32.xlu0 %v897, 20
        %v1591 = vpop.permute.xlu0 %1590
        %1592 = vrot.lane.b32.xlu0 %v898, 20
        %v1593 = vpop.permute.xlu0 %1592
        %1594 = vrot.lane.b32.xlu0 %v899, 20
        %v1595 = vpop.permute.xlu0 %1594
        %1596 = vrot.lane.b32.xlu0 %v900, 20
        %v1597 = vpop.permute.xlu0 %1596
        %1598 = vrot.lane.b32.xlu0 %v901, 20
        %v1599 = vpop.permute.xlu0 %1598
        %1600 = vrot.lane.b32.xlu0 %v902, 20
        %v1601 = vpop.permute.xlu0 %1600
        %1602 = vrot.lane.b32.xlu0 %v903, 20
        %v1603 = vpop.permute.xlu0 %1602
        %1604 = vrot.lane.b32.xlu0 %v904, 20
        %v1605 = vpop.permute.xlu0 %1604
        %1606 = vrot.lane.b32.xlu0 %v905, 20
        %v1607 = vpop.permute.xlu0 %1606
        %1608 = vrot.lane.b32.xlu0 %v906, 20
        %v1609 = vpop.permute.xlu0 %1608
        %1610 = vrot.lane.b32.xlu0 %v907, 20
        %v1611 = vpop.permute.xlu0 %1610
        %1612 = vrot.lane.b32.xlu0 %v908, 20
        %v1613 = vpop.permute.xlu0 %1612
        %1678 = vrot.lane.b32.xlu0 %v910, 24
        %v1679 = vpop.permute.xlu0 %1678
        %1680 = vrot.lane.b32.xlu0 %v911, 24
        %v1681 = vpop.permute.xlu0 %1680
        %1682 = vrot.lane.b32.xlu0 %v912, 24
        %v1683 = vpop.permute.xlu0 %1682
        %1684 = vrot.lane.b32.xlu0 %v913, 24
        %v1685 = vpop.permute.xlu0 %1684
        %1686 = vrot.lane.b32.xlu0 %v914, 24
        %v1687 = vpop.permute.xlu0 %1686
        %1688 = vrot.lane.b32.xlu0 %v915, 24
        %v1689 = vpop.permute.xlu0 %1688
        %1690 = vrot.lane.b32.xlu0 %v916, 24
        %v1691 = vpop.permute.xlu0 %1690
        %1692 = vrot.lane.b32.xlu0 %v917, 24
        %v1693 = vpop.permute.xlu0 %1692
        %1694 = vrot.lane.b32.xlu0 %v918, 24
        %v1695 = vpop.permute.xlu0 %1694
        %1696 = vrot.lane.b32.xlu0 %v919, 24
        %v1697 = vpop.permute.xlu0 %1696
        %1698 = vrot.lane.b32.xlu0 %v920, 24
        %v1699 = vpop.permute.xlu0 %1698
        %1700 = vrot.lane.b32.xlu0 %v921, 24
        %v1701 = vpop.permute.xlu0 %1700
        %1702 = vrot.lane.b32.xlu0 %v922, 24
        %v1703 = vpop.permute.xlu0 %1702
        %1704 = vrot.lane.b32.xlu0 %v923, 24
        %v1705 = vpop.permute.xlu0 %1704
        %1706 = vrot.lane.b32.xlu0 %v924, 24
        %v1707 = vpop.permute.xlu0 %1706
        %1708 = vrot.lane.b32.xlu0 %v925, 24
        %v1709 = vpop.permute.xlu0 %1708
        %1710 = vrot.lane.b32.xlu0 %v926, 24
        %v1711 = vpop.permute.xlu0 %1710
        %1712 = vrot.lane.b32.xlu0 %v927, 24
        %v1713 = vpop.permute.xlu0 %1712
        %1714 = vrot.lane.b32.xlu0 %v928, 24
        %v1715 = vpop.permute.xlu0 %1714
        %1716 = vrot.lane.b32.xlu0 %v929, 24
        %v1717 = vpop.permute.xlu0 %1716
        %1718 = vrot.lane.b32.xlu0 %v930, 24
        %v1719 = vpop.permute.xlu0 %1718
        %1720 = vrot.lane.b32.xlu0 %v931, 24
        %v1721 = vpop.permute.xlu0 %1720
        %1722 = vrot.lane.b32.xlu0 %v932, 24
        %v1723 = vpop.permute.xlu0 %1722
        %1724 = vrot.lane.b32.xlu0 %v933, 24
        %v1725 = vpop.permute.xlu0 %1724
        %1726 = vrot.lane.b32.xlu0 %v934, 24
        %v1727 = vpop.permute.xlu0 %1726
        %1728 = vrot.lane.b32.xlu0 %v935, 24
        %v1729 = vpop.permute.xlu0 %1728
        %1730 = vrot.lane.b32.xlu0 %v936, 24
        %v1731 = vpop.permute.xlu0 %1730
        %1732 = vrot.lane.b32.xlu0 %v937, 24
        %v1733 = vpop.permute.xlu0 %1732
        %1734 = vrot.lane.b32.xlu0 %v938, 24
        %v1735 = vpop.permute.xlu0 %1734
        %1736 = vrot.lane.b32.xlu0 %v939, 24
        %v1737 = vpop.permute.xlu0 %1736
        %1738 = vrot.lane.b32.xlu0 %v940, 24
        %v1739 = vpop.permute.xlu0 %1738
        %1740 = vrot.lane.b32.xlu0 %v941, 24
        %v1741 = vpop.permute.xlu0 %1740
        %1806 = vrot.lane.b32.xlu0 %v942, 28
        %v1807 = vpop.permute.xlu0 %1806
        %1808 = vrot.lane.b32.xlu0 %v943, 28
        %v1809 = vpop.permute.xlu0 %1808
        %1810 = vrot.lane.b32.xlu0 %v944, 28
        %v1811 = vpop.permute.xlu0 %1810
        %1812 = vrot.lane.b32.xlu0 %v945, 28
        %v1813 = vpop.permute.xlu0 %1812
        %1814 = vrot.lane.b32.xlu0 %v946, 28
        %v1815 = vpop.permute.xlu0 %1814
        %1816 = vrot.lane.b32.xlu0 %v947, 28
        %v1817 = vpop.permute.xlu0 %1816
        %1818 = vrot.lane.b32.xlu0 %v948, 28
        %v1819 = vpop.permute.xlu0 %1818
        %1820 = vrot.lane.b32.xlu0 %v949, 28
        %v1821 = vpop.permute.xlu0 %1820
        %1822 = vrot.lane.b32.xlu0 %v950, 28
        %v1823 = vpop.permute.xlu0 %1822
        %1824 = vrot.lane.b32.xlu0 %v951, 28
        %v1825 = vpop.permute.xlu0 %1824
        %1826 = vrot.lane.b32.xlu0 %v952, 28
        %v1827 = vpop.permute.xlu0 %1826
        %1828 = vrot.lane.b32.xlu0 %v953, 28
        %v1829 = vpop.permute.xlu0 %1828
        %1830 = vrot.lane.b32.xlu0 %v954, 28
        %v1831 = vpop.permute.xlu0 %1830
        %1832 = vrot.lane.b32.xlu0 %v955, 28
        %v1833 = vpop.permute.xlu0 %1832
        %1834 = vrot.lane.b32.xlu0 %v956, 28
        %v1835 = vpop.permute.xlu0 %1834
        %1836 = vrot.lane.b32.xlu0 %v957, 28
        %v1837 = vpop.permute.xlu0 %1836
        %1838 = vrot.lane.b32.xlu0 %v958, 28
        %v1839 = vpop.permute.xlu0 %1838
        %1840 = vrot.lane.b32.xlu0 %v959, 28
        %v1841 = vpop.permute.xlu0 %1840
        %1842 = vrot.lane.b32.xlu0 %v960, 28
        %v1843 = vpop.permute.xlu0 %1842
        %1844 = vrot.lane.b32.xlu0 %v961, 28
        %v1845 = vpop.permute.xlu0 %1844
        %1846 = vrot.lane.b32.xlu0 %v962, 28
        %v1847 = vpop.permute.xlu0 %1846
        %1848 = vrot.lane.b32.xlu0 %v963, 28
        %v1849 = vpop.permute.xlu0 %1848
        %1850 = vrot.lane.b32.xlu0 %v964, 28
        %v1851 = vpop.permute.xlu0 %1850
        %1852 = vrot.lane.b32.xlu0 %v965, 28
        %v1853 = vpop.permute.xlu0 %1852
        %1854 = vrot.lane.b32.xlu0 %v966, 28
        %v1855 = vpop.permute.xlu0 %1854
        %1856 = vrot.lane.b32.xlu0 %v967, 28
        %v1857 = vpop.permute.xlu0 %1856
        %1858 = vrot.lane.b32.xlu0 %v968, 28
        %v1859 = vpop.permute.xlu0 %1858
        %1860 = vrot.lane.b32.xlu0 %v969, 28
        %v1861 = vpop.permute.xlu0 %1860
        %1862 = vrot.lane.b32.xlu0 %v970, 28
        %v1863 = vpop.permute.xlu0 %1862
        %1864 = vrot.lane.b32.xlu0 %v971, 28
        %v1865 = vpop.permute.xlu0 %1864
        %1866 = vrot.lane.b32.xlu0 %v972, 28
        %v1867 = vpop.permute.xlu0 %1866
        %1868 = vrot.lane.b32.xlu0 %v973, 28
        %v1869 = vpop.permute.xlu0 %1868
        %1934 = vrot.lane.b32.xlu0 %v974, 32
        %v1935 = vpop.permute.xlu0 %1934
        %1936 = vrot.lane.b32.xlu0 %v975, 32
        %v1937 = vpop.permute.xlu0 %1936
        %1938 = vrot.lane.b32.xlu0 %v976, 32
        %v1939 = vpop.permute.xlu0 %1938
        %1940 = vrot.lane.b32.xlu0 %v977, 32
        %v1941 = vpop.permute.xlu0 %1940
        %1942 = vrot.lane.b32.xlu0 %v978, 32
        %v1943 = vpop.permute.xlu0 %1942
        %1944 = vrot.lane.b32.xlu0 %v979, 32
        %v1945 = vpop.permute.xlu0 %1944
        %1946 = vrot.lane.b32.xlu0 %v980, 32
        %v1947 = vpop.permute.xlu0 %1946
        %1948 = vrot.lane.b32.xlu0 %v981, 32
        %v1949 = vpop.permute.xlu0 %1948
        %1950 = vrot.lane.b32.xlu0 %v982, 32
        %v1951 = vpop.permute.xlu0 %1950
        %1952 = vrot.lane.b32.xlu0 %v983, 32
        %v1953 = vpop.permute.xlu0 %1952
        %1954 = vrot.lane.b32.xlu0 %v984, 32
        %v1955 = vpop.permute.xlu0 %1954
        %1956 = vrot.lane.b32.xlu0 %v985, 32
        %v1957 = vpop.permute.xlu0 %1956
        %1958 = vrot.lane.b32.xlu0 %v986, 32
        %v1959 = vpop.permute.xlu0 %1958
        %1960 = vrot.lane.b32.xlu0 %v987, 32
        %v1961 = vpop.permute.xlu0 %1960
        %1962 = vrot.lane.b32.xlu0 %v988, 32
        %v1963 = vpop.permute.xlu0 %1962
        %1964 = vrot.lane.b32.xlu0 %v989, 32
        %v1965 = vpop.permute.xlu0 %1964
        %1966 = vrot.lane.b32.xlu0 %v990, 32
        %v1967 = vpop.permute.xlu0 %1966
        %1968 = vrot.lane.b32.xlu0 %v991, 32
        %v1969 = vpop.permute.xlu0 %1968
        %1970 = vrot.lane.b32.xlu0 %v992, 32
        %v1971 = vpop.permute.xlu0 %1970
        %1972 = vrot.lane.b32.xlu0 %v993, 32
        %v1973 = vpop.permute.xlu0 %1972
        %1974 = vrot.lane.b32.xlu0 %v994, 32
        %v1975 = vpop.permute.xlu0 %1974
        %1976 = vrot.lane.b32.xlu0 %v995, 32
        %v1977 = vpop.permute.xlu0 %1976
        %1978 = vrot.lane.b32.xlu0 %v996, 32
        %v1979 = vpop.permute.xlu0 %1978
        %1980 = vrot.lane.b32.xlu0 %v997, 32
        %v1981 = vpop.permute.xlu0 %1980
        %1982 = vrot.lane.b32.xlu0 %v998, 32
        %v1983 = vpop.permute.xlu0 %1982
        %1984 = vrot.lane.b32.xlu0 %v999, 32
        %v1985 = vpop.permute.xlu0 %1984
        %1986 = vrot.lane.b32.xlu0 %v1000, 32
        %v1987 = vpop.permute.xlu0 %1986
        %1988 = vrot.lane.b32.xlu0 %v1001, 32
        %v1989 = vpop.permute.xlu0 %1988
        %1990 = vrot.lane.b32.xlu0 %v1002, 32
        %v1991 = vpop.permute.xlu0 %1990
        %1992 = vrot.lane.b32.xlu0 %v1003, 32
        %v1993 = vpop.permute.xlu0 %1992
        %1994 = vrot.lane.b32.xlu0 %v1004, 32
        %v1995 = vpop.permute.xlu0 %1994
        %1996 = vrot.lane.b32.xlu0 %v1005, 32
        %v1997 = vpop.permute.xlu0 %1996
        %v2030 = vsel %vm594, %v717, %v1039
        %v2031 = vsel %vm594, %v718, %v1041
        %v2032 = vsel %vm594, %v719, %v1043
        %v2033 = vsel %vm594, %v720, %v1045
        %v2034 = vsel %vm594, %v721, %v1047
        %v2035 = vsel %vm594, %v722, %v1049
        %v2036 = vsel %vm594, %v723, %v1051
        %v2037 = vsel %vm594, %v724, %v1053
        %v2038 = vsel %vm594, %v725, %v1055
        %v2039 = vsel %vm594, %v726, %v1057
        %v2040 = vsel %vm594, %v727, %v1059
        %v2041 = vsel %vm594, %v728, %v1061
        %v2042 = vsel %vm594, %v729, %v1063
        %v2043 = vsel %vm594, %v730, %v1065
        %v2044 = vsel %vm594, %v731, %v1067
        %v2045 = vsel %vm594, %v732, %v1069
        %v2046 = vsel %vm594, %v733, %v1071
        %v2047 = vsel %vm594, %v734, %v1073
        %v2048 = vsel %vm594, %v735, %v1075
        %v2049 = vsel %vm594, %v736, %v1077
        %v2050 = vsel %vm594, %v737, %v1079
        %v2051 = vsel %vm594, %v738, %v1081
        %v2052 = vsel %vm594, %v739, %v1083
        %v2053 = vsel %vm594, %v740, %v1085
        %v2054 = vsel %vm594, %v741, %v1087
        %v2055 = vsel %vm594, %v742, %v1089
        %v2056 = vsel %vm594, %v743, %v1091
        %v2057 = vsel %vm594, %v744, %v1093
        %v2058 = vsel %vm594, %v745, %v1095
        %v2059 = vsel %vm594, %v746, %v1097
        %v2060 = vsel %vm594, %v747, %v1099
        %v2061 = vsel %vm594, %v748, %v1101
        %vm2062 = vcmask 64512
        %v2063 = vsel %vm2062, %v2030, %v1167
        %v2064 = vsel %vm2062, %v2031, %v1169
        %v2065 = vsel %vm2062, %v2032, %v1171
        %v2066 = vsel %vm2062, %v2033, %v1173
        %v2067 = vsel %vm2062, %v2034, %v1175
        %v2068 = vsel %vm2062, %v2035, %v1177
        %v2069 = vsel %vm2062, %v2036, %v1179
        %v2070 = vsel %vm2062, %v2037, %v1181
        %v2071 = vsel %vm2062, %v2038, %v1183
        %v2072 = vsel %vm2062, %v2039, %v1185
        %v2073 = vsel %vm2062, %v2040, %v1187
        %v2074 = vsel %vm2062, %v2041, %v1189
        %v2075 = vsel %vm2062, %v2042, %v1191
        %v2076 = vsel %vm2062, %v2043, %v1193
        %v2077 = vsel %vm2062, %v2044, %v1195
        %v2078 = vsel %vm2062, %v2045, %v1197
        %v2079 = vsel %vm2062, %v2046, %v1199
        %v2080 = vsel %vm2062, %v2047, %v1201
        %v2081 = vsel %vm2062, %v2048, %v1203
        %v2082 = vsel %vm2062, %v2049, %v1205
        %v2083 = vsel %vm2062, %v2050, %v1207
        %v2084 = vsel %vm2062, %v2051, %v1209
        %v2085 = vsel %vm2062, %v2052, %v1211
        %v2086 = vsel %vm2062, %v2053, %v1213
        %v2087 = vsel %vm2062, %v2054, %v1215
        %v2088 = vsel %vm2062, %v2055, %v1217
        %v2089 = vsel %vm2062, %v2056, %v1219
        %v2090 = vsel %vm2062, %v2057, %v1221
        %v2091 = vsel %vm2062, %v2058, %v1223
        %v2092 = vsel %vm2062, %v2059, %v1225
        %v2093 = vsel %vm2062, %v2060, %v1227
        %v2094 = vsel %vm2062, %v2061, %v1229
        %vm2095 = vcmask 97280
        %v2096 = vsel %vm2095, %v2063, %v1295
        %v2097 = vsel %vm2095, %v2064, %v1297
        %v2098 = vsel %vm2095, %v2065, %v1299
        %v2099 = vsel %vm2095, %v2066, %v1301
        %v2100 = vsel %vm2095, %v2067, %v1303
        %v2101 = vsel %vm2095, %v2068, %v1305
        %v2102 = vsel %vm2095, %v2069, %v1307
        %v2103 = vsel %vm2095, %v2070, %v1309
        %v2104 = vsel %vm2095, %v2071, %v1311
        %v2105 = vsel %vm2095, %v2072, %v1313
        %v2106 = vsel %vm2095, %v2073, %v1315
        %v2107 = vsel %vm2095, %v2074, %v1317
        %v2108 = vsel %vm2095, %v2075, %v1319
        %v2109 = vsel %vm2095, %v2076, %v1321
        %v2110 = vsel %vm2095, %v2077, %v1323
        %v2111 = vsel %vm2095, %v2078, %v1325
        %v2112 = vsel %vm2095, %v2079, %v1327
        %v2113 = vsel %vm2095, %v2080, %v1329
        %v2114 = vsel %vm2095, %v2081, %v1331
        %v2115 = vsel %vm2095, %v2082, %v1333
        %v2116 = vsel %vm2095, %v2083, %v1335
        %v2117 = vsel %vm2095, %v2084, %v1337
        %v2118 = vsel %vm2095, %v2085, %v1339
        %v2119 = vsel %vm2095, %v2086, %v1341
        %v2120 = vsel %vm2095, %v2087, %v1343
        %v2121 = vsel %vm2095, %v2088, %v1345
        %v2122 = vsel %vm2095, %v2089, %v1347
        %v2123 = vsel %vm2095, %v2090, %v1349
        %v2124 = vsel %vm2095, %v2091, %v1351
        %v2125 = vsel %vm2095, %v2092, %v1353
        %v2126 = vsel %vm2095, %v2093, %v1355
        %v2127 = vsel %vm2095, %v2094, %v1357
        %vm2128 = vcmask 130048
        %v2129 = vsel %vm2128, %v2096, %v1423
        %v2130 = vsel %vm2128, %v2097, %v1425
        %v2131 = vsel %vm2128, %v2098, %v1427
        %v2132 = vsel %vm2128, %v2099, %v1429
        %v2133 = vsel %vm2128, %v2100, %v1431
        %v2134 = vsel %vm2128, %v2101, %v1433
        %v2135 = vsel %vm2128, %v2102, %v1435
        %v2136 = vsel %vm2128, %v2103, %v1437
        %v2137 = vsel %vm2128, %v2104, %v1439
        %v2138 = vsel %vm2128, %v2105, %v1441
        %v2139 = vsel %vm2128, %v2106, %v1443
        %v2140 = vsel %vm2128, %v2107, %v1445
        %v2141 = vsel %vm2128, %v2108, %v1447
        %v2142 = vsel %vm2128, %v2109, %v1449
        %v2143 = vsel %vm2128, %v2110, %v1451
        %v2144 = vsel %vm2128, %v2111, %v1453
        %v2145 = vsel %vm2128, %v2112, %v1455
        %v2146 = vsel %vm2128, %v2113, %v1457
        %v2147 = vsel %vm2128, %v2114, %v1459
        %v2148 = vsel %vm2128, %v2115, %v1461
        %v2149 = vsel %vm2128, %v2116, %v1463
        %v2150 = vsel %vm2128, %v2117, %v1465
        %v2151 = vsel %vm2128, %v2118, %v1467
        %v2152 = vsel %vm2128, %v2119, %v1469
        %v2153 = vsel %vm2128, %v2120, %v1471
        %v2154 = vsel %vm2128, %v2121, %v1473
        %v2155 = vsel %vm2128, %v2122, %v1475
        %v2156 = vsel %vm2128, %v2123, %v1477
        %v2157 = vsel %vm2128, %v2124, %v1479
        %v2158 = vsel %vm2128, %v2125, %v1481
        %v2159 = vsel %vm2128, %v2126, %v1483
        %v2160 = vsel %vm2128, %v2127, %v1485
        %vm2161 = vcmask 162816
        %v2162 = vsel %vm2161, %v2129, %v1551
        %v2163 = vsel %vm2161, %v2130, %v1553
        %v2164 = vsel %vm2161, %v2131, %v1555
        %v2165 = vsel %vm2161, %v2132, %v1557
        %v2166 = vsel %vm2161, %v2133, %v1559
        %v2167 = vsel %vm2161, %v2134, %v1561
        %v2168 = vsel %vm2161, %v2135, %v1563
        %v2169 = vsel %vm2161, %v2136, %v1565
        %v2170 = vsel %vm2161, %v2137, %v1567
        %v2171 = vsel %vm2161, %v2138, %v1569
        %v2172 = vsel %vm2161, %v2139, %v1571
        %v2173 = vsel %vm2161, %v2140, %v1573
        %v2174 = vsel %vm2161, %v2141, %v1575
        %v2175 = vsel %vm2161, %v2142, %v1577
        %v2176 = vsel %vm2161, %v2143, %v1579
        %v2177 = vsel %vm2161, %v2144, %v1581
        %v2178 = vsel %vm2161, %v2145, %v1583
        %v2179 = vsel %vm2161, %v2146, %v1585
        %v2180 = vsel %vm2161, %v2147, %v1587
        %v2181 = vsel %vm2161, %v2148, %v1589
        %v2182 = vsel %vm2161, %v2149, %v1591
        %v2183 = vsel %vm2161, %v2150, %v1593
        %v2184 = vsel %vm2161, %v2151, %v1595
        %v2185 = vsel %vm2161, %v2152, %v1597
        %v2186 = vsel %vm2161, %v2153, %v1599
        %v2187 = vsel %vm2161, %v2154, %v1601
        %v2188 = vsel %vm2161, %v2155, %v1603
        %v2189 = vsel %vm2161, %v2156, %v1605
        %v2190 = vsel %vm2161, %v2157, %v1607
        %v2191 = vsel %vm2161, %v2158, %v1609
        %v2192 = vsel %vm2161, %v2159, %v1611
        %v2193 = vsel %vm2161, %v2160, %v1613
        %vm2194 = vcmask 195584
        %v2195 = vsel %vm2194, %v2162, %v1679
        %v2196 = vsel %vm2194, %v2163, %v1681
        %v2197 = vsel %vm2194, %v2164, %v1683
        %v2198 = vsel %vm2194, %v2165, %v1685
        %v2199 = vsel %vm2194, %v2166, %v1687
        %v2200 = vsel %vm2194, %v2167, %v1689
        %v2201 = vsel %vm2194, %v2168, %v1691
        %v2202 = vsel %vm2194, %v2169, %v1693
        %v2203 = vsel %vm2194, %v2170, %v1695
        %v2204 = vsel %vm2194, %v2171, %v1697
        %v2205 = vsel %vm2194, %v2172, %v1699
        %v2206 = vsel %vm2194, %v2173, %v1701
        %v2207 = vsel %vm2194, %v2174, %v1703
        %v2208 = vsel %vm2194, %v2175, %v1705
        %v2209 = vsel %vm2194, %v2176, %v1707
        %v2210 = vsel %vm2194, %v2177, %v1709
        %v2211 = vsel %vm2194, %v2178, %v1711
        %v2212 = vsel %vm2194, %v2179, %v1713
        %v2213 = vsel %vm2194, %v2180, %v1715
        %v2214 = vsel %vm2194, %v2181, %v1717
        %v2215 = vsel %vm2194, %v2182, %v1719
        %v2216 = vsel %vm2194, %v2183, %v1721
        %v2217 = vsel %vm2194, %v2184, %v1723
        %v2218 = vsel %vm2194, %v2185, %v1725
        %v2219 = vsel %vm2194, %v2186, %v1727
        %v2220 = vsel %vm2194, %v2187, %v1729
        %v2221 = vsel %vm2194, %v2188, %v1731
        %v2222 = vsel %vm2194, %v2189, %v1733
        %v2223 = vsel %vm2194, %v2190, %v1735
        %v2224 = vsel %vm2194, %v2191, %v1737
        %v2225 = vsel %vm2194, %v2192, %v1739
        %v2226 = vsel %vm2194, %v2193, %v1741
        %vm2227 = vcmask 228352
        %v2228 = vsel %vm2227, %v2195, %v1807
        %v2229 = vsel %vm2227, %v2196, %v1809
        %v2230 = vsel %vm2227, %v2197, %v1811
        %v2231 = vsel %vm2227, %v2198, %v1813
        %v2232 = vsel %vm2227, %v2199, %v1815
        %v2233 = vsel %vm2227, %v2200, %v1817
        %v2234 = vsel %vm2227, %v2201, %v1819
        %v2235 = vsel %vm2227, %v2202, %v1821
        %v2236 = vsel %vm2227, %v2203, %v1823
        %v2237 = vsel %vm2227, %v2204, %v1825
        %v2238 = vsel %vm2227, %v2205, %v1827
        %v2239 = vsel %vm2227, %v2206, %v1829
        %v2240 = vsel %vm2227, %v2207, %v1831
        %v2241 = vsel %vm2227, %v2208, %v1833
        %v2242 = vsel %vm2227, %v2209, %v1835
        %v2243 = vsel %vm2227, %v2210, %v1837
        %v2244 = vsel %vm2227, %v2211, %v1839
        %v2245 = vsel %vm2227, %v2212, %v1841
        %v2246 = vsel %vm2227, %v2213, %v1843
        %v2247 = vsel %vm2227, %v2214, %v1845
        %v2248 = vsel %vm2227, %v2215, %v1847
        %v2249 = vsel %vm2227, %v2216, %v1849
        %v2250 = vsel %vm2227, %v2217, %v1851
        %v2251 = vsel %vm2227, %v2218, %v1853
        %v2252 = vsel %vm2227, %v2219, %v1855
        %v2253 = vsel %vm2227, %v2220, %v1857
        %v2254 = vsel %vm2227, %v2221, %v1859
        %v2255 = vsel %vm2227, %v2222, %v1861
        %v2256 = vsel %vm2227, %v2223, %v1863
        %v2257 = vsel %vm2227, %v2224, %v1865
        %v2258 = vsel %vm2227, %v2225, %v1867
        %v2259 = vsel %vm2227, %v2226, %v1869
        %vm2260 = vcmask 261120
        %v2261 = vsel %vm2260, %v2228, %v1935
        %v2262 = vsel %vm2260, %v2229, %v1937
        %v2263 = vsel %vm2260, %v2230, %v1939
        %v2264 = vsel %vm2260, %v2231, %v1941
        %v2265 = vsel %vm2260, %v2232, %v1943
        %v2266 = vsel %vm2260, %v2233, %v1945
        %v2267 = vsel %vm2260, %v2234, %v1947
        %v2268 = vsel %vm2260, %v2235, %v1949
        %v2269 = vsel %vm2260, %v2236, %v1951
        %v2270 = vsel %vm2260, %v2237, %v1953
        %v2271 = vsel %vm2260, %v2238, %v1955
        %v2272 = vsel %vm2260, %v2239, %v1957
        %v2273 = vsel %vm2260, %v2240, %v1959
        %v2274 = vsel %vm2260, %v2241, %v1961
        %v2275 = vsel %vm2260, %v2242, %v1963
        %v2276 = vsel %vm2260, %v2243, %v1965
        %v2277 = vsel %vm2260, %v2244, %v1967
        %v2278 = vsel %vm2260, %v2245, %v1969
        %v2279 = vsel %vm2260, %v2246, %v1971
        %v2280 = vsel %vm2260, %v2247, %v1973
        %v2281 = vsel %vm2260, %v2248, %v1975
        %v2282 = vsel %vm2260, %v2249, %v1977
        %v2283 = vsel %vm2260, %v2250, %v1979
        %v2284 = vsel %vm2260, %v2251, %v1981
        %v2285 = vsel %vm2260, %v2252, %v1983
        %v2286 = vsel %vm2260, %v2253, %v1985
        %v2287 = vsel %vm2260, %v2254, %v1987
        %v2288 = vsel %vm2260, %v2255, %v1989
        %v2289 = vsel %vm2260, %v2256, %v1991
        %v2290 = vsel %vm2260, %v2257, %v1993
        %v2291 = vsel %vm2260, %v2258, %v1995
        %v2292 = vsel %vm2260, %v2259, %v1997
        %v2293 = vpack.c.bf16 %v2262, %v2261
        %v2294 = vpack.c.bf16 %v2264, %v2263
        %v2295 = vpack.c.bf16 %v2266, %v2265
        %v2296 = vpack.c.bf16 %v2268, %v2267
        %v2297 = vpack.c.bf16 %v2270, %v2269
        %v2298 = vpack.c.bf16 %v2272, %v2271
        %v2299 = vpack.c.bf16 %v2274, %v2273
        %v2300 = vpack.c.bf16 %v2276, %v2275
        %v2301 = vpack.c.bf16 %v2278, %v2277
        %v2302 = vpack.c.bf16 %v2280, %v2279
        %v2303 = vpack.c.bf16 %v2282, %v2281
        %v2304 = vpack.c.bf16 %v2284, %v2283
        %v2305 = vpack.c.bf16 %v2286, %v2285
        %v2306 = vpack.c.bf16 %v2288, %v2287
        %v2307 = vpack.c.bf16 %v2290, %v2289
        %v2308 = vpack.c.bf16 %v2292, %v2291
        %v2309 = vld [vmem:[%s4] sm:$0xf]
        %v2310 = vld [vmem:[%s4 + $0x4] sm:$0xf]
        %v2311 = vld [vmem:[%s4 + $0x8] sm:$0xf]
        %v2312 = vld [vmem:[%s4 + $0xc] sm:$0xf]
        %v2313 = vld [vmem:[%s4 + $0x10] sm:$0x3]
        %v2314 = vld [vmem:[%s5] sm:$0x1]
        %v2316 = vperm.slane %v2314, 0
        %v2323 = vunpack.c.l.b16 %v2309
        %v2324 = vunpack.c.l.b16 %v2310
        %v2325 = vunpack.c.l.b16 %v2311
        %v2326 = vunpack.c.l.b16 %v2312
        %v2327 = vunpack.c.l.b16 %v2313
        %v2328 = vpack.c.b16 %v2324, %v2323
        %v2329 = vpack.c.b16 %v2326, %v2325
        %v2330 = vpack.c.b16 %v2327, %v2327
        %vm2333 = vcmask 293888
        %v2335 = vsel %vm2333, %v2293, 0
        %v2338 = vsel %vm2333, %v2294, 0
        %v2341 = vsel %vm2333, %v2295, 0
        %v2344 = vsel %vm2333, %v2296, 0
        %v2347 = vsel %vm2333, %v2297, 0
        %v2350 = vsel %vm2333, %v2298, 0
        %v2353 = vsel %vm2333, %v2299, 0
        %v2356 = vsel %vm2333, %v2300, 0
        %v2359 = vsel %vm2333, %v2301, 0
        %v2362 = vsel %vm2333, %v2302, 0
        %v2365 = vsel %vm2333, %v2303, 0
        %v2368 = vsel %vm2333, %v2304, 0
        %v2371 = vsel %vm2333, %v2305, 0
        %v2374 = vsel %vm2333, %v2306, 0
        %v2377 = vsel %vm2333, %v2307, 0
        %v2380 = vsel %vm2333, %v2308, 0
        %vm2382 = vcmask 1041408
        %v2384 = vsel %vm2382, %v2330, 0
        %2386 = vmatpush.bf16.msra.mxu0 0
        %2387 = vmatpush.bf16.msra.mxu0 0
        %2388 = vmatpush.bf16.msra.mxu0 0
        %2389 = vmatpush.bf16.msra.mxu0 0
        %2390 = vmatpush.bf16.msra.mxu0 0
        %2391 = vmatpush.bf16.msra.mxu0 %v2384
        %2392 = vmatpush.bf16.msra.mxu0 %v2329
        %2393 = vmatpush.bf16.msra.mxu0 %v2328
        %2394 = vmatmul.bf16.gmra.mxu0 %v2335
        %v2395 = vpop.f32.mrf.mxu0
        %v2396 = vadd.f32 %v2316, %v2395
        %v2397 = vpop.f32.mrf.mxu0
        %v2398 = vadd.f32 %v2316, %v2397
        %2399 = vmatmul.bf16.gmra.mxu0 %v2338
        %v2400 = vpop.f32.mrf.mxu0
        %v2401 = vadd.f32 %v2316, %v2400
        %v2402 = vpop.f32.mrf.mxu0
        %v2403 = vadd.f32 %v2316, %v2402
        %2404 = vmatmul.bf16.gmra.mxu0 %v2341
        %v2405 = vpop.f32.mrf.mxu0
        %v2406 = vadd.f32 %v2316, %v2405
        %v2407 = vpop.f32.mrf.mxu0
        %v2408 = vadd.f32 %v2316, %v2407
        %2409 = vmatmul.bf16.gmra.mxu0 %v2344
        %v2410 = vpop.f32.mrf.mxu0
        %v2411 = vadd.f32 %v2316, %v2410
        %v2412 = vpop.f32.mrf.mxu0
        %v2413 = vadd.f32 %v2316, %v2412
        %2414 = vmatmul.bf16.gmra.mxu0 %v2347
        %v2415 = vpop.f32.mrf.mxu0
        %v2416 = vadd.f32 %v2316, %v2415
        %v2417 = vpop.f32.mrf.mxu0
        %v2418 = vadd.f32 %v2316, %v2417
        %2419 = vmatmul.bf16.gmra.mxu0 %v2350
        %v2420 = vpop.f32.mrf.mxu0
        %v2421 = vadd.f32 %v2316, %v2420
        %v2422 = vpop.f32.mrf.mxu0
        %v2423 = vadd.f32 %v2316, %v2422
        %2424 = vmatmul.bf16.gmra.mxu0 %v2353
        %v2425 = vpop.f32.mrf.mxu0
        %v2426 = vadd.f32 %v2316, %v2425
        %v2427 = vpop.f32.mrf.mxu0
        %v2428 = vadd.f32 %v2316, %v2427
        %2429 = vmatmul.bf16.gmra.mxu0 %v2356
        %v2430 = vpop.f32.mrf.mxu0
        %v2431 = vadd.f32 %v2316, %v2430
        %v2432 = vpop.f32.mrf.mxu0
        %v2433 = vadd.f32 %v2316, %v2432
        %2434 = vmatmul.bf16.gmra.mxu0 %v2359
        %v2435 = vpop.f32.mrf.mxu0
        %v2436 = vadd.f32 %v2316, %v2435
        %v2437 = vpop.f32.mrf.mxu0
        %v2438 = vadd.f32 %v2316, %v2437
        %2439 = vmatmul.bf16.gmra.mxu0 %v2362
        %v2440 = vpop.f32.mrf.mxu0
        %v2441 = vadd.f32 %v2316, %v2440
        %v2442 = vpop.f32.mrf.mxu0
        %v2443 = vadd.f32 %v2316, %v2442
        %2444 = vmatmul.bf16.gmra.mxu0 %v2365
        %v2445 = vpop.f32.mrf.mxu0
        %v2446 = vadd.f32 %v2316, %v2445
        %v2447 = vpop.f32.mrf.mxu0
        %v2448 = vadd.f32 %v2316, %v2447
        %2449 = vmatmul.bf16.gmra.mxu0 %v2368
        %v2450 = vpop.f32.mrf.mxu0
        %v2451 = vadd.f32 %v2316, %v2450
        %v2452 = vpop.f32.mrf.mxu0
        %v2453 = vadd.f32 %v2316, %v2452
        %2454 = vmatmul.bf16.gmra.mxu0 %v2371
        %v2455 = vpop.f32.mrf.mxu0
        %v2456 = vadd.f32 %v2316, %v2455
        %v2457 = vpop.f32.mrf.mxu0
        %v2458 = vadd.f32 %v2316, %v2457
        %2459 = vmatmul.bf16.gmra.mxu0 %v2374
        %v2460 = vpop.f32.mrf.mxu0
        %v2461 = vadd.f32 %v2316, %v2460
        %v2462 = vpop.f32.mrf.mxu0
        %v2463 = vadd.f32 %v2316, %v2462
        %2464 = vmatmul.bf16.gmra.mxu0 %v2377
        %v2465 = vpop.f32.mrf.mxu0
        %v2466 = vadd.f32 %v2316, %v2465
        %v2467 = vpop.f32.mrf.mxu0
        %v2468 = vadd.f32 %v2316, %v2467
        %2469 = vmatmul.bf16.gmra.mxu0 %v2380
        %v2470 = vpop.f32.mrf.mxu0
        %v2471 = vadd.f32 %v2316, %v2470
        %v2472 = vpop.f32.mrf.mxu0
        %v2473 = vadd.f32 %v2316, %v2472
        %2474 = vdwg.mxu0
        %v2475 = vmax.f32 %v2396, 0.0
        %v2476 = vmax.f32 %v2398, 0.0
        %v2477 = vmax.f32 %v2401, 0.0
        %v2478 = vmax.f32 %v2403, 0.0
        %v2479 = vmax.f32 %v2406, 0.0
        %v2480 = vmax.f32 %v2408, 0.0
        %v2481 = vmax.f32 %v2411, 0.0
        %v2482 = vmax.f32 %v2413, 0.0
        %v2483 = vmax.f32 %v2416, 0.0
        %v2484 = vmax.f32 %v2418, 0.0
        %v2485 = vmax.f32 %v2421, 0.0
        %v2486 = vmax.f32 %v2423, 0.0
        %v2487 = vmax.f32 %v2426, 0.0
        %v2488 = vmax.f32 %v2428, 0.0
        %v2489 = vmax.f32 %v2431, 0.0
        %v2490 = vmax.f32 %v2433, 0.0
        %v2491 = vmax.f32 %v2436, 0.0
        %v2492 = vmax.f32 %v2438, 0.0
        %v2493 = vmax.f32 %v2441, 0.0
        %v2494 = vmax.f32 %v2443, 0.0
        %v2495 = vmax.f32 %v2446, 0.0
        %v2496 = vmax.f32 %v2448, 0.0
        %v2497 = vmax.f32 %v2451, 0.0
        %v2498 = vmax.f32 %v2453, 0.0
        %v2499 = vmax.f32 %v2456, 0.0
        %v2500 = vmax.f32 %v2458, 0.0
        %v2501 = vmax.f32 %v2461, 0.0
        %v2502 = vmax.f32 %v2463, 0.0
        %v2503 = vmax.f32 %v2466, 0.0
        %v2504 = vmax.f32 %v2468, 0.0
        %v2505 = vmax.f32 %v2471, 0.0
        %v2506 = vmax.f32 %v2473, 0.0
        %2507 = vst.msk [vmem:[#allocation3] sm:$0xff] %vm2260, 0.0
        %2508 = vst.msk [vmem:[#allocation3 + $0x8] sm:$0xff] %vm2260, 0.0
        %vm2509 = vcmask 254976
        %2510 = vst.msk [vmem:[#allocation3 + $0x10] sm:$0x3] %vm2509, 0.0
        %2511 = vst.msk [vmem:[#allocation3 + $0x18] sm:$0xff] %vm2260, 0.0
        %2512 = vst.msk [vmem:[#allocation3 + $0x20] sm:$0xff] %vm2260, 0.0
        %2513 = vst.msk [vmem:[#allocation3 + $0x28] sm:$0x3] %vm2509, 0.0
        %2514 = vst.msk [vmem:[#allocation3 + $0x30] sm:$0xff] %vm2260, 0.0
        %2515 = vst.msk [vmem:[#allocation3 + $0x38] sm:$0xff] %vm2260, 0.0
        %2516 = vst.msk [vmem:[#allocation3 + $0x40] sm:$0x3] %vm2509, 0.0
        %2517 = vst.msk [vmem:[#allocation3 + $0x48] sm:$0xff] %vm2260, 0.0
        %2518 = vst.msk [vmem:[#allocation3 + $0x50] sm:$0xff] %vm2260, 0.0
        %2519 = vst.msk [vmem:[#allocation3 + $0x58] sm:$0x3] %vm2509, 0.0
        %2520 = vst.msk [vmem:[#allocation3 + $0x60] sm:$0xff] %vm2260, 0.0
        %2521 = vst.msk [vmem:[#allocation3 + $0x68] sm:$0xff] %vm2260, 0.0
        %2522 = vst.msk [vmem:[#allocation3 + $0x70] sm:$0x3] %vm2509, 0.0
        %2523 = vst.msk [vmem:[#allocation3 + $0x78] sm:$0xff] %vm2260, 0.0
        %2524 = vst.msk [vmem:[#allocation3 + $0x80] sm:$0xff] %vm2260, 0.0
        %2525 = vst.msk [vmem:[#allocation3 + $0x88] sm:$0x3] %vm2509, 0.0
        %2526 = vst.msk [vmem:[#allocation3 + $0x90] sm:$0xff] %vm2260, 0.0
        %2527 = vst.msk [vmem:[#allocation3 + $0x98] sm:$0xff] %vm2260, 0.0
        %2528 = vst.msk [vmem:[#allocation3 + $0xa0] sm:$0x3] %vm2509, 0.0
        %2529 = vst.msk [vmem:[#allocation3 + $0xa8] sm:$0xff] %vm2260, 0.0
        %2530 = vst.msk [vmem:[#allocation3 + $0xb0] sm:$0xff] %vm2260, 0.0
        %2531 = vst.msk [vmem:[#allocation3 + $0xb8] sm:$0x3] %vm2509, 0.0
        %2532 = vst.msk [vmem:[#allocation3 + $0xc0] sm:$0xff] %vm2260, 0.0
        %2533 = vst.msk [vmem:[#allocation3 + $0xc8] sm:$0xff] %vm2260, 0.0
        %2534 = vst.msk [vmem:[#allocation3 + $0xd0] sm:$0x3] %vm2509, 0.0
        %2535 = vst.msk [vmem:[#allocation3 + $0xd8] sm:$0xff] %vm2260, 0.0
        %2536 = vst.msk [vmem:[#allocation3 + $0xe0] sm:$0xff] %vm2260, 0.0
        %2537 = vst.msk [vmem:[#allocation3 + $0xe8] sm:$0x3] %vm2509, 0.0
        %2538 = vst.msk [vmem:[#allocation3 + $0xf0] sm:$0xff] %vm2260, 0.0
        %2539 = vst.msk [vmem:[#allocation3 + $0xf8] sm:$0xff] %vm2260, 0.0
        %2540 = vst.msk [vmem:[#allocation3 + $0x100] sm:$0x3] %vm2509, 0.0
        %2541 = vst.msk [vmem:[#allocation3 + $0x108] sm:$0xff] %vm2260, 0.0
        %2542 = vst.msk [vmem:[#allocation3 + $0x110] sm:$0xff] %vm2260, 0.0
        %2543 = vst.msk [vmem:[#allocation3 + $0x118] sm:$0x3] %vm2509, 0.0
        %2544 = vst.msk [vmem:[#allocation3 + $0x120] sm:$0xff] %vm2260, 0.0
        %2545 = vst.msk [vmem:[#allocation3 + $0x128] sm:$0xff] %vm2260, 0.0
        %2546 = vst.msk [vmem:[#allocation3 + $0x130] sm:$0x3] %vm2509, 0.0
        %2547 = vst.msk [vmem:[#allocation3 + $0x138] sm:$0xff] %vm2260, 0.0
        %2548 = vst.msk [vmem:[#allocation3 + $0x140] sm:$0xff] %vm2260, 0.0
        %2549 = vst.msk [vmem:[#allocation3 + $0x148] sm:$0x3] %vm2509, 0.0
        %2550 = vst.msk [vmem:[#allocation3 + $0x150] sm:$0xff] %vm2260, 0.0
        %2551 = vst.msk [vmem:[#allocation3 + $0x158] sm:$0xff] %vm2260, 0.0
        %2552 = vst.msk [vmem:[#allocation3 + $0x160] sm:$0x3] %vm2509, 0.0
        %2553 = vst.msk [vmem:[#allocation3 + $0x168] sm:$0xff] %vm2260, 0.0
        %2554 = vst.msk [vmem:[#allocation3 + $0x170] sm:$0xff] %vm2260, 0.0
        %2555 = vst.msk [vmem:[#allocation3 + $0x178] sm:$0x3] %vm2509, 0.0
        %2556 = vst.msk [vmem:[#allocation3 + $0x180] sm:$0xff] %vm2260, 0.0
        %2557 = vst.msk [vmem:[#allocation3 + $0x188] sm:$0xff] %vm2260, 0.0
        %2558 = vst.msk [vmem:[#allocation3 + $0x190] sm:$0x3] %vm2509, 0.0
        %2559 = vst.msk [vmem:[#allocation3 + $0x198] sm:$0xff] %vm2260, 0.0
        %2560 = vst.msk [vmem:[#allocation3 + $0x1a0] sm:$0xff] %vm2260, 0.0
        %2561 = vst.msk [vmem:[#allocation3 + $0x1a8] sm:$0x3] %vm2509, 0.0
        %s2562 = scalar_lea.vmem [#allocation3], 24
        %2563 = vst.msk [vmem:[%s2562 + $0x1] sm:$0xff] %vm2260, %v2475
        %2564 = vst.msk [vmem:[%s2562 + $0x9] sm:$0xff] %vm2260, %v2476
        %2565 = vst.msk [vmem:[%s2562 + $0x19] sm:$0xff] %vm2260, %v2477
        %2566 = vst.msk [vmem:[%s2562 + $0x21] sm:$0xff] %vm2260, %v2478
        %2567 = vst.msk [vmem:[%s2562 + $0x31] sm:$0xff] %vm2260, %v2479
        %2568 = vst.msk [vmem:[%s2562 + $0x39] sm:$0xff] %vm2260, %v2480
        %2569 = vst.msk [vmem:[%s2562 + $0x49] sm:$0xff] %vm2260, %v2481
        %2570 = vst.msk [vmem:[%s2562 + $0x51] sm:$0xff] %vm2260, %v2482
        %2571 = vst.msk [vmem:[%s2562 + $0x61] sm:$0xff] %vm2260, %v2483
        %2572 = vst.msk [vmem:[%s2562 + $0x69] sm:$0xff] %vm2260, %v2484
        %2573 = vst.msk [vmem:[%s2562 + $0x79] sm:$0xff] %vm2260, %v2485
        %2574 = vst.msk [vmem:[%s2562 + $0x81] sm:$0xff] %vm2260, %v2486
        %2575 = vst.msk [vmem:[%s2562 + $0x91] sm:$0xff] %vm2260, %v2487
        %2576 = vst.msk [vmem:[%s2562 + $0x99] sm:$0xff] %vm2260, %v2488
        %2577 = vst.msk [vmem:[%s2562 + $0xa9] sm:$0xff] %vm2260, %v2489
        %2578 = vst.msk [vmem:[%s2562 + $0xb1] sm:$0xff] %vm2260, %v2490
        %2579 = vst.msk [vmem:[%s2562 + $0xc1] sm:$0xff] %vm2260, %v2491
        %2580 = vst.msk [vmem:[%s2562 + $0xc9] sm:$0xff] %vm2260, %v2492
        %2581 = vst.msk [vmem:[%s2562 + $0xd9] sm:$0xff] %vm2260, %v2493
        %2582 = vst.msk [vmem:[%s2562 + $0xe1] sm:$0xff] %vm2260, %v2494
        %2583 = vst.msk [vmem:[%s2562 + $0xf1] sm:$0xff] %vm2260, %v2495
        %2584 = vst.msk [vmem:[%s2562 + $0xf9] sm:$0xff] %vm2260, %v2496
        %2585 = vst.msk [vmem:[%s2562 + $0x109] sm:$0xff] %vm2260, %v2497
        %2586 = vst.msk [vmem:[%s2562 + $0x111] sm:$0xff] %vm2260, %v2498
        %2587 = vst.msk [vmem:[%s2562 + $0x121] sm:$0xff] %vm2260, %v2499
        %2588 = vst.msk [vmem:[%s2562 + $0x129] sm:$0xff] %vm2260, %v2500
        %2589 = vst.msk [vmem:[%s2562 + $0x139] sm:$0xff] %vm2260, %v2501
        %2590 = vst.msk [vmem:[%s2562 + $0x141] sm:$0xff] %vm2260, %v2502
        %2591 = vst.msk [vmem:[%s2562 + $0x151] sm:$0xff] %vm2260, %v2503
        %2592 = vst.msk [vmem:[%s2562 + $0x159] sm:$0xff] %vm2260, %v2504
        %2593 = vst.msk [vmem:[%s2562 + $0x169] sm:$0xff] %vm2260, %v2505
        %2594 = vst.msk [vmem:[%s2562 + $0x171] sm:$0xff] %vm2260, %v2506
        %v2595 = vld [vmem:[#allocation3] sm:$0xff]
        %v2596 = vld [vmem:[#allocation3 + $0x8] sm:$0xff]
        %v2597 = vld [vmem:[#allocation3 + $0x18] sm:$0xff]
        %v2598 = vld [vmem:[#allocation3 + $0x20] sm:$0xff]
        %v2599 = vld [vmem:[#allocation3 + $0x30] sm:$0xff]
        %v2600 = vld [vmem:[#allocation3 + $0x38] sm:$0xff]
        %v2601 = vld [vmem:[#allocation3 + $0x48] sm:$0xff]
        %v2602 = vld [vmem:[#allocation3 + $0x50] sm:$0xff]
        %v2603 = vld [vmem:[#allocation3 + $0x60] sm:$0xff]
        %v2604 = vld [vmem:[#allocation3 + $0x68] sm:$0xff]
        %v2605 = vld [vmem:[#allocation3 + $0x78] sm:$0xff]
        %v2606 = vld [vmem:[#allocation3 + $0x80] sm:$0xff]
        %v2607 = vld [vmem:[#allocation3 + $0x90] sm:$0xff]
        %v2608 = vld [vmem:[#allocation3 + $0x98] sm:$0xff]
        %v2609 = vld [vmem:[#allocation3 + $0xa8] sm:$0xff]
        %v2610 = vld [vmem:[#allocation3 + $0xb0] sm:$0xff]
        %v2611 = vld [vmem:[#allocation3 + $0xc0] sm:$0xff]
        %v2612 = vld [vmem:[#allocation3 + $0xc8] sm:$0xff]
        %v2613 = vld [vmem:[#allocation3 + $0xd8] sm:$0xff]
        %v2614 = vld [vmem:[#allocation3 + $0xe0] sm:$0xff]
        %v2615 = vld [vmem:[#allocation3 + $0xf0] sm:$0xff]
        %v2616 = vld [vmem:[#allocation3 + $0xf8] sm:$0xff]
        %v2617 = vld [vmem:[#allocation3 + $0x108] sm:$0xff]
        %v2618 = vld [vmem:[#allocation3 + $0x110] sm:$0xff]
        %v2619 = vld [vmem:[#allocation3 + $0x120] sm:$0xff]
        %v2620 = vld [vmem:[#allocation3 + $0x128] sm:$0xff]
        %v2621 = vld [vmem:[#allocation3 + $0x138] sm:$0xff]
        %v2622 = vld [vmem:[#allocation3 + $0x140] sm:$0xff]
        %v2623 = vld [vmem:[#allocation3 + $0x150] sm:$0xff]
        %v2624 = vld [vmem:[#allocation3 + $0x158] sm:$0xff]
        %v2625 = vld [vmem:[#allocation3 + $0x168] sm:$0xff]
        %v2626 = vld [vmem:[#allocation3 + $0x170] sm:$0xff]
        %v2627 = vld [vmem:[#allocation3 + $0x1] sm:$0xff]
        %v2628 = vld [vmem:[#allocation3 + $0x9] sm:$0xff]
        %v2629 = vld [vmem:[#allocation3 + $0x19] sm:$0xff]
        %v2630 = vld [vmem:[#allocation3 + $0x21] sm:$0xff]
        %v2631 = vld [vmem:[#allocation3 + $0x31] sm:$0xff]
        %v2632 = vld [vmem:[#allocation3 + $0x39] sm:$0xff]
        %v2633 = vld [vmem:[#allocation3 + $0x49] sm:$0xff]
        %v2634 = vld [vmem:[#allocation3 + $0x51] sm:$0xff]
        %v2635 = vld [vmem:[#allocation3 + $0x61] sm:$0xff]
        %v2636 = vld [vmem:[#allocation3 + $0x69] sm:$0xff]
        %v2637 = vld [vmem:[#allocation3 + $0x79] sm:$0xff]
        %v2638 = vld [vmem:[#allocation3 + $0x81] sm:$0xff]
        %v2639 = vld [vmem:[#allocation3 + $0x91] sm:$0xff]
        %v2640 = vld [vmem:[#allocation3 + $0x99] sm:$0xff]
        %v2641 = vld [vmem:[#allocation3 + $0xa9] sm:$0xff]
        %v2642 = vld [vmem:[#allocation3 + $0xb1] sm:$0xff]
        %v2643 = vld [vmem:[#allocation3 + $0xc1] sm:$0xff]
        %v2644 = vld [vmem:[#allocation3 + $0xc9] sm:$0xff]
        %v2645 = vld [vmem:[#allocation3 + $0xd9] sm:$0xff]
        %v2646 = vld [vmem:[#allocation3 + $0xe1] sm:$0xff]
        %v2647 = vld [vmem:[#allocation3 + $0xf1] sm:$0xff]
        %v2648 = vld [vmem:[#allocation3 + $0xf9] sm:$0xff]
        %v2649 = vld [vmem:[#allocation3 + $0x109] sm:$0xff]
        %v2650 = vld [vmem:[#allocation3 + $0x111] sm:$0xff]
        %v2651 = vld [vmem:[#allocation3 + $0x121] sm:$0xff]
        %v2652 = vld [vmem:[#allocation3 + $0x129] sm:$0xff]
        %v2653 = vld [vmem:[#allocation3 + $0x139] sm:$0xff]
        %v2654 = vld [vmem:[#allocation3 + $0x141] sm:$0xff]
        %v2655 = vld [vmem:[#allocation3 + $0x151] sm:$0xff]
        %v2656 = vld [vmem:[#allocation3 + $0x159] sm:$0xff]
        %v2657 = vld [vmem:[#allocation3 + $0x169] sm:$0xff]
        %v2658 = vld [vmem:[#allocation3 + $0x171] sm:$0xff]
        %v2659 = vld [vmem:[#allocation3 + $0x2] sm:$0xff]
        %v2660 = vld [vmem:[#allocation3 + $0xa] sm:$0xff]
        %v2661 = vld [vmem:[#allocation3 + $0x1a] sm:$0xff]
        %v2662 = vld [vmem:[#allocation3 + $0x22] sm:$0xff]
        %v2663 = vld [vmem:[#allocation3 + $0x32] sm:$0xff]
        %v2664 = vld [vmem:[#allocation3 + $0x3a] sm:$0xff]
        %v2665 = vld [vmem:[#allocation3 + $0x4a] sm:$0xff]
        %v2666 = vld [vmem:[#allocation3 + $0x52] sm:$0xff]
        %v2667 = vld [vmem:[#allocation3 + $0x62] sm:$0xff]
        %v2668 = vld [vmem:[#allocation3 + $0x6a] sm:$0xff]
        %v2669 = vld [vmem:[#allocation3 + $0x7a] sm:$0xff]
        %v2670 = vld [vmem:[#allocation3 + $0x82] sm:$0xff]
        %v2671 = vld [vmem:[#allocation3 + $0x92] sm:$0xff]
        %v2672 = vld [vmem:[#allocation3 + $0x9a] sm:$0xff]
        %v2673 = vld [vmem:[#allocation3 + $0xaa] sm:$0xff]
        %v2674 = vld [vmem:[#allocation3 + $0xb2] sm:$0xff]
        %v2675 = vld [vmem:[#allocation3 + $0xc2] sm:$0xff]
        %v2676 = vld [vmem:[#allocation3 + $0xca] sm:$0xff]
        %v2677 = vld [vmem:[#allocation3 + $0xda] sm:$0xff]
        %v2678 = vld [vmem:[#allocation3 + $0xe2] sm:$0xff]
        %v2679 = vld [vmem:[#allocation3 + $0xf2] sm:$0xff]
        %v2680 = vld [vmem:[#allocation3 + $0xfa] sm:$0xff]
        %v2681 = vld [vmem:[#allocation3 + $0x10a] sm:$0xff]
        %v2682 = vld [vmem:[#allocation3 + $0x112] sm:$0xff]
        %v2683 = vld [vmem:[#allocation3 + $0x122] sm:$0xff]
        %v2684 = vld [vmem:[#allocation3 + $0x12a] sm:$0xff]
        %v2685 = vld [vmem:[#allocation3 + $0x13a] sm:$0xff]
        %v2686 = vld [vmem:[#allocation3 + $0x142] sm:$0xff]
        %v2687 = vld [vmem:[#allocation3 + $0x152] sm:$0xff]
        %v2688 = vld [vmem:[#allocation3 + $0x15a] sm:$0xff]
        %v2689 = vld [vmem:[#allocation3 + $0x16a] sm:$0xff]
        %v2690 = vld [vmem:[#allocation3 + $0x172] sm:$0xff]
        %v2691 = vld [vmem:[%s2562] sm:$0xff]
        %v2692 = vld [vmem:[%s2562 + $0x8] sm:$0xff]
        %v2693 = vld [vmem:[%s2562 + $0x18] sm:$0xff]
        %v2694 = vld [vmem:[%s2562 + $0x20] sm:$0xff]
        %v2695 = vld [vmem:[%s2562 + $0x30] sm:$0xff]
        %v2696 = vld [vmem:[%s2562 + $0x38] sm:$0xff]
        %v2697 = vld [vmem:[%s2562 + $0x48] sm:$0xff]
        %v2698 = vld [vmem:[%s2562 + $0x50] sm:$0xff]
        %v2699 = vld [vmem:[%s2562 + $0x60] sm:$0xff]
        %v2700 = vld [vmem:[%s2562 + $0x68] sm:$0xff]
        %v2701 = vld [vmem:[%s2562 + $0x78] sm:$0xff]
        %v2702 = vld [vmem:[%s2562 + $0x80] sm:$0xff]
        %v2703 = vld [vmem:[%s2562 + $0x90] sm:$0xff]
        %v2704 = vld [vmem:[%s2562 + $0x98] sm:$0xff]
        %v2705 = vld [vmem:[%s2562 + $0xa8] sm:$0xff]
        %v2706 = vld [vmem:[%s2562 + $0xb0] sm:$0xff]
        %v2707 = vld [vmem:[%s2562 + $0xc0] sm:$0xff]
        %v2708 = vld [vmem:[%s2562 + $0xc8] sm:$0xff]
        %v2709 = vld [vmem:[%s2562 + $0xd8] sm:$0xff]
        %v2710 = vld [vmem:[%s2562 + $0xe0] sm:$0xff]
        %v2711 = vld [vmem:[%s2562 + $0xf0] sm:$0xff]
        %v2712 = vld [vmem:[%s2562 + $0xf8] sm:$0xff]
        %v2713 = vld [vmem:[%s2562 + $0x108] sm:$0xff]
        %v2714 = vld [vmem:[%s2562 + $0x110] sm:$0xff]
        %v2715 = vld [vmem:[%s2562 + $0x120] sm:$0xff]
        %v2716 = vld [vmem:[%s2562 + $0x128] sm:$0xff]
        %v2717 = vld [vmem:[%s2562 + $0x138] sm:$0xff]
        %v2718 = vld [vmem:[%s2562 + $0x140] sm:$0xff]
        %v2719 = vld [vmem:[%s2562 + $0x150] sm:$0xff]
        %v2720 = vld [vmem:[%s2562 + $0x158] sm:$0xff]
        %v2721 = vld [vmem:[%s2562 + $0x168] sm:$0xff]
        %v2722 = vld [vmem:[%s2562 + $0x170] sm:$0xff]
        %v2723 = vld [vmem:[%s2562 + $0x1] sm:$0xff]
        %v2724 = vld [vmem:[%s2562 + $0x9] sm:$0xff]
        %v2725 = vld [vmem:[%s2562 + $0x19] sm:$0xff]
        %v2726 = vld [vmem:[%s2562 + $0x21] sm:$0xff]
        %v2727 = vld [vmem:[%s2562 + $0x31] sm:$0xff]
        %v2728 = vld [vmem:[%s2562 + $0x39] sm:$0xff]
        %v2729 = vld [vmem:[%s2562 + $0x49] sm:$0xff]
        %v2730 = vld [vmem:[%s2562 + $0x51] sm:$0xff]
        %v2731 = vld [vmem:[%s2562 + $0x61] sm:$0xff]
        %v2732 = vld [vmem:[%s2562 + $0x69] sm:$0xff]
        %v2733 = vld [vmem:[%s2562 + $0x79] sm:$0xff]
        %v2734 = vld [vmem:[%s2562 + $0x81] sm:$0xff]
        %v2735 = vld [vmem:[%s2562 + $0x91] sm:$0xff]
        %v2736 = vld [vmem:[%s2562 + $0x99] sm:$0xff]
        %v2737 = vld [vmem:[%s2562 + $0xa9] sm:$0xff]
        %v2738 = vld [vmem:[%s2562 + $0xb1] sm:$0xff]
        %v2739 = vld [vmem:[%s2562 + $0xc1] sm:$0xff]
        %v2740 = vld [vmem:[%s2562 + $0xc9] sm:$0xff]
        %v2741 = vld [vmem:[%s2562 + $0xd9] sm:$0xff]
        %v2742 = vld [vmem:[%s2562 + $0xe1] sm:$0xff]
        %v2743 = vld [vmem:[%s2562 + $0xf1] sm:$0xff]
        %v2744 = vld [vmem:[%s2562 + $0xf9] sm:$0xff]
        %v2745 = vld [vmem:[%s2562 + $0x109] sm:$0xff]
        %v2746 = vld [vmem:[%s2562 + $0x111] sm:$0xff]
        %v2747 = vld [vmem:[%s2562 + $0x121] sm:$0xff]
        %v2748 = vld [vmem:[%s2562 + $0x129] sm:$0xff]
        %v2749 = vld [vmem:[%s2562 + $0x139] sm:$0xff]
        %v2750 = vld [vmem:[%s2562 + $0x141] sm:$0xff]
        %v2751 = vld [vmem:[%s2562 + $0x151] sm:$0xff]
        %v2752 = vld [vmem:[%s2562 + $0x159] sm:$0xff]
        %v2753 = vld [vmem:[%s2562 + $0x169] sm:$0xff]
        %v2754 = vld [vmem:[%s2562 + $0x171] sm:$0xff]
        %v2755 = vld [vmem:[%s2562 + $0x2] sm:$0xff]
        %v2756 = vld [vmem:[%s2562 + $0xa] sm:$0xff]
        %v2757 = vld [vmem:[%s2562 + $0x1a] sm:$0xff]
        %v2758 = vld [vmem:[%s2562 + $0x22] sm:$0xff]
        %v2759 = vld [vmem:[%s2562 + $0x32] sm:$0xff]
        %v2760 = vld [vmem:[%s2562 + $0x3a] sm:$0xff]
        %v2761 = vld [vmem:[%s2562 + $0x4a] sm:$0xff]
        %v2762 = vld [vmem:[%s2562 + $0x52] sm:$0xff]
        %v2763 = vld [vmem:[%s2562 + $0x62] sm:$0xff]
        %v2764 = vld [vmem:[%s2562 + $0x6a] sm:$0xff]
        %v2765 = vld [vmem:[%s2562 + $0x7a] sm:$0xff]
        %v2766 = vld [vmem:[%s2562 + $0x82] sm:$0xff]
        %v2767 = vld [vmem:[%s2562 + $0x92] sm:$0xff]
        %v2768 = vld [vmem:[%s2562 + $0x9a] sm:$0xff]
        %v2769 = vld [vmem:[%s2562 + $0xaa] sm:$0xff]
        %v2770 = vld [vmem:[%s2562 + $0xb2] sm:$0xff]
        %v2771 = vld [vmem:[%s2562 + $0xc2] sm:$0xff]
        %v2772 = vld [vmem:[%s2562 + $0xca] sm:$0xff]
        %v2773 = vld [vmem:[%s2562 + $0xda] sm:$0xff]
        %v2774 = vld [vmem:[%s2562 + $0xe2] sm:$0xff]
        %v2775 = vld [vmem:[%s2562 + $0xf2] sm:$0xff]
        %v2776 = vld [vmem:[%s2562 + $0xfa] sm:$0xff]
        %v2777 = vld [vmem:[%s2562 + $0x10a] sm:$0xff]
        %v2778 = vld [vmem:[%s2562 + $0x112] sm:$0xff]
        %v2779 = vld [vmem:[%s2562 + $0x122] sm:$0xff]
        %v2780 = vld [vmem:[%s2562 + $0x12a] sm:$0xff]
        %v2781 = vld [vmem:[%s2562 + $0x13a] sm:$0xff]
        %v2782 = vld [vmem:[%s2562 + $0x142] sm:$0xff]
        %v2783 = vld [vmem:[%s2562 + $0x152] sm:$0xff]
        %v2784 = vld [vmem:[%s2562 + $0x15a] sm:$0xff]
        %v2785 = vld [vmem:[%s2562 + $0x16a] sm:$0xff]
        %v2786 = vld [vmem:[%s2562 + $0x172] sm:$0xff]
        %s2787 = scalar_lea.vmem [#allocation3], 48
        %v2788 = vld [vmem:[%s2787] sm:$0xff]
        %v2789 = vld [vmem:[%s2787 + $0x8] sm:$0xff]
        %v2790 = vld [vmem:[%s2787 + $0x18] sm:$0xff]
        %v2791 = vld [vmem:[%s2787 + $0x20] sm:$0xff]
        %v2792 = vld [vmem:[%s2787 + $0x30] sm:$0xff]
        %v2793 = vld [vmem:[%s2787 + $0x38] sm:$0xff]
        %v2794 = vld [vmem:[%s2787 + $0x48] sm:$0xff]
        %v2795 = vld [vmem:[%s2787 + $0x50] sm:$0xff]
        %v2796 = vld [vmem:[%s2787 + $0x60] sm:$0xff]
        %v2797 = vld [vmem:[%s2787 + $0x68] sm:$0xff]
        %v2798 = vld [vmem:[%s2787 + $0x78] sm:$0xff]
        %v2799 = vld [vmem:[%s2787 + $0x80] sm:$0xff]
        %v2800 = vld [vmem:[%s2787 + $0x90] sm:$0xff]
        %v2801 = vld [vmem:[%s2787 + $0x98] sm:$0xff]
        %v2802 = vld [vmem:[%s2787 + $0xa8] sm:$0xff]
        %v2803 = vld [vmem:[%s2787 + $0xb0] sm:$0xff]
        %v2804 = vld [vmem:[%s2787 + $0xc0] sm:$0xff]
        %v2805 = vld [vmem:[%s2787 + $0xc8] sm:$0xff]
        %v2806 = vld [vmem:[%s2787 + $0xd8] sm:$0xff]
        %v2807 = vld [vmem:[%s2787 + $0xe0] sm:$0xff]
        %v2808 = vld [vmem:[%s2787 + $0xf0] sm:$0xff]
        %v2809 = vld [vmem:[%s2787 + $0xf8] sm:$0xff]
        %v2810 = vld [vmem:[%s2787 + $0x108] sm:$0xff]
        %v2811 = vld [vmem:[%s2787 + $0x110] sm:$0xff]
        %v2812 = vld [vmem:[%s2787 + $0x120] sm:$0xff]
        %v2813 = vld [vmem:[%s2787 + $0x128] sm:$0xff]
        %v2814 = vld [vmem:[%s2787 + $0x138] sm:$0xff]
        %v2815 = vld [vmem:[%s2787 + $0x140] sm:$0xff]
        %v2816 = vld [vmem:[%s2787 + $0x150] sm:$0xff]
        %v2817 = vld [vmem:[%s2787 + $0x158] sm:$0xff]
        %v2818 = vld [vmem:[%s2787 + $0x168] sm:$0xff]
        %v2819 = vld [vmem:[%s2787 + $0x170] sm:$0xff]
        %v2820 = vld [vmem:[%s2787 + $0x1] sm:$0xff]
        %v2821 = vld [vmem:[%s2787 + $0x9] sm:$0xff]
        %v2822 = vld [vmem:[%s2787 + $0x19] sm:$0xff]
        %v2823 = vld [vmem:[%s2787 + $0x21] sm:$0xff]
        %v2824 = vld [vmem:[%s2787 + $0x31] sm:$0xff]
        %v2825 = vld [vmem:[%s2787 + $0x39] sm:$0xff]
        %v2826 = vld [vmem:[%s2787 + $0x49] sm:$0xff]
        %v2827 = vld [vmem:[%s2787 + $0x51] sm:$0xff]
        %v2828 = vld [vmem:[%s2787 + $0x61] sm:$0xff]
        %v2829 = vld [vmem:[%s2787 + $0x69] sm:$0xff]
        %v2830 = vld [vmem:[%s2787 + $0x79] sm:$0xff]
        %v2831 = vld [vmem:[%s2787 + $0x81] sm:$0xff]
        %v2832 = vld [vmem:[%s2787 + $0x91] sm:$0xff]
        %v2833 = vld [vmem:[%s2787 + $0x99] sm:$0xff]
        %v2834 = vld [vmem:[%s2787 + $0xa9] sm:$0xff]
        %v2835 = vld [vmem:[%s2787 + $0xb1] sm:$0xff]
        %v2836 = vld [vmem:[%s2787 + $0xc1] sm:$0xff]
        %v2837 = vld [vmem:[%s2787 + $0xc9] sm:$0xff]
        %v2838 = vld [vmem:[%s2787 + $0xd9] sm:$0xff]
        %v2839 = vld [vmem:[%s2787 + $0xe1] sm:$0xff]
        %v2840 = vld [vmem:[%s2787 + $0xf1] sm:$0xff]
        %v2841 = vld [vmem:[%s2787 + $0xf9] sm:$0xff]
        %v2842 = vld [vmem:[%s2787 + $0x109] sm:$0xff]
        %v2843 = vld [vmem:[%s2787 + $0x111] sm:$0xff]
        %v2844 = vld [vmem:[%s2787 + $0x121] sm:$0xff]
        %v2845 = vld [vmem:[%s2787 + $0x129] sm:$0xff]
        %v2846 = vld [vmem:[%s2787 + $0x139] sm:$0xff]
        %v2847 = vld [vmem:[%s2787 + $0x141] sm:$0xff]
        %v2848 = vld [vmem:[%s2787 + $0x151] sm:$0xff]
        %v2849 = vld [vmem:[%s2787 + $0x159] sm:$0xff]
        %v2850 = vld [vmem:[%s2787 + $0x169] sm:$0xff]
        %v2851 = vld [vmem:[%s2787 + $0x171] sm:$0xff]
        %v2852 = vld [vmem:[%s2787 + $0x2] sm:$0xff]
        %v2853 = vld [vmem:[%s2787 + $0xa] sm:$0xff]
        %v2854 = vld [vmem:[%s2787 + $0x1a] sm:$0xff]
        %v2855 = vld [vmem:[%s2787 + $0x22] sm:$0xff]
        %v2856 = vld [vmem:[%s2787 + $0x32] sm:$0xff]
        %v2857 = vld [vmem:[%s2787 + $0x3a] sm:$0xff]
        %v2858 = vld [vmem:[%s2787 + $0x4a] sm:$0xff]
        %v2859 = vld [vmem:[%s2787 + $0x52] sm:$0xff]
        %v2860 = vld [vmem:[%s2787 + $0x62] sm:$0xff]
        %v2861 = vld [vmem:[%s2787 + $0x6a] sm:$0xff]
        %v2862 = vld [vmem:[%s2787 + $0x7a] sm:$0xff]
        %v2863 = vld [vmem:[%s2787 + $0x82] sm:$0xff]
        %v2864 = vld [vmem:[%s2787 + $0x92] sm:$0xff]
        %v2865 = vld [vmem:[%s2787 + $0x9a] sm:$0xff]
        %v2866 = vld [vmem:[%s2787 + $0xaa] sm:$0xff]
        %v2867 = vld [vmem:[%s2787 + $0xb2] sm:$0xff]
        %v2868 = vld [vmem:[%s2787 + $0xc2] sm:$0xff]
        %v2869 = vld [vmem:[%s2787 + $0xca] sm:$0xff]
        %v2870 = vld [vmem:[%s2787 + $0xda] sm:$0xff]
        %v2871 = vld [vmem:[%s2787 + $0xe2] sm:$0xff]
        %v2872 = vld [vmem:[%s2787 + $0xf2] sm:$0xff]
        %v2873 = vld [vmem:[%s2787 + $0xfa] sm:$0xff]
        %v2874 = vld [vmem:[%s2787 + $0x10a] sm:$0xff]
        %v2875 = vld [vmem:[%s2787 + $0x112] sm:$0xff]
        %v2876 = vld [vmem:[%s2787 + $0x122] sm:$0xff]
        %v2877 = vld [vmem:[%s2787 + $0x12a] sm:$0xff]
        %v2878 = vld [vmem:[%s2787 + $0x13a] sm:$0xff]
        %v2879 = vld [vmem:[%s2787 + $0x142] sm:$0xff]
        %v2880 = vld [vmem:[%s2787 + $0x152] sm:$0xff]
        %v2881 = vld [vmem:[%s2787 + $0x15a] sm:$0xff]
        %v2882 = vld [vmem:[%s2787 + $0x16a] sm:$0xff]
        %v2883 = vld [vmem:[%s2787 + $0x172] sm:$0xff]
        %2916 = vrot.lane.b32.xlu0 %v2627, 32
        %v2917 = vpop.permute.xlu0 %2916
        %2918 = vrot.lane.b32.xlu0 %v2628, 32
        %v2919 = vpop.permute.xlu0 %2918
        %2920 = vrot.lane.b32.xlu0 %v2629, 32
        %v2921 = vpop.permute.xlu0 %2920
        %2922 = vrot.lane.b32.xlu0 %v2630, 32
        %v2923 = vpop.permute.xlu0 %2922
        %2924 = vrot.lane.b32.xlu0 %v2631, 32
        %v2925 = vpop.permute.xlu0 %2924
        %2926 = vrot.lane.b32.xlu0 %v2632, 32
        %v2927 = vpop.permute.xlu0 %2926
        %2928 = vrot.lane.b32.xlu0 %v2633, 32
        %v2929 = vpop.permute.xlu0 %2928
        %2930 = vrot.lane.b32.xlu0 %v2634, 32
        %v2931 = vpop.permute.xlu0 %2930
        %2932 = vrot.lane.b32.xlu0 %v2635, 32
        %v2933 = vpop.permute.xlu0 %2932
        %2934 = vrot.lane.b32.xlu0 %v2636, 32
        %v2935 = vpop.permute.xlu0 %2934
        %2936 = vrot.lane.b32.xlu0 %v2637, 32
        %v2937 = vpop.permute.xlu0 %2936
        %2938 = vrot.lane.b32.xlu0 %v2638, 32
        %v2939 = vpop.permute.xlu0 %2938
        %2940 = vrot.lane.b32.xlu0 %v2639, 32
        %v2941 = vpop.permute.xlu0 %2940
        %2942 = vrot.lane.b32.xlu0 %v2640, 32
        %v2943 = vpop.permute.xlu0 %2942
        %2944 = vrot.lane.b32.xlu0 %v2641, 32
        %v2945 = vpop.permute.xlu0 %2944
        %2946 = vrot.lane.b32.xlu0 %v2642, 32
        %v2947 = vpop.permute.xlu0 %2946
        %2948 = vrot.lane.b32.xlu0 %v2643, 32
        %v2949 = vpop.permute.xlu0 %2948
        %2950 = vrot.lane.b32.xlu0 %v2644, 32
        %v2951 = vpop.permute.xlu0 %2950
        %2952 = vrot.lane.b32.xlu0 %v2645, 32
        %v2953 = vpop.permute.xlu0 %2952
        %2954 = vrot.lane.b32.xlu0 %v2646, 32
        %v2955 = vpop.permute.xlu0 %2954
        %2956 = vrot.lane.b32.xlu0 %v2647, 32
        %v2957 = vpop.permute.xlu0 %2956
        %2958 = vrot.lane.b32.xlu0 %v2648, 32
        %v2959 = vpop.permute.xlu0 %2958
        %2960 = vrot.lane.b32.xlu0 %v2649, 32
        %v2961 = vpop.permute.xlu0 %2960
        %2962 = vrot.lane.b32.xlu0 %v2650, 32
        %v2963 = vpop.permute.xlu0 %2962
        %2964 = vrot.lane.b32.xlu0 %v2651, 32
        %v2965 = vpop.permute.xlu0 %2964
        %2966 = vrot.lane.b32.xlu0 %v2652, 32
        %v2967 = vpop.permute.xlu0 %2966
        %2968 = vrot.lane.b32.xlu0 %v2653, 32
        %v2969 = vpop.permute.xlu0 %2968
        %2970 = vrot.lane.b32.xlu0 %v2654, 32
        %v2971 = vpop.permute.xlu0 %2970
        %2972 = vrot.lane.b32.xlu0 %v2655, 32
        %v2973 = vpop.permute.xlu0 %2972
        %2974 = vrot.lane.b32.xlu0 %v2656, 32
        %v2975 = vpop.permute.xlu0 %2974
        %2976 = vrot.lane.b32.xlu0 %v2657, 32
        %v2977 = vpop.permute.xlu0 %2976
        %2978 = vrot.lane.b32.xlu0 %v2658, 32
        %v2979 = vpop.permute.xlu0 %2978
        %3044 = vrot.lane.b32.xlu0 %v2659, 64
        %v3045 = vpop.permute.xlu0 %3044
        %3046 = vrot.lane.b32.xlu0 %v2660, 64
        %v3047 = vpop.permute.xlu0 %3046
        %3048 = vrot.lane.b32.xlu0 %v2661, 64
        %v3049 = vpop.permute.xlu0 %3048
        %3050 = vrot.lane.b32.xlu0 %v2662, 64
        %v3051 = vpop.permute.xlu0 %3050
        %3052 = vrot.lane.b32.xlu0 %v2663, 64
        %v3053 = vpop.permute.xlu0 %3052
        %3054 = vrot.lane.b32.xlu0 %v2664, 64
        %v3055 = vpop.permute.xlu0 %3054
        %3056 = vrot.lane.b32.xlu0 %v2665, 64
        %v3057 = vpop.permute.xlu0 %3056
        %3058 = vrot.lane.b32.xlu0 %v2666, 64
        %v3059 = vpop.permute.xlu0 %3058
        %3060 = vrot.lane.b32.xlu0 %v2667, 64
        %v3061 = vpop.permute.xlu0 %3060
        %3062 = vrot.lane.b32.xlu0 %v2668, 64
        %v3063 = vpop.permute.xlu0 %3062
        %3064 = vrot.lane.b32.xlu0 %v2669, 64
        %v3065 = vpop.permute.xlu0 %3064
        %3066 = vrot.lane.b32.xlu0 %v2670, 64
        %v3067 = vpop.permute.xlu0 %3066
        %3068 = vrot.lane.b32.xlu0 %v2671, 64
        %v3069 = vpop.permute.xlu0 %3068
        %3070 = vrot.lane.b32.xlu0 %v2672, 64
        %v3071 = vpop.permute.xlu0 %3070
        %3072 = vrot.lane.b32.xlu0 %v2673, 64
        %v3073 = vpop.permute.xlu0 %3072
        %3074 = vrot.lane.b32.xlu0 %v2674, 64
        %v3075 = vpop.permute.xlu0 %3074
        %3076 = vrot.lane.b32.xlu0 %v2675, 64
        %v3077 = vpop.permute.xlu0 %3076
        %3078 = vrot.lane.b32.xlu0 %v2676, 64
        %v3079 = vpop.permute.xlu0 %3078
        %3080 = vrot.lane.b32.xlu0 %v2677, 64
        %v3081 = vpop.permute.xlu0 %3080
        %3082 = vrot.lane.b32.xlu0 %v2678, 64
        %v3083 = vpop.permute.xlu0 %3082
        %3084 = vrot.lane.b32.xlu0 %v2679, 64
        %v3085 = vpop.permute.xlu0 %3084
        %3086 = vrot.lane.b32.xlu0 %v2680, 64
        %v3087 = vpop.permute.xlu0 %3086
        %3088 = vrot.lane.b32.xlu0 %v2681, 64
        %v3089 = vpop.permute.xlu0 %3088
        %3090 = vrot.lane.b32.xlu0 %v2682, 64
        %v3091 = vpop.permute.xlu0 %3090
        %3092 = vrot.lane.b32.xlu0 %v2683, 64
        %v3093 = vpop.permute.xlu0 %3092
        %3094 = vrot.lane.b32.xlu0 %v2684, 64
        %v3095 = vpop.permute.xlu0 %3094
        %3096 = vrot.lane.b32.xlu0 %v2685, 64
        %v3097 = vpop.permute.xlu0 %3096
        %3098 = vrot.lane.b32.xlu0 %v2686, 64
        %v3099 = vpop.permute.xlu0 %3098
        %3100 = vrot.lane.b32.xlu0 %v2687, 64
        %v3101 = vpop.permute.xlu0 %3100
        %3102 = vrot.lane.b32.xlu0 %v2688, 64
        %v3103 = vpop.permute.xlu0 %3102
        %3104 = vrot.lane.b32.xlu0 %v2689, 64
        %v3105 = vpop.permute.xlu0 %3104
        %3106 = vrot.lane.b32.xlu0 %v2690, 64
        %v3107 = vpop.permute.xlu0 %3106
        %3172 = vrot.lane.b32.xlu0 %v2691, 96
        %v3173 = vpop.permute.xlu0 %3172
        %3174 = vrot.lane.b32.xlu0 %v2692, 96
        %v3175 = vpop.permute.xlu0 %3174
        %3176 = vrot.lane.b32.xlu0 %v2693, 96
        %v3177 = vpop.permute.xlu0 %3176
        %3178 = vrot.lane.b32.xlu0 %v2694, 96
        %v3179 = vpop.permute.xlu0 %3178
        %3180 = vrot.lane.b32.xlu0 %v2695, 96
        %v3181 = vpop.permute.xlu0 %3180
        %3182 = vrot.lane.b32.xlu0 %v2696, 96
        %v3183 = vpop.permute.xlu0 %3182
        %3184 = vrot.lane.b32.xlu0 %v2697, 96
        %v3185 = vpop.permute.xlu0 %3184
        %3186 = vrot.lane.b32.xlu0 %v2698, 96
        %v3187 = vpop.permute.xlu0 %3186
        %3188 = vrot.lane.b32.xlu0 %v2699, 96
        %v3189 = vpop.permute.xlu0 %3188
        %3190 = vrot.lane.b32.xlu0 %v2700, 96
        %v3191 = vpop.permute.xlu0 %3190
        %3192 = vrot.lane.b32.xlu0 %v2701, 96
        %v3193 = vpop.permute.xlu0 %3192
        %3194 = vrot.lane.b32.xlu0 %v2702, 96
        %v3195 = vpop.permute.xlu0 %3194
        %3196 = vrot.lane.b32.xlu0 %v2703, 96
        %v3197 = vpop.permute.xlu0 %3196
        %3198 = vrot.lane.b32.xlu0 %v2704, 96
        %v3199 = vpop.permute.xlu0 %3198
        %3200 = vrot.lane.b32.xlu0 %v2705, 96
        %v3201 = vpop.permute.xlu0 %3200
        %3202 = vrot.lane.b32.xlu0 %v2706, 96
        %v3203 = vpop.permute.xlu0 %3202
        %3204 = vrot.lane.b32.xlu0 %v2707, 96
        %v3205 = vpop.permute.xlu0 %3204
        %3206 = vrot.lane.b32.xlu0 %v2708, 96
        %v3207 = vpop.permute.xlu0 %3206
        %3208 = vrot.lane.b32.xlu0 %v2709, 96
        %v3209 = vpop.permute.xlu0 %3208
        %3210 = vrot.lane.b32.xlu0 %v2710, 96
        %v3211 = vpop.permute.xlu0 %3210
        %3212 = vrot.lane.b32.xlu0 %v2711, 96
        %v3213 = vpop.permute.xlu0 %3212
        %3214 = vrot.lane.b32.xlu0 %v2712, 96
        %v3215 = vpop.permute.xlu0 %3214
        %3216 = vrot.lane.b32.xlu0 %v2713, 96
        %v3217 = vpop.permute.xlu0 %3216
        %3218 = vrot.lane.b32.xlu0 %v2714, 96
        %v3219 = vpop.permute.xlu0 %3218
        %3220 = vrot.lane.b32.xlu0 %v2715, 96
        %v3221 = vpop.permute.xlu0 %3220
        %3222 = vrot.lane.b32.xlu0 %v2716, 96
        %v3223 = vpop.permute.xlu0 %3222
        %3224 = vrot.lane.b32.xlu0 %v2717, 96
        %v3225 = vpop.permute.xlu0 %3224
        %3226 = vrot.lane.b32.xlu0 %v2718, 96
        %v3227 = vpop.permute.xlu0 %3226
        %3228 = vrot.lane.b32.xlu0 %v2719, 96
        %v3229 = vpop.permute.xlu0 %3228
        %3230 = vrot.lane.b32.xlu0 %v2720, 96
        %v3231 = vpop.permute.xlu0 %3230
        %3232 = vrot.lane.b32.xlu0 %v2721, 96
        %v3233 = vpop.permute.xlu0 %3232
        %3234 = vrot.lane.b32.xlu0 %v2722, 96
        %v3235 = vpop.permute.xlu0 %3234
        %3300 = vrot.lane.b32.xlu0 %v2755, 32
        %v3301 = vpop.permute.xlu0 %3300
        %3302 = vrot.lane.b32.xlu0 %v2756, 32
        %v3303 = vpop.permute.xlu0 %3302
        %3304 = vrot.lane.b32.xlu0 %v2757, 32
        %v3305 = vpop.permute.xlu0 %3304
        %3306 = vrot.lane.b32.xlu0 %v2758, 32
        %v3307 = vpop.permute.xlu0 %3306
        %3308 = vrot.lane.b32.xlu0 %v2759, 32
        %v3309 = vpop.permute.xlu0 %3308
        %3310 = vrot.lane.b32.xlu0 %v2760, 32
        %v3311 = vpop.permute.xlu0 %3310
        %3312 = vrot.lane.b32.xlu0 %v2761, 32
        %v3313 = vpop.permute.xlu0 %3312
        %3314 = vrot.lane.b32.xlu0 %v2762, 32
        %v3315 = vpop.permute.xlu0 %3314
        %3316 = vrot.lane.b32.xlu0 %v2763, 32
        %v3317 = vpop.permute.xlu0 %3316
        %3318 = vrot.lane.b32.xlu0 %v2764, 32
        %v3319 = vpop.permute.xlu0 %3318
        %3320 = vrot.lane.b32.xlu0 %v2765, 32
        %v3321 = vpop.permute.xlu0 %3320
        %3322 = vrot.lane.b32.xlu0 %v2766, 32
        %v3323 = vpop.permute.xlu0 %3322
        %3324 = vrot.lane.b32.xlu0 %v2767, 32
        %v3325 = vpop.permute.xlu0 %3324
        %3326 = vrot.lane.b32.xlu0 %v2768, 32
        %v3327 = vpop.permute.xlu0 %3326
        %3328 = vrot.lane.b32.xlu0 %v2769, 32
        %v3329 = vpop.permute.xlu0 %3328
        %3330 = vrot.lane.b32.xlu0 %v2770, 32
        %v3331 = vpop.permute.xlu0 %3330
        %3332 = vrot.lane.b32.xlu0 %v2771, 32
        %v3333 = vpop.permute.xlu0 %3332
        %3334 = vrot.lane.b32.xlu0 %v2772, 32
        %v3335 = vpop.permute.xlu0 %3334
        %3336 = vrot.lane.b32.xlu0 %v2773, 32
        %v3337 = vpop.permute.xlu0 %3336
        %3338 = vrot.lane.b32.xlu0 %v2774, 32
        %v3339 = vpop.permute.xlu0 %3338
        %3340 = vrot.lane.b32.xlu0 %v2775, 32
        %v3341 = vpop.permute.xlu0 %3340
        %3342 = vrot.lane.b32.xlu0 %v2776, 32
        %v3343 = vpop.permute.xlu0 %3342
        %3344 = vrot.lane.b32.xlu0 %v2777, 32
        %v3345 = vpop.permute.xlu0 %3344
        %3346 = vrot.lane.b32.xlu0 %v2778, 32
        %v3347 = vpop.permute.xlu0 %3346
        %3348 = vrot.lane.b32.xlu0 %v2779, 32
        %v3349 = vpop.permute.xlu0 %3348
        %3350 = vrot.lane.b32.xlu0 %v2780, 32
        %v3351 = vpop.permute.xlu0 %3350
        %3352 = vrot.lane.b32.xlu0 %v2781, 32
        %v3353 = vpop.permute.xlu0 %3352
        %3354 = vrot.lane.b32.xlu0 %v2782, 32
        %v3355 = vpop.permute.xlu0 %3354
        %3356 = vrot.lane.b32.xlu0 %v2783, 32
        %v3357 = vpop.permute.xlu0 %3356
        %3358 = vrot.lane.b32.xlu0 %v2784, 32
        %v3359 = vpop.permute.xlu0 %3358
        %3360 = vrot.lane.b32.xlu0 %v2785, 32
        %v3361 = vpop.permute.xlu0 %3360
        %3362 = vrot.lane.b32.xlu0 %v2786, 32
        %v3363 = vpop.permute.xlu0 %3362
        %3428 = vrot.lane.b32.xlu0 %v2788, 64
        %v3429 = vpop.permute.xlu0 %3428
        %3430 = vrot.lane.b32.xlu0 %v2789, 64
        %v3431 = vpop.permute.xlu0 %3430
        %3432 = vrot.lane.b32.xlu0 %v2790, 64
        %v3433 = vpop.permute.xlu0 %3432
        %3434 = vrot.lane.b32.xlu0 %v2791, 64
        %v3435 = vpop.permute.xlu0 %3434
        %3436 = vrot.lane.b32.xlu0 %v2792, 64
        %v3437 = vpop.permute.xlu0 %3436
        %3438 = vrot.lane.b32.xlu0 %v2793, 64
        %v3439 = vpop.permute.xlu0 %3438
        %3440 = vrot.lane.b32.xlu0 %v2794, 64
        %v3441 = vpop.permute.xlu0 %3440
        %3442 = vrot.lane.b32.xlu0 %v2795, 64
        %v3443 = vpop.permute.xlu0 %3442
        %3444 = vrot.lane.b32.xlu0 %v2796, 64
        %v3445 = vpop.permute.xlu0 %3444
        %3446 = vrot.lane.b32.xlu0 %v2797, 64
        %v3447 = vpop.permute.xlu0 %3446
        %3448 = vrot.lane.b32.xlu0 %v2798, 64
        %v3449 = vpop.permute.xlu0 %3448
        %3450 = vrot.lane.b32.xlu0 %v2799, 64
        %v3451 = vpop.permute.xlu0 %3450
        %3452 = vrot.lane.b32.xlu0 %v2800, 64
        %v3453 = vpop.permute.xlu0 %3452
        %3454 = vrot.lane.b32.xlu0 %v2801, 64
        %v3455 = vpop.permute.xlu0 %3454
        %3456 = vrot.lane.b32.xlu0 %v2802, 64
        %v3457 = vpop.permute.xlu0 %3456
        %3458 = vrot.lane.b32.xlu0 %v2803, 64
        %v3459 = vpop.permute.xlu0 %3458
        %3460 = vrot.lane.b32.xlu0 %v2804, 64
        %v3461 = vpop.permute.xlu0 %3460
        %3462 = vrot.lane.b32.xlu0 %v2805, 64
        %v3463 = vpop.permute.xlu0 %3462
        %3464 = vrot.lane.b32.xlu0 %v2806, 64
        %v3465 = vpop.permute.xlu0 %3464
        %3466 = vrot.lane.b32.xlu0 %v2807, 64
        %v3467 = vpop.permute.xlu0 %3466
        %3468 = vrot.lane.b32.xlu0 %v2808, 64
        %v3469 = vpop.permute.xlu0 %3468
        %3470 = vrot.lane.b32.xlu0 %v2809, 64
        %v3471 = vpop.permute.xlu0 %3470
        %3472 = vrot.lane.b32.xlu0 %v2810, 64
        %v3473 = vpop.permute.xlu0 %3472
        %3474 = vrot.lane.b32.xlu0 %v2811, 64
        %v3475 = vpop.permute.xlu0 %3474
        %3476 = vrot.lane.b32.xlu0 %v2812, 64
        %v3477 = vpop.permute.xlu0 %3476
        %3478 = vrot.lane.b32.xlu0 %v2813, 64
        %v3479 = vpop.permute.xlu0 %3478
        %3480 = vrot.lane.b32.xlu0 %v2814, 64
        %v3481 = vpop.permute.xlu0 %3480
        %3482 = vrot.lane.b32.xlu0 %v2815, 64
        %v3483 = vpop.permute.xlu0 %3482
        %3484 = vrot.lane.b32.xlu0 %v2816, 64
        %v3485 = vpop.permute.xlu0 %3484
        %3486 = vrot.lane.b32.xlu0 %v2817, 64
        %v3487 = vpop.permute.xlu0 %3486
        %3488 = vrot.lane.b32.xlu0 %v2818, 64
        %v3489 = vpop.permute.xlu0 %3488
        %3490 = vrot.lane.b32.xlu0 %v2819, 64
        %v3491 = vpop.permute.xlu0 %3490
        %3556 = vrot.lane.b32.xlu0 %v2820, 96
        %v3557 = vpop.permute.xlu0 %3556
        %3558 = vrot.lane.b32.xlu0 %v2821, 96
        %v3559 = vpop.permute.xlu0 %3558
        %3560 = vrot.lane.b32.xlu0 %v2822, 96
        %v3561 = vpop.permute.xlu0 %3560
        %3562 = vrot.lane.b32.xlu0 %v2823, 96
        %v3563 = vpop.permute.xlu0 %3562
        %3564 = vrot.lane.b32.xlu0 %v2824, 96
        %v3565 = vpop.permute.xlu0 %3564
        %3566 = vrot.lane.b32.xlu0 %v2825, 96
        %v3567 = vpop.permute.xlu0 %3566
        %3568 = vrot.lane.b32.xlu0 %v2826, 96
        %v3569 = vpop.permute.xlu0 %3568
        %3570 = vrot.lane.b32.xlu0 %v2827, 96
        %v3571 = vpop.permute.xlu0 %3570
        %3572 = vrot.lane.b32.xlu0 %v2828, 96
        %v3573 = vpop.permute.xlu0 %3572
        %3574 = vrot.lane.b32.xlu0 %v2829, 96
        %v3575 = vpop.permute.xlu0 %3574
        %3576 = vrot.lane.b32.xlu0 %v2830, 96
        %v3577 = vpop.permute.xlu0 %3576
        %3578 = vrot.lane.b32.xlu0 %v2831, 96
        %v3579 = vpop.permute.xlu0 %3578
        %3580 = vrot.lane.b32.xlu0 %v2832, 96
        %v3581 = vpop.permute.xlu0 %3580
        %3582 = vrot.lane.b32.xlu0 %v2833, 96
        %v3583 = vpop.permute.xlu0 %3582
        %3584 = vrot.lane.b32.xlu0 %v2834, 96
        %v3585 = vpop.permute.xlu0 %3584
        %3586 = vrot.lane.b32.xlu0 %v2835, 96
        %v3587 = vpop.permute.xlu0 %3586
        %3588 = vrot.lane.b32.xlu0 %v2836, 96
        %v3589 = vpop.permute.xlu0 %3588
        %3590 = vrot.lane.b32.xlu0 %v2837, 96
        %v3591 = vpop.permute.xlu0 %3590
        %3592 = vrot.lane.b32.xlu0 %v2838, 96
        %v3593 = vpop.permute.xlu0 %3592
        %3594 = vrot.lane.b32.xlu0 %v2839, 96
        %v3595 = vpop.permute.xlu0 %3594
        %3596 = vrot.lane.b32.xlu0 %v2840, 96
        %v3597 = vpop.permute.xlu0 %3596
        %3598 = vrot.lane.b32.xlu0 %v2841, 96
        %v3599 = vpop.permute.xlu0 %3598
        %3600 = vrot.lane.b32.xlu0 %v2842, 96
        %v3601 = vpop.permute.xlu0 %3600
        %3602 = vrot.lane.b32.xlu0 %v2843, 96
        %v3603 = vpop.permute.xlu0 %3602
        %3604 = vrot.lane.b32.xlu0 %v2844, 96
        %v3605 = vpop.permute.xlu0 %3604
        %3606 = vrot.lane.b32.xlu0 %v2845, 96
        %v3607 = vpop.permute.xlu0 %3606
        %3608 = vrot.lane.b32.xlu0 %v2846, 96
        %v3609 = vpop.permute.xlu0 %3608
        %3610 = vrot.lane.b32.xlu0 %v2847, 96
        %v3611 = vpop.permute.xlu0 %3610
        %3612 = vrot.lane.b32.xlu0 %v2848, 96
        %v3613 = vpop.permute.xlu0 %3612
        %3614 = vrot.lane.b32.xlu0 %v2849, 96
        %v3615 = vpop.permute.xlu0 %3614
        %3616 = vrot.lane.b32.xlu0 %v2850, 96
        %v3617 = vpop.permute.xlu0 %3616
        %3618 = vrot.lane.b32.xlu0 %v2851, 96
        %v3619 = vpop.permute.xlu0 %3618
        %v3652 = vsel %vm2260, %v2595, %v2917
        %v3653 = vsel %vm2260, %v2596, %v2919
        %v3654 = vsel %vm2260, %v2597, %v2921
        %v3655 = vsel %vm2260, %v2598, %v2923
        %v3656 = vsel %vm2260, %v2599, %v2925
        %v3657 = vsel %vm2260, %v2600, %v2927
        %v3658 = vsel %vm2260, %v2601, %v2929
        %v3659 = vsel %vm2260, %v2602, %v2931
        %v3660 = vsel %vm2260, %v2603, %v2933
        %v3661 = vsel %vm2260, %v2604, %v2935
        %v3662 = vsel %vm2260, %v2605, %v2937
        %v3663 = vsel %vm2260, %v2606, %v2939
        %v3664 = vsel %vm2260, %v2607, %v2941
        %v3665 = vsel %vm2260, %v2608, %v2943
        %v3666 = vsel %vm2260, %v2609, %v2945
        %v3667 = vsel %vm2260, %v2610, %v2947
        %v3668 = vsel %vm2260, %v2611, %v2949
        %v3669 = vsel %vm2260, %v2612, %v2951
        %v3670 = vsel %vm2260, %v2613, %v2953
        %v3671 = vsel %vm2260, %v2614, %v2955
        %v3672 = vsel %vm2260, %v2615, %v2957
        %v3673 = vsel %vm2260, %v2616, %v2959
        %v3674 = vsel %vm2260, %v2617, %v2961
        %v3675 = vsel %vm2260, %v2618, %v2963
        %v3676 = vsel %vm2260, %v2619, %v2965
        %v3677 = vsel %vm2260, %v2620, %v2967
        %v3678 = vsel %vm2260, %v2621, %v2969
        %v3679 = vsel %vm2260, %v2622, %v2971
        %v3680 = vsel %vm2260, %v2623, %v2973
        %v3681 = vsel %vm2260, %v2624, %v2975
        %v3682 = vsel %vm2260, %v2625, %v2977
        %v3683 = vsel %vm2260, %v2626, %v2979
        %vm3684 = vcmask 523264
        %v3685 = vsel %vm3684, %v3652, %v3045
        %v3686 = vsel %vm3684, %v3653, %v3047
        %v3687 = vsel %vm3684, %v3654, %v3049
        %v3688 = vsel %vm3684, %v3655, %v3051
        %v3689 = vsel %vm3684, %v3656, %v3053
        %v3690 = vsel %vm3684, %v3657, %v3055
        %v3691 = vsel %vm3684, %v3658, %v3057
        %v3692 = vsel %vm3684, %v3659, %v3059
        %v3693 = vsel %vm3684, %v3660, %v3061
        %v3694 = vsel %vm3684, %v3661, %v3063
        %v3695 = vsel %vm3684, %v3662, %v3065
        %v3696 = vsel %vm3684, %v3663, %v3067
        %v3697 = vsel %vm3684, %v3664, %v3069
        %v3698 = vsel %vm3684, %v3665, %v3071
        %v3699 = vsel %vm3684, %v3666, %v3073
        %v3700 = vsel %vm3684, %v3667, %v3075
        %v3701 = vsel %vm3684, %v3668, %v3077
        %v3702 = vsel %vm3684, %v3669, %v3079
        %v3703 = vsel %vm3684, %v3670, %v3081
        %v3704 = vsel %vm3684, %v3671, %v3083
        %v3705 = vsel %vm3684, %v3672, %v3085
        %v3706 = vsel %vm3684, %v3673, %v3087
        %v3707 = vsel %vm3684, %v3674, %v3089
        %v3708 = vsel %vm3684, %v3675, %v3091
        %v3709 = vsel %vm3684, %v3676, %v3093
        %v3710 = vsel %vm3684, %v3677, %v3095
        %v3711 = vsel %vm3684, %v3678, %v3097
        %v3712 = vsel %vm3684, %v3679, %v3099
        %v3713 = vsel %vm3684, %v3680, %v3101
        %v3714 = vsel %vm3684, %v3681, %v3103
        %v3715 = vsel %vm3684, %v3682, %v3105
        %v3716 = vsel %vm3684, %v3683, %v3107
        %vm3717 = vcmask 785408
        %v3718 = vsel %vm3717, %v3685, %v3173
        %v3719 = vsel %vm3717, %v3686, %v3175
        %v3720 = vsel %vm3717, %v3687, %v3177
        %v3721 = vsel %vm3717, %v3688, %v3179
        %v3722 = vsel %vm3717, %v3689, %v3181
        %v3723 = vsel %vm3717, %v3690, %v3183
        %v3724 = vsel %vm3717, %v3691, %v3185
        %v3725 = vsel %vm3717, %v3692, %v3187
        %v3726 = vsel %vm3717, %v3693, %v3189
        %v3727 = vsel %vm3717, %v3694, %v3191
        %v3728 = vsel %vm3717, %v3695, %v3193
        %v3729 = vsel %vm3717, %v3696, %v3195
        %v3730 = vsel %vm3717, %v3697, %v3197
        %v3731 = vsel %vm3717, %v3698, %v3199
        %v3732 = vsel %vm3717, %v3699, %v3201
        %v3733 = vsel %vm3717, %v3700, %v3203
        %v3734 = vsel %vm3717, %v3701, %v3205
        %v3735 = vsel %vm3717, %v3702, %v3207
        %v3736 = vsel %vm3717, %v3703, %v3209
        %v3737 = vsel %vm3717, %v3704, %v3211
        %v3738 = vsel %vm3717, %v3705, %v3213
        %v3739 = vsel %vm3717, %v3706, %v3215
        %v3740 = vsel %vm3717, %v3707, %v3217
        %v3741 = vsel %vm3717, %v3708, %v3219
        %v3742 = vsel %vm3717, %v3709, %v3221
        %v3743 = vsel %vm3717, %v3710, %v3223
        %v3744 = vsel %vm3717, %v3711, %v3225
        %v3745 = vsel %vm3717, %v3712, %v3227
        %v3746 = vsel %vm3717, %v3713, %v3229
        %v3747 = vsel %vm3717, %v3714, %v3231
        %v3748 = vsel %vm3717, %v3715, %v3233
        %v3749 = vsel %vm3717, %v3716, %v3235
        %v3750 = vsel %vm2260, %v2723, %v3301
        %v3751 = vsel %vm2260, %v2724, %v3303
        %v3752 = vsel %vm2260, %v2725, %v3305
        %v3753 = vsel %vm2260, %v2726, %v3307
        %v3754 = vsel %vm2260, %v2727, %v3309
        %v3755 = vsel %vm2260, %v2728, %v3311
        %v3756 = vsel %vm2260, %v2729, %v3313
        %v3757 = vsel %vm2260, %v2730, %v3315
        %v3758 = vsel %vm2260, %v2731, %v3317
        %v3759 = vsel %vm2260, %v2732, %v3319
        %v3760 = vsel %vm2260, %v2733, %v3321
        %v3761 = vsel %vm2260, %v2734, %v3323
        %v3762 = vsel %vm2260, %v2735, %v3325
        %v3763 = vsel %vm2260, %v2736, %v3327
        %v3764 = vsel %vm2260, %v2737, %v3329
        %v3765 = vsel %vm2260, %v2738, %v3331
        %v3766 = vsel %vm2260, %v2739, %v3333
        %v3767 = vsel %vm2260, %v2740, %v3335
        %v3768 = vsel %vm2260, %v2741, %v3337
        %v3769 = vsel %vm2260, %v2742, %v3339
        %v3770 = vsel %vm2260, %v2743, %v3341
        %v3771 = vsel %vm2260, %v2744, %v3343
        %v3772 = vsel %vm2260, %v2745, %v3345
        %v3773 = vsel %vm2260, %v2746, %v3347
        %v3774 = vsel %vm2260, %v2747, %v3349
        %v3775 = vsel %vm2260, %v2748, %v3351
        %v3776 = vsel %vm2260, %v2749, %v3353
        %v3777 = vsel %vm2260, %v2750, %v3355
        %v3778 = vsel %vm2260, %v2751, %v3357
        %v3779 = vsel %vm2260, %v2752, %v3359
        %v3780 = vsel %vm2260, %v2753, %v3361
        %v3781 = vsel %vm2260, %v2754, %v3363
        %v3782 = vsel %vm3684, %v3750, %v3429
        %v3783 = vsel %vm3684, %v3751, %v3431
        %v3784 = vsel %vm3684, %v3752, %v3433
        %v3785 = vsel %vm3684, %v3753, %v3435
        %v3786 = vsel %vm3684, %v3754, %v3437
        %v3787 = vsel %vm3684, %v3755, %v3439
        %v3788 = vsel %vm3684, %v3756, %v3441
        %v3789 = vsel %vm3684, %v3757, %v3443
        %v3790 = vsel %vm3684, %v3758, %v3445
        %v3791 = vsel %vm3684, %v3759, %v3447
        %v3792 = vsel %vm3684, %v3760, %v3449
        %v3793 = vsel %vm3684, %v3761, %v3451
        %v3794 = vsel %vm3684, %v3762, %v3453
        %v3795 = vsel %vm3684, %v3763, %v3455
        %v3796 = vsel %vm3684, %v3764, %v3457
        %v3797 = vsel %vm3684, %v3765, %v3459
        %v3798 = vsel %vm3684, %v3766, %v3461
        %v3799 = vsel %vm3684, %v3767, %v3463
        %v3800 = vsel %vm3684, %v3768, %v3465
        %v3801 = vsel %vm3684, %v3769, %v3467
        %v3802 = vsel %vm3684, %v3770, %v3469
        %v3803 = vsel %vm3684, %v3771, %v3471
        %v3804 = vsel %vm3684, %v3772, %v3473
        %v3805 = vsel %vm3684, %v3773, %v3475
        %v3806 = vsel %vm3684, %v3774, %v3477
        %v3807 = vsel %vm3684, %v3775, %v3479
        %v3808 = vsel %vm3684, %v3776, %v3481
        %v3809 = vsel %vm3684, %v3777, %v3483
        %v3810 = vsel %vm3684, %v3778, %v3485
        %v3811 = vsel %vm3684, %v3779, %v3487
        %v3812 = vsel %vm3684, %v3780, %v3489
        %v3813 = vsel %vm3684, %v3781, %v3491
        %v3814 = vsel %vm3717, %v3782, %v3557
        %v3815 = vsel %vm3717, %v3783, %v3559
        %v3816 = vsel %vm3717, %v3784, %v3561
        %v3817 = vsel %vm3717, %v3785, %v3563
        %v3818 = vsel %vm3717, %v3786, %v3565
        %v3819 = vsel %vm3717, %v3787, %v3567
        %v3820 = vsel %vm3717, %v3788, %v3569
        %v3821 = vsel %vm3717, %v3789, %v3571
        %v3822 = vsel %vm3717, %v3790, %v3573
        %v3823 = vsel %vm3717, %v3791, %v3575
        %v3824 = vsel %vm3717, %v3792, %v3577
        %v3825 = vsel %vm3717, %v3793, %v3579
        %v3826 = vsel %vm3717, %v3794, %v3581
        %v3827 = vsel %vm3717, %v3795, %v3583
        %v3828 = vsel %vm3717, %v3796, %v3585
        %v3829 = vsel %vm3717, %v3797, %v3587
        %v3830 = vsel %vm3717, %v3798, %v3589
        %v3831 = vsel %vm3717, %v3799, %v3591
        %v3832 = vsel %vm3717, %v3800, %v3593
        %v3833 = vsel %vm3717, %v3801, %v3595
        %v3834 = vsel %vm3717, %v3802, %v3597
        %v3835 = vsel %vm3717, %v3803, %v3599
        %v3836 = vsel %vm3717, %v3804, %v3601
        %v3837 = vsel %vm3717, %v3805, %v3603
        %v3838 = vsel %vm3717, %v3806, %v3605
        %v3839 = vsel %vm3717, %v3807, %v3607
        %v3840 = vsel %vm3717, %v3808, %v3609
        %v3841 = vsel %vm3717, %v3809, %v3611
        %v3842 = vsel %vm3717, %v3810, %v3613
        %v3843 = vsel %vm3717, %v3811, %v3615
        %v3844 = vsel %vm3717, %v3812, %v3617
        %v3845 = vsel %vm3717, %v3813, %v3619
        %v3846 = vpack.c.bf16 %v3719, %v3718
        %v3847 = vpack.c.bf16 %v3815, %v3814
        %v3848 = vpack.c.bf16 %v2853, %v2852
        %v3849 = vpack.c.bf16 %v3721, %v3720
        %v3850 = vpack.c.bf16 %v3817, %v3816
        %v3851 = vpack.c.bf16 %v2855, %v2854
        %v3852 = vpack.c.bf16 %v3723, %v3722
        %v3853 = vpack.c.bf16 %v3819, %v3818
        %v3854 = vpack.c.bf16 %v2857, %v2856
        %v3855 = vpack.c.bf16 %v3725, %v3724
        %v3856 = vpack.c.bf16 %v3821, %v3820
        %v3857 = vpack.c.bf16 %v2859, %v2858
        %v3858 = vpack.c.bf16 %v3727, %v3726
        %v3859 = vpack.c.bf16 %v3823, %v3822
        %v3860 = vpack.c.bf16 %v2861, %v2860
        %v3861 = vpack.c.bf16 %v3729, %v3728
        %v3862 = vpack.c.bf16 %v3825, %v3824
        %v3863 = vpack.c.bf16 %v2863, %v2862
        %v3864 = vpack.c.bf16 %v3731, %v3730
        %v3865 = vpack.c.bf16 %v3827, %v3826
        %v3866 = vpack.c.bf16 %v2865, %v2864
        %v3867 = vpack.c.bf16 %v3733, %v3732
        %v3868 = vpack.c.bf16 %v3829, %v3828
        %v3869 = vpack.c.bf16 %v2867, %v2866
        %v3870 = vpack.c.bf16 %v3735, %v3734
        %v3871 = vpack.c.bf16 %v3831, %v3830
        %v3872 = vpack.c.bf16 %v2869, %v2868
        %v3873 = vpack.c.bf16 %v3737, %v3736
        %v3874 = vpack.c.bf16 %v3833, %v3832
        %v3875 = vpack.c.bf16 %v2871, %v2870
        %v3876 = vpack.c.bf16 %v3739, %v3738
        %v3877 = vpack.c.bf16 %v3835, %v3834
        %v3878 = vpack.c.bf16 %v2873, %v2872
        %v3879 = vpack.c.bf16 %v3741, %v3740
        %v3880 = vpack.c.bf16 %v3837, %v3836
        %v3881 = vpack.c.bf16 %v2875, %v2874
        %v3882 = vpack.c.bf16 %v3743, %v3742
        %v3883 = vpack.c.bf16 %v3839, %v3838
        %v3884 = vpack.c.bf16 %v2877, %v2876
        %v3885 = vpack.c.bf16 %v3745, %v3744
        %v3886 = vpack.c.bf16 %v3841, %v3840
        %v3887 = vpack.c.bf16 %v2879, %v2878
        %v3888 = vpack.c.bf16 %v3747, %v3746
        %v3889 = vpack.c.bf16 %v3843, %v3842
        %v3890 = vpack.c.bf16 %v2881, %v2880
        %v3891 = vpack.c.bf16 %v3749, %v3748
        %v3892 = vpack.c.bf16 %v3845, %v3844
        %v3893 = vpack.c.bf16 %v2883, %v2882
        %v3894 = vld [vmem:[%s6] sm:$0xf]
        %v3895 = vld [vmem:[%s6 + $0x4] sm:$0xf]
        %v3896 = vld [vmem:[%s6 + $0x8] sm:$0xf]
        %v3897 = vld [vmem:[%s6 + $0xc] sm:$0xf]
        %v3898 = vld [vmem:[%s6 + $0x10] sm:$0xf]
        %v3899 = vld [vmem:[%s6 + $0x14] sm:$0xf]
        %v3900 = vld [vmem:[%s6 + $0x18] sm:$0xf]
        %v3901 = vld [vmem:[%s6 + $0x1c] sm:$0xf]
        %v3902 = vld [vmem:[%s6 + $0x20] sm:$0xf]
        %v3903 = vld [vmem:[%s6 + $0x24] sm:$0xf]
        %v3904 = vld [vmem:[%s6 + $0x28] sm:$0xf]
        %v3905 = vld [vmem:[%s6 + $0x2c] sm:$0xf]
        %v3906 = vld [vmem:[%s6 + $0x30] sm:$0xf]
        %v3907 = vld [vmem:[%s6 + $0x34] sm:$0xf]
        %v3908 = vld [vmem:[%s6 + $0x38] sm:$0xf]
        %v3909 = vld [vmem:[%s6 + $0x3c] sm:$0xf]
        %v3910 = vld [vmem:[%s6 + $0x40] sm:$0xf]
        %v3911 = vld [vmem:[%s6 + $0x44] sm:$0xf]
        %v3912 = vld [vmem:[%s6 + $0x48] sm:$0xf]
        %v3913 = vld [vmem:[%s6 + $0x4c] sm:$0xf]
        %v3914 = vld [vmem:[%s6 + $0x50] sm:$0xf]
        %v3915 = vld [vmem:[%s6 + $0x54] sm:$0xf]
        %v3916 = vld [vmem:[%s6 + $0x58] sm:$0xf]
        %v3917 = vld [vmem:[%s6 + $0x5c] sm:$0xf]
        %v3918 = vld [vmem:[%s6 + $0x60] sm:$0xf]
        %v3919 = vld [vmem:[%s6 + $0x64] sm:$0xf]
        %v3920 = vld [vmem:[%s6 + $0x68] sm:$0xf]
        %v3921 = vld [vmem:[%s6 + $0x6c] sm:$0xf]
        %v3922 = vld [vmem:[%s6 + $0x70] sm:$0xf]
        %v3923 = vld [vmem:[%s6 + $0x74] sm:$0xf]
        %v3924 = vld [vmem:[%s6 + $0x78] sm:$0xf]
        %v3925 = vld [vmem:[%s6 + $0x7c] sm:$0xf]
        %v3926 = vld [vmem:[%s6 + $0x80] sm:$0xf]
        %v3927 = vld [vmem:[%s6 + $0x84] sm:$0xf]
        %v3928 = vld [vmem:[%s6 + $0x88] sm:$0xf]
        %v3929 = vld [vmem:[%s6 + $0x8c] sm:$0xf]
        %v3930 = vld [vmem:[%s7] sm:$0x1]
        %v3932 = vperm.slane %v3930, 0
        %v3970 = vunpack.c.l.b16 %v3894
        %v3971 = vunpack.c.l.b16 %v3895
        %v3972 = vunpack.c.l.b16 %v3896
        %v3973 = vunpack.c.l.b16 %v3897
        %v3974 = vunpack.c.l.b16 %v3898
        %v3975 = vunpack.c.l.b16 %v3899
        %v3976 = vunpack.c.l.b16 %v3900
        %v3977 = vunpack.c.l.b16 %v3901
        %v3978 = vunpack.c.l.b16 %v3902
        %v3979 = vunpack.c.l.b16 %v3903
        %v3980 = vunpack.c.l.b16 %v3904
        %v3981 = vunpack.c.l.b16 %v3905
        %v3982 = vunpack.c.l.b16 %v3906
        %v3983 = vunpack.c.l.b16 %v3907
        %v3984 = vunpack.c.l.b16 %v3908
        %v3985 = vunpack.c.l.b16 %v3909
        %v3986 = vunpack.c.l.b16 %v3910
        %v3987 = vunpack.c.l.b16 %v3911
        %v3988 = vunpack.c.l.b16 %v3912
        %v3989 = vunpack.c.l.b16 %v3913
        %v3990 = vunpack.c.l.b16 %v3914
        %v3991 = vunpack.c.l.b16 %v3915
        %v3992 = vunpack.c.l.b16 %v3916
        %v3993 = vunpack.c.l.b16 %v3917
        %v3994 = vunpack.c.l.b16 %v3918
        %v3995 = vunpack.c.l.b16 %v3919
        %v3996 = vunpack.c.l.b16 %v3920
        %v3997 = vunpack.c.l.b16 %v3921
        %v3998 = vunpack.c.l.b16 %v3922
        %v3999 = vunpack.c.l.b16 %v3923
        %v4000 = vunpack.c.l.b16 %v3924
        %v4001 = vunpack.c.l.b16 %v3925
        %v4002 = vunpack.c.l.b16 %v3926
        %v4003 = vunpack.c.l.b16 %v3927
        %v4004 = vunpack.c.l.b16 %v3928
        %v4005 = vunpack.c.l.b16 %v3929
        %v4006 = vpack.c.b16 %v3971, %v3970
        %v4007 = vpack.c.b16 %v3973, %v3972
        %v4008 = vpack.c.b16 %v3975, %v3974
        %v4009 = vpack.c.b16 %v3977, %v3976
        %v4010 = vpack.c.b16 %v3979, %v3978
        %v4011 = vpack.c.b16 %v3981, %v3980
        %v4012 = vpack.c.b16 %v3983, %v3982
        %v4013 = vpack.c.b16 %v3985, %v3984
        %v4014 = vpack.c.b16 %v3987, %v3986
        %v4015 = vpack.c.b16 %v3989, %v3988
        %v4016 = vpack.c.b16 %v3991, %v3990
        %v4017 = vpack.c.b16 %v3993, %v3992
        %v4018 = vpack.c.b16 %v3995, %v3994
        %v4019 = vpack.c.b16 %v3997, %v3996
        %v4020 = vpack.c.b16 %v3999, %v3998
        %v4021 = vpack.c.b16 %v4001, %v4000
        %v4022 = vpack.c.b16 %v4003, %v4002
        %v4023 = vpack.c.b16 %v4005, %v4004
        %v4043 = vsel %vm2260, %v3848, 0
        %v4046 = vsel %vm2260, %v3851, 0
        %v4049 = vsel %vm2260, %v3854, 0
        %v4052 = vsel %vm2260, %v3857, 0
        %v4055 = vsel %vm2260, %v3860, 0
        %v4058 = vsel %vm2260, %v3863, 0
        %v4061 = vsel %vm2260, %v3866, 0
        %v4064 = vsel %vm2260, %v3869, 0
        %v4067 = vsel %vm2260, %v3872, 0
        %v4070 = vsel %vm2260, %v3875, 0
        %v4073 = vsel %vm2260, %v3878, 0
        %v4076 = vsel %vm2260, %v3881, 0
        %v4079 = vsel %vm2260, %v3884, 0
        %v4082 = vsel %vm2260, %v3887, 0
        %v4085 = vsel %vm2260, %v3890, 0
        %v4088 = vsel %vm2260, %v3893, 0
        %4090 = vmatpush.bf16.msra.mxu0 %v4013
        %4091 = vmatpush.bf16.msra.mxu0 %v4012
        %4092 = vmatpush.bf16.msra.mxu0 %v4011
        %4093 = vmatpush.bf16.msra.mxu0 %v4010
        %4094 = vmatpush.bf16.msra.mxu0 %v4009
        %4095 = vmatpush.bf16.msra.mxu0 %v4008
        %4096 = vmatpush.bf16.msra.mxu0 %v4007
        %4097 = vmatpush.bf16.msra.mxu0 %v4006
        %4098 = vmatmul.bf16.gmra.mxu0 %v3846
        %v4099 = vpop.f32.mrf.mxu0
        %v4100 = vadd.f32 %v3932, %v4099
        %v4101 = vpop.f32.mrf.mxu0
        %v4102 = vadd.f32 %v3932, %v4101
        %4103 = vmatmul.bf16.gmra.mxu0 %v3849
        %v4104 = vpop.f32.mrf.mxu0
        %v4105 = vadd.f32 %v3932, %v4104
        %v4106 = vpop.f32.mrf.mxu0
        %v4107 = vadd.f32 %v3932, %v4106
        %4108 = vmatmul.bf16.gmra.mxu0 %v3852
        %v4109 = vpop.f32.mrf.mxu0
        %v4110 = vadd.f32 %v3932, %v4109
        %v4111 = vpop.f32.mrf.mxu0
        %v4112 = vadd.f32 %v3932, %v4111
        %4113 = vmatmul.bf16.gmra.mxu0 %v3855
        %v4114 = vpop.f32.mrf.mxu0
        %v4115 = vadd.f32 %v3932, %v4114
        %v4116 = vpop.f32.mrf.mxu0
        %v4117 = vadd.f32 %v3932, %v4116
        %4118 = vmatmul.bf16.gmra.mxu0 %v3858
        %v4119 = vpop.f32.mrf.mxu0
        %v4120 = vadd.f32 %v3932, %v4119
        %v4121 = vpop.f32.mrf.mxu0
        %v4122 = vadd.f32 %v3932, %v4121
        %4123 = vmatmul.bf16.gmra.mxu0 %v3861
        %v4124 = vpop.f32.mrf.mxu0
        %v4125 = vadd.f32 %v3932, %v4124
        %v4126 = vpop.f32.mrf.mxu0
        %v4127 = vadd.f32 %v3932, %v4126
        %4128 = vmatmul.bf16.gmra.mxu0 %v3864
        %v4129 = vpop.f32.mrf.mxu0
        %v4130 = vadd.f32 %v3932, %v4129
        %v4131 = vpop.f32.mrf.mxu0
        %v4132 = vadd.f32 %v3932, %v4131
        %4133 = vmatmul.bf16.gmra.mxu0 %v3867
        %v4134 = vpop.f32.mrf.mxu0
        %v4135 = vadd.f32 %v3932, %v4134
        %v4136 = vpop.f32.mrf.mxu0
        %v4137 = vadd.f32 %v3932, %v4136
        %4138 = vmatmul.bf16.gmra.mxu0 %v3870
        %v4139 = vpop.f32.mrf.mxu0
        %v4140 = vadd.f32 %v3932, %v4139
        %v4141 = vpop.f32.mrf.mxu0
        %v4142 = vadd.f32 %v3932, %v4141
        %4143 = vmatmul.bf16.gmra.mxu0 %v3873
        %v4144 = vpop.f32.mrf.mxu0
        %v4145 = vadd.f32 %v3932, %v4144
        %v4146 = vpop.f32.mrf.mxu0
        %v4147 = vadd.f32 %v3932, %v4146
        %4148 = vmatmul.bf16.gmra.mxu0 %v3876
        %v4149 = vpop.f32.mrf.mxu0
        %v4150 = vadd.f32 %v3932, %v4149
        %v4151 = vpop.f32.mrf.mxu0
        %v4152 = vadd.f32 %v3932, %v4151
        %4153 = vmatmul.bf16.gmra.mxu0 %v3879
        %v4154 = vpop.f32.mrf.mxu0
        %v4155 = vadd.f32 %v3932, %v4154
        %v4156 = vpop.f32.mrf.mxu0
        %v4157 = vadd.f32 %v3932, %v4156
        %4158 = vmatmul.bf16.gmra.mxu0 %v3882
        %v4159 = vpop.f32.mrf.mxu0
        %v4160 = vadd.f32 %v3932, %v4159
        %v4161 = vpop.f32.mrf.mxu0
        %v4162 = vadd.f32 %v3932, %v4161
        %4163 = vmatmul.bf16.gmra.mxu0 %v3885
        %v4164 = vpop.f32.mrf.mxu0
        %v4165 = vadd.f32 %v3932, %v4164
        %v4166 = vpop.f32.mrf.mxu0
        %v4167 = vadd.f32 %v3932, %v4166
        %4168 = vmatmul.bf16.gmra.mxu0 %v3888
        %v4169 = vpop.f32.mrf.mxu0
        %v4170 = vadd.f32 %v3932, %v4169
        %v4171 = vpop.f32.mrf.mxu0
        %v4172 = vadd.f32 %v3932, %v4171
        %4173 = vmatmul.bf16.gmra.mxu0 %v3891
        %v4174 = vpop.f32.mrf.mxu0
        %v4175 = vadd.f32 %v3932, %v4174
        %v4176 = vpop.f32.mrf.mxu0
        %v4177 = vadd.f32 %v3932, %v4176
        %4178 = vdwg.mxu0
        %4179 = vmatpush.bf16.msra.mxu0 %v4021
        %4180 = vmatpush.bf16.msra.mxu0 %v4020
        %4181 = vmatpush.bf16.msra.mxu0 %v4019
        %4182 = vmatpush.bf16.msra.mxu0 %v4018
        %4183 = vmatpush.bf16.msra.mxu0 %v4017
        %4184 = vmatpush.bf16.msra.mxu0 %v4016
        %4185 = vmatpush.bf16.msra.mxu0 %v4015
        %4186 = vmatpush.bf16.msra.mxu0 %v4014
        %4187 = vmatmul.bf16.gmra.mxu0 %v3847
        %v4188 = vpop.f32.mrf.mxu0
        %v4189 = vadd.f32 %v4100, %v4188
        %v4190 = vpop.f32.mrf.mxu0
        %v4191 = vadd.f32 %v4102, %v4190
        %4192 = vmatmul.bf16.gmra.mxu0 %v3850
        %v4193 = vpop.f32.mrf.mxu0
        %v4194 = vadd.f32 %v4105, %v4193
        %v4195 = vpop.f32.mrf.mxu0
        %v4196 = vadd.f32 %v4107, %v4195
        %4197 = vmatmul.bf16.gmra.mxu0 %v3853
        %v4198 = vpop.f32.mrf.mxu0
        %v4199 = vadd.f32 %v4110, %v4198
        %v4200 = vpop.f32.mrf.mxu0
        %v4201 = vadd.f32 %v4112, %v4200
        %4202 = vmatmul.bf16.gmra.mxu0 %v3856
        %v4203 = vpop.f32.mrf.mxu0
        %v4204 = vadd.f32 %v4115, %v4203
        %v4205 = vpop.f32.mrf.mxu0
        %v4206 = vadd.f32 %v4117, %v4205
        %4207 = vmatmul.bf16.gmra.mxu0 %v3859
        %v4208 = vpop.f32.mrf.mxu0
        %v4209 = vadd.f32 %v4120, %v4208
        %v4210 = vpop.f32.mrf.mxu0
        %v4211 = vadd.f32 %v4122, %v4210
        %4212 = vmatmul.bf16.gmra.mxu0 %v3862
        %v4213 = vpop.f32.mrf.mxu0
        %v4214 = vadd.f32 %v4125, %v4213
        %v4215 = vpop.f32.mrf.mxu0
        %v4216 = vadd.f32 %v4127, %v4215
        %4217 = vmatmul.bf16.gmra.mxu0 %v3865
        %v4218 = vpop.f32.mrf.mxu0
        %v4219 = vadd.f32 %v4130, %v4218
        %v4220 = vpop.f32.mrf.mxu0
        %v4221 = vadd.f32 %v4132, %v4220
        %4222 = vmatmul.bf16.gmra.mxu0 %v3868
        %v4223 = vpop.f32.mrf.mxu0
        %v4224 = vadd.f32 %v4135, %v4223
        %v4225 = vpop.f32.mrf.mxu0
        %v4226 = vadd.f32 %v4137, %v4225
        %4227 = vmatmul.bf16.gmra.mxu0 %v3871
        %v4228 = vpop.f32.mrf.mxu0
        %v4229 = vadd.f32 %v4140, %v4228
        %v4230 = vpop.f32.mrf.mxu0
        %v4231 = vadd.f32 %v4142, %v4230
        %4232 = vmatmul.bf16.gmra.mxu0 %v3874
        %v4233 = vpop.f32.mrf.mxu0
        %v4234 = vadd.f32 %v4145, %v4233
        %v4235 = vpop.f32.mrf.mxu0
        %v4236 = vadd.f32 %v4147, %v4235
        %4237 = vmatmul.bf16.gmra.mxu0 %v3877
        %v4238 = vpop.f32.mrf.mxu0
        %v4239 = vadd.f32 %v4150, %v4238
        %v4240 = vpop.f32.mrf.mxu0
        %v4241 = vadd.f32 %v4152, %v4240
        %4242 = vmatmul.bf16.gmra.mxu0 %v3880
        %v4243 = vpop.f32.mrf.mxu0
        %v4244 = vadd.f32 %v4155, %v4243
        %v4245 = vpop.f32.mrf.mxu0
        %v4246 = vadd.f32 %v4157, %v4245
        %4247 = vmatmul.bf16.gmra.mxu0 %v3883
        %v4248 = vpop.f32.mrf.mxu0
        %v4249 = vadd.f32 %v4160, %v4248
        %v4250 = vpop.f32.mrf.mxu0
        %v4251 = vadd.f32 %v4162, %v4250
        %4252 = vmatmul.bf16.gmra.mxu0 %v3886
        %v4253 = vpop.f32.mrf.mxu0
        %v4254 = vadd.f32 %v4165, %v4253
        %v4255 = vpop.f32.mrf.mxu0
        %v4256 = vadd.f32 %v4167, %v4255
        %4257 = vmatmul.bf16.gmra.mxu0 %v3889
        %v4258 = vpop.f32.mrf.mxu0
        %v4259 = vadd.f32 %v4170, %v4258
        %v4260 = vpop.f32.mrf.mxu0
        %v4261 = vadd.f32 %v4172, %v4260
        %4262 = vmatmul.bf16.gmra.mxu0 %v3892
        %v4263 = vpop.f32.mrf.mxu0
        %v4264 = vadd.f32 %v4175, %v4263
        %v4265 = vpop.f32.mrf.mxu0
        %v4266 = vadd.f32 %v4177, %v4265
        %4267 = vdwg.mxu0
        %4268 = vmatpush.bf16.msra.mxu0 0
        %4269 = vmatpush.bf16.msra.mxu0 0
        %4270 = vmatpush.bf16.msra.mxu0 0
        %4271 = vmatpush.bf16.msra.mxu0 0
        %4272 = vmatpush.bf16.msra.mxu0 0
        %4273 = vmatpush.bf16.msra.mxu0 0
        %4274 = vmatpush.bf16.msra.mxu0 %v4023
        %4275 = vmatpush.bf16.msra.mxu0 %v4022
        %4276 = vmatmul.bf16.gmra.mxu0 %v4043
        %v4277 = vpop.f32.mrf.mxu0
        %v4278 = vadd.f32 %v4189, %v4277
        %v4279 = vpop.f32.mrf.mxu0
        %v4280 = vadd.f32 %v4191, %v4279
        %4281 = vmatmul.bf16.gmra.mxu0 %v4046
        %v4282 = vpop.f32.mrf.mxu0
        %v4283 = vadd.f32 %v4194, %v4282
        %v4284 = vpop.f32.mrf.mxu0
        %v4285 = vadd.f32 %v4196, %v4284
        %4286 = vmatmul.bf16.gmra.mxu0 %v4049
        %v4287 = vpop.f32.mrf.mxu0
        %v4288 = vadd.f32 %v4199, %v4287
        %v4289 = vpop.f32.mrf.mxu0
        %v4290 = vadd.f32 %v4201, %v4289
        %4291 = vmatmul.bf16.gmra.mxu0 %v4052
        %v4292 = vpop.f32.mrf.mxu0
        %v4293 = vadd.f32 %v4204, %v4292
        %v4294 = vpop.f32.mrf.mxu0
        %v4295 = vadd.f32 %v4206, %v4294
        %4296 = vmatmul.bf16.gmra.mxu0 %v4055
        %v4297 = vpop.f32.mrf.mxu0
        %v4298 = vadd.f32 %v4209, %v4297
        %v4299 = vpop.f32.mrf.mxu0
        %v4300 = vadd.f32 %v4211, %v4299
        %4301 = vmatmul.bf16.gmra.mxu0 %v4058
        %v4302 = vpop.f32.mrf.mxu0
        %v4303 = vadd.f32 %v4214, %v4302
        %v4304 = vpop.f32.mrf.mxu0
        %v4305 = vadd.f32 %v4216, %v4304
        %4306 = vmatmul.bf16.gmra.mxu0 %v4061
        %v4307 = vpop.f32.mrf.mxu0
        %v4308 = vadd.f32 %v4219, %v4307
        %v4309 = vpop.f32.mrf.mxu0
        %v4310 = vadd.f32 %v4221, %v4309
        %4311 = vmatmul.bf16.gmra.mxu0 %v4064
        %v4312 = vpop.f32.mrf.mxu0
        %v4313 = vadd.f32 %v4224, %v4312
        %v4314 = vpop.f32.mrf.mxu0
        %v4315 = vadd.f32 %v4226, %v4314
        %4316 = vmatmul.bf16.gmra.mxu0 %v4067
        %v4317 = vpop.f32.mrf.mxu0
        %v4318 = vadd.f32 %v4229, %v4317
        %v4319 = vpop.f32.mrf.mxu0
        %v4320 = vadd.f32 %v4231, %v4319
        %4321 = vmatmul.bf16.gmra.mxu0 %v4070
        %v4322 = vpop.f32.mrf.mxu0
        %v4323 = vadd.f32 %v4234, %v4322
        %v4324 = vpop.f32.mrf.mxu0
        %v4325 = vadd.f32 %v4236, %v4324
        %4326 = vmatmul.bf16.gmra.mxu0 %v4073
        %v4327 = vpop.f32.mrf.mxu0
        %v4328 = vadd.f32 %v4239, %v4327
        %v4329 = vpop.f32.mrf.mxu0
        %v4330 = vadd.f32 %v4241, %v4329
        %4331 = vmatmul.bf16.gmra.mxu0 %v4076
        %v4332 = vpop.f32.mrf.mxu0
        %v4333 = vadd.f32 %v4244, %v4332
        %v4334 = vpop.f32.mrf.mxu0
        %v4335 = vadd.f32 %v4246, %v4334
        %4336 = vmatmul.bf16.gmra.mxu0 %v4079
        %v4337 = vpop.f32.mrf.mxu0
        %v4338 = vadd.f32 %v4249, %v4337
        %v4339 = vpop.f32.mrf.mxu0
        %v4340 = vadd.f32 %v4251, %v4339
        %4341 = vmatmul.bf16.gmra.mxu0 %v4082
        %v4342 = vpop.f32.mrf.mxu0
        %v4343 = vadd.f32 %v4254, %v4342
        %v4344 = vpop.f32.mrf.mxu0
        %v4345 = vadd.f32 %v4256, %v4344
        %4346 = vmatmul.bf16.gmra.mxu0 %v4085
        %v4347 = vpop.f32.mrf.mxu0
        %v4348 = vadd.f32 %v4259, %v4347
        %v4349 = vpop.f32.mrf.mxu0
        %v4350 = vadd.f32 %v4261, %v4349
        %4351 = vmatmul.bf16.gmra.mxu0 %v4088
        %v4352 = vpop.f32.mrf.mxu0
        %v4353 = vadd.f32 %v4264, %v4352
        %v4354 = vpop.f32.mrf.mxu0
        %v4355 = vadd.f32 %v4266, %v4354
        %4356 = vdwg.mxu0
        %v4357 = vmax.f32 %v4278, 0.0
        %v4358 = vmax.f32 %v4280, 0.0
        %v4359 = vmax.f32 %v4283, 0.0
        %v4360 = vmax.f32 %v4285, 0.0
        %v4361 = vmax.f32 %v4288, 0.0
        %v4362 = vmax.f32 %v4290, 0.0
        %v4363 = vmax.f32 %v4293, 0.0
        %v4364 = vmax.f32 %v4295, 0.0
        %v4365 = vmax.f32 %v4298, 0.0
        %v4366 = vmax.f32 %v4300, 0.0
        %v4367 = vmax.f32 %v4303, 0.0
        %v4368 = vmax.f32 %v4305, 0.0
        %v4369 = vmax.f32 %v4308, 0.0
        %v4370 = vmax.f32 %v4310, 0.0
        %v4371 = vmax.f32 %v4313, 0.0
        %v4372 = vmax.f32 %v4315, 0.0
        %v4373 = vmax.f32 %v4318, 0.0
        %v4374 = vmax.f32 %v4320, 0.0
        %v4375 = vmax.f32 %v4323, 0.0
        %v4376 = vmax.f32 %v4325, 0.0
        %v4377 = vmax.f32 %v4328, 0.0
        %v4378 = vmax.f32 %v4330, 0.0
        %v4379 = vmax.f32 %v4333, 0.0
        %v4380 = vmax.f32 %v4335, 0.0
        %v4381 = vmax.f32 %v4338, 0.0
        %v4382 = vmax.f32 %v4340, 0.0
        %v4383 = vmax.f32 %v4343, 0.0
        %v4384 = vmax.f32 %v4345, 0.0
        %v4385 = vmax.f32 %v4348, 0.0
        %v4386 = vmax.f32 %v4350, 0.0
        %v4387 = vmax.f32 %v4353, 0.0
        %v4388 = vmax.f32 %v4355, 0.0
        %4389 = vst.msk [vmem:[%s2562 + $0x1] sm:$0xff] %vm2260, %v4357
        %4390 = vst.msk [vmem:[%s2562 + $0x9] sm:$0xff] %vm2260, %v4358
        %4391 = vst.msk [vmem:[%s2562 + $0x19] sm:$0xff] %vm2260, %v4359
        %4392 = vst.msk [vmem:[%s2562 + $0x21] sm:$0xff] %vm2260, %v4360
        %4393 = vst.msk [vmem:[%s2562 + $0x31] sm:$0xff] %vm2260, %v4361
        %4394 = vst.msk [vmem:[%s2562 + $0x39] sm:$0xff] %vm2260, %v4362
        %4395 = vst.msk [vmem:[%s2562 + $0x49] sm:$0xff] %vm2260, %v4363
        %4396 = vst.msk [vmem:[%s2562 + $0x51] sm:$0xff] %vm2260, %v4364
        %4397 = vst.msk [vmem:[%s2562 + $0x61] sm:$0xff] %vm2260, %v4365
        %4398 = vst.msk [vmem:[%s2562 + $0x69] sm:$0xff] %vm2260, %v4366
        %4399 = vst.msk [vmem:[%s2562 + $0x79] sm:$0xff] %vm2260, %v4367
        %4400 = vst.msk [vmem:[%s2562 + $0x81] sm:$0xff] %vm2260, %v4368
        %4401 = vst.msk [vmem:[%s2562 + $0x91] sm:$0xff] %vm2260, %v4369
        %4402 = vst.msk [vmem:[%s2562 + $0x99] sm:$0xff] %vm2260, %v4370
        %4403 = vst.msk [vmem:[%s2562 + $0xa9] sm:$0xff] %vm2260, %v4371
        %4404 = vst.msk [vmem:[%s2562 + $0xb1] sm:$0xff] %vm2260, %v4372
        %4405 = vst.msk [vmem:[%s2562 + $0xc1] sm:$0xff] %vm2260, %v4373
        %4406 = vst.msk [vmem:[%s2562 + $0xc9] sm:$0xff] %vm2260, %v4374
        %4407 = vst.msk [vmem:[%s2562 + $0xd9] sm:$0xff] %vm2260, %v4375
        %4408 = vst.msk [vmem:[%s2562 + $0xe1] sm:$0xff] %vm2260, %v4376
        %4409 = vst.msk [vmem:[%s2562 + $0xf1] sm:$0xff] %vm2260, %v4377
        %4410 = vst.msk [vmem:[%s2562 + $0xf9] sm:$0xff] %vm2260, %v4378
        %4411 = vst.msk [vmem:[%s2562 + $0x109] sm:$0xff] %vm2260, %v4379
        %4412 = vst.msk [vmem:[%s2562 + $0x111] sm:$0xff] %vm2260, %v4380
        %4413 = vst.msk [vmem:[%s2562 + $0x121] sm:$0xff] %vm2260, %v4381
        %4414 = vst.msk [vmem:[%s2562 + $0x129] sm:$0xff] %vm2260, %v4382
        %4415 = vst.msk [vmem:[%s2562 + $0x139] sm:$0xff] %vm2260, %v4383
        %4416 = vst.msk [vmem:[%s2562 + $0x141] sm:$0xff] %vm2260, %v4384
        %4417 = vst.msk [vmem:[%s2562 + $0x151] sm:$0xff] %vm2260, %v4385
        %4418 = vst.msk [vmem:[%s2562 + $0x159] sm:$0xff] %vm2260, %v4386
        %4419 = vst.msk [vmem:[%s2562 + $0x169] sm:$0xff] %vm2260, %v4387
        %4420 = vst.msk [vmem:[%s2562 + $0x171] sm:$0xff] %vm2260, %v4388
        %v4421 = vld [vmem:[#allocation3] sm:$0xff]
        %v4422 = vld [vmem:[#allocation3 + $0x8] sm:$0xff]
        %v4423 = vld [vmem:[#allocation3 + $0x18] sm:$0xff]
        %v4424 = vld [vmem:[#allocation3 + $0x20] sm:$0xff]
        %v4425 = vld [vmem:[#allocation3 + $0x30] sm:$0xff]
        %v4426 = vld [vmem:[#allocation3 + $0x38] sm:$0xff]
        %v4427 = vld [vmem:[#allocation3 + $0x48] sm:$0xff]
        %v4428 = vld [vmem:[#allocation3 + $0x50] sm:$0xff]
        %v4429 = vld [vmem:[#allocation3 + $0x60] sm:$0xff]
        %v4430 = vld [vmem:[#allocation3 + $0x68] sm:$0xff]
        %v4431 = vld [vmem:[#allocation3 + $0x78] sm:$0xff]
        %v4432 = vld [vmem:[#allocation3 + $0x80] sm:$0xff]
        %v4433 = vld [vmem:[#allocation3 + $0x90] sm:$0xff]
        %v4434 = vld [vmem:[#allocation3 + $0x98] sm:$0xff]
        %v4435 = vld [vmem:[#allocation3 + $0xa8] sm:$0xff]
        %v4436 = vld [vmem:[#allocation3 + $0xb0] sm:$0xff]
        %v4437 = vld [vmem:[#allocation3 + $0xc0] sm:$0xff]
        %v4438 = vld [vmem:[#allocation3 + $0xc8] sm:$0xff]
        %v4439 = vld [vmem:[#allocation3 + $0xd8] sm:$0xff]
        %v4440 = vld [vmem:[#allocation3 + $0xe0] sm:$0xff]
        %v4441 = vld [vmem:[#allocation3 + $0xf0] sm:$0xff]
        %v4442 = vld [vmem:[#allocation3 + $0xf8] sm:$0xff]
        %v4443 = vld [vmem:[#allocation3 + $0x108] sm:$0xff]
        %v4444 = vld [vmem:[#allocation3 + $0x110] sm:$0xff]
        %v4445 = vld [vmem:[#allocation3 + $0x120] sm:$0xff]
        %v4446 = vld [vmem:[#allocation3 + $0x128] sm:$0xff]
        %v4447 = vld [vmem:[#allocation3 + $0x138] sm:$0xff]
        %v4448 = vld [vmem:[#allocation3 + $0x140] sm:$0xff]
        %v4449 = vld [vmem:[#allocation3 + $0x150] sm:$0xff]
        %v4450 = vld [vmem:[#allocation3 + $0x158] sm:$0xff]
        %v4451 = vld [vmem:[#allocation3 + $0x168] sm:$0xff]
        %v4452 = vld [vmem:[#allocation3 + $0x170] sm:$0xff]
        %v4453 = vld [vmem:[#allocation3 + $0x1] sm:$0xff]
        %v4454 = vld [vmem:[#allocation3 + $0x9] sm:$0xff]
        %v4455 = vld [vmem:[#allocation3 + $0x19] sm:$0xff]
        %v4456 = vld [vmem:[#allocation3 + $0x21] sm:$0xff]
        %v4457 = vld [vmem:[#allocation3 + $0x31] sm:$0xff]
        %v4458 = vld [vmem:[#allocation3 + $0x39] sm:$0xff]
        %v4459 = vld [vmem:[#allocation3 + $0x49] sm:$0xff]
        %v4460 = vld [vmem:[#allocation3 + $0x51] sm:$0xff]
        %v4461 = vld [vmem:[#allocation3 + $0x61] sm:$0xff]
        %v4462 = vld [vmem:[#allocation3 + $0x69] sm:$0xff]
        %v4463 = vld [vmem:[#allocation3 + $0x79] sm:$0xff]
        %v4464 = vld [vmem:[#allocation3 + $0x81] sm:$0xff]
        %v4465 = vld [vmem:[#allocation3 + $0x91] sm:$0xff]
        %v4466 = vld [vmem:[#allocation3 + $0x99] sm:$0xff]
        %v4467 = vld [vmem:[#allocation3 + $0xa9] sm:$0xff]
        %v4468 = vld [vmem:[#allocation3 + $0xb1] sm:$0xff]
        %v4469 = vld [vmem:[#allocation3 + $0xc1] sm:$0xff]
        %v4470 = vld [vmem:[#allocation3 + $0xc9] sm:$0xff]
        %v4471 = vld [vmem:[#allocation3 + $0xd9] sm:$0xff]
        %v4472 = vld [vmem:[#allocation3 + $0xe1] sm:$0xff]
        %v4473 = vld [vmem:[#allocation3 + $0xf1] sm:$0xff]
        %v4474 = vld [vmem:[#allocation3 + $0xf9] sm:$0xff]
        %v4475 = vld [vmem:[#allocation3 + $0x109] sm:$0xff]
        %v4476 = vld [vmem:[#allocation3 + $0x111] sm:$0xff]
        %v4477 = vld [vmem:[#allocation3 + $0x121] sm:$0xff]
        %v4478 = vld [vmem:[#allocation3 + $0x129] sm:$0xff]
        %v4479 = vld [vmem:[#allocation3 + $0x139] sm:$0xff]
        %v4480 = vld [vmem:[#allocation3 + $0x141] sm:$0xff]
        %v4481 = vld [vmem:[#allocation3 + $0x151] sm:$0xff]
        %v4482 = vld [vmem:[#allocation3 + $0x159] sm:$0xff]
        %v4483 = vld [vmem:[#allocation3 + $0x169] sm:$0xff]
        %v4484 = vld [vmem:[#allocation3 + $0x171] sm:$0xff]
        %v4485 = vld [vmem:[#allocation3 + $0x2] sm:$0xff]
        %v4486 = vld [vmem:[#allocation3 + $0xa] sm:$0xff]
        %v4487 = vld [vmem:[#allocation3 + $0x1a] sm:$0xff]
        %v4488 = vld [vmem:[#allocation3 + $0x22] sm:$0xff]
        %v4489 = vld [vmem:[#allocation3 + $0x32] sm:$0xff]
        %v4490 = vld [vmem:[#allocation3 + $0x3a] sm:$0xff]
        %v4491 = vld [vmem:[#allocation3 + $0x4a] sm:$0xff]
        %v4492 = vld [vmem:[#allocation3 + $0x52] sm:$0xff]
        %v4493 = vld [vmem:[#allocation3 + $0x62] sm:$0xff]
        %v4494 = vld [vmem:[#allocation3 + $0x6a] sm:$0xff]
        %v4495 = vld [vmem:[#allocation3 + $0x7a] sm:$0xff]
        %v4496 = vld [vmem:[#allocation3 + $0x82] sm:$0xff]
        %v4497 = vld [vmem:[#allocation3 + $0x92] sm:$0xff]
        %v4498 = vld [vmem:[#allocation3 + $0x9a] sm:$0xff]
        %v4499 = vld [vmem:[#allocation3 + $0xaa] sm:$0xff]
        %v4500 = vld [vmem:[#allocation3 + $0xb2] sm:$0xff]
        %v4501 = vld [vmem:[#allocation3 + $0xc2] sm:$0xff]
        %v4502 = vld [vmem:[#allocation3 + $0xca] sm:$0xff]
        %v4503 = vld [vmem:[#allocation3 + $0xda] sm:$0xff]
        %v4504 = vld [vmem:[#allocation3 + $0xe2] sm:$0xff]
        %v4505 = vld [vmem:[#allocation3 + $0xf2] sm:$0xff]
        %v4506 = vld [vmem:[#allocation3 + $0xfa] sm:$0xff]
        %v4507 = vld [vmem:[#allocation3 + $0x10a] sm:$0xff]
        %v4508 = vld [vmem:[#allocation3 + $0x112] sm:$0xff]
        %v4509 = vld [vmem:[#allocation3 + $0x122] sm:$0xff]
        %v4510 = vld [vmem:[#allocation3 + $0x12a] sm:$0xff]
        %v4511 = vld [vmem:[#allocation3 + $0x13a] sm:$0xff]
        %v4512 = vld [vmem:[#allocation3 + $0x142] sm:$0xff]
        %v4513 = vld [vmem:[#allocation3 + $0x152] sm:$0xff]
        %v4514 = vld [vmem:[#allocation3 + $0x15a] sm:$0xff]
        %v4515 = vld [vmem:[#allocation3 + $0x16a] sm:$0xff]
        %v4516 = vld [vmem:[#allocation3 + $0x172] sm:$0xff]
        %v4517 = vld [vmem:[%s2562] sm:$0xff]
        %v4518 = vld [vmem:[%s2562 + $0x8] sm:$0xff]
        %v4519 = vld [vmem:[%s2562 + $0x18] sm:$0xff]
        %v4520 = vld [vmem:[%s2562 + $0x20] sm:$0xff]
        %v4521 = vld [vmem:[%s2562 + $0x30] sm:$0xff]
        %v4522 = vld [vmem:[%s2562 + $0x38] sm:$0xff]
        %v4523 = vld [vmem:[%s2562 + $0x48] sm:$0xff]
        %v4524 = vld [vmem:[%s2562 + $0x50] sm:$0xff]
        %v4525 = vld [vmem:[%s2562 + $0x60] sm:$0xff]
        %v4526 = vld [vmem:[%s2562 + $0x68] sm:$0xff]
        %v4527 = vld [vmem:[%s2562 + $0x78] sm:$0xff]
        %v4528 = vld [vmem:[%s2562 + $0x80] sm:$0xff]
        %v4529 = vld [vmem:[%s2562 + $0x90] sm:$0xff]
        %v4530 = vld [vmem:[%s2562 + $0x98] sm:$0xff]
        %v4531 = vld [vmem:[%s2562 + $0xa8] sm:$0xff]
        %v4532 = vld [vmem:[%s2562 + $0xb0] sm:$0xff]
        %v4533 = vld [vmem:[%s2562 + $0xc0] sm:$0xff]
        %v4534 = vld [vmem:[%s2562 + $0xc8] sm:$0xff]
        %v4535 = vld [vmem:[%s2562 + $0xd8] sm:$0xff]
        %v4536 = vld [vmem:[%s2562 + $0xe0] sm:$0xff]
        %v4537 = vld [vmem:[%s2562 + $0xf0] sm:$0xff]
        %v4538 = vld [vmem:[%s2562 + $0xf8] sm:$0xff]
        %v4539 = vld [vmem:[%s2562 + $0x108] sm:$0xff]
        %v4540 = vld [vmem:[%s2562 + $0x110] sm:$0xff]
        %v4541 = vld [vmem:[%s2562 + $0x120] sm:$0xff]
        %v4542 = vld [vmem:[%s2562 + $0x128] sm:$0xff]
        %v4543 = vld [vmem:[%s2562 + $0x138] sm:$0xff]
        %v4544 = vld [vmem:[%s2562 + $0x140] sm:$0xff]
        %v4545 = vld [vmem:[%s2562 + $0x150] sm:$0xff]
        %v4546 = vld [vmem:[%s2562 + $0x158] sm:$0xff]
        %v4547 = vld [vmem:[%s2562 + $0x168] sm:$0xff]
        %v4548 = vld [vmem:[%s2562 + $0x170] sm:$0xff]
        %v4549 = vld [vmem:[%s2562 + $0x1] sm:$0xff]
        %v4550 = vld [vmem:[%s2562 + $0x9] sm:$0xff]
        %v4551 = vld [vmem:[%s2562 + $0x19] sm:$0xff]
        %v4552 = vld [vmem:[%s2562 + $0x21] sm:$0xff]
        %v4553 = vld [vmem:[%s2562 + $0x31] sm:$0xff]
        %v4554 = vld [vmem:[%s2562 + $0x39] sm:$0xff]
        %v4555 = vld [vmem:[%s2562 + $0x49] sm:$0xff]
        %v4556 = vld [vmem:[%s2562 + $0x51] sm:$0xff]
        %v4557 = vld [vmem:[%s2562 + $0x61] sm:$0xff]
        %v4558 = vld [vmem:[%s2562 + $0x69] sm:$0xff]
        %v4559 = vld [vmem:[%s2562 + $0x79] sm:$0xff]
        %v4560 = vld [vmem:[%s2562 + $0x81] sm:$0xff]
        %v4561 = vld [vmem:[%s2562 + $0x91] sm:$0xff]
        %v4562 = vld [vmem:[%s2562 + $0x99] sm:$0xff]
        %v4563 = vld [vmem:[%s2562 + $0xa9] sm:$0xff]
        %v4564 = vld [vmem:[%s2562 + $0xb1] sm:$0xff]
        %v4565 = vld [vmem:[%s2562 + $0xc1] sm:$0xff]
        %v4566 = vld [vmem:[%s2562 + $0xc9] sm:$0xff]
        %v4567 = vld [vmem:[%s2562 + $0xd9] sm:$0xff]
        %v4568 = vld [vmem:[%s2562 + $0xe1] sm:$0xff]
        %v4569 = vld [vmem:[%s2562 + $0xf1] sm:$0xff]
        %v4570 = vld [vmem:[%s2562 + $0xf9] sm:$0xff]
        %v4571 = vld [vmem:[%s2562 + $0x109] sm:$0xff]
        %v4572 = vld [vmem:[%s2562 + $0x111] sm:$0xff]
        %v4573 = vld [vmem:[%s2562 + $0x121] sm:$0xff]
        %v4574 = vld [vmem:[%s2562 + $0x129] sm:$0xff]
        %v4575 = vld [vmem:[%s2562 + $0x139] sm:$0xff]
        %v4576 = vld [vmem:[%s2562 + $0x141] sm:$0xff]
        %v4577 = vld [vmem:[%s2562 + $0x151] sm:$0xff]
        %v4578 = vld [vmem:[%s2562 + $0x159] sm:$0xff]
        %v4579 = vld [vmem:[%s2562 + $0x169] sm:$0xff]
        %v4580 = vld [vmem:[%s2562 + $0x171] sm:$0xff]
        %v4581 = vld [vmem:[%s2562 + $0x2] sm:$0xff]
        %v4582 = vld [vmem:[%s2562 + $0xa] sm:$0xff]
        %v4583 = vld [vmem:[%s2562 + $0x1a] sm:$0xff]
        %v4584 = vld [vmem:[%s2562 + $0x22] sm:$0xff]
        %v4585 = vld [vmem:[%s2562 + $0x32] sm:$0xff]
        %v4586 = vld [vmem:[%s2562 + $0x3a] sm:$0xff]
        %v4587 = vld [vmem:[%s2562 + $0x4a] sm:$0xff]
        %v4588 = vld [vmem:[%s2562 + $0x52] sm:$0xff]
        %v4589 = vld [vmem:[%s2562 + $0x62] sm:$0xff]
        %v4590 = vld [vmem:[%s2562 + $0x6a] sm:$0xff]
        %v4591 = vld [vmem:[%s2562 + $0x7a] sm:$0xff]
        %v4592 = vld [vmem:[%s2562 + $0x82] sm:$0xff]
        %v4593 = vld [vmem:[%s2562 + $0x92] sm:$0xff]
        %v4594 = vld [vmem:[%s2562 + $0x9a] sm:$0xff]
        %v4595 = vld [vmem:[%s2562 + $0xaa] sm:$0xff]
        %v4596 = vld [vmem:[%s2562 + $0xb2] sm:$0xff]
        %v4597 = vld [vmem:[%s2562 + $0xc2] sm:$0xff]
        %v4598 = vld [vmem:[%s2562 + $0xca] sm:$0xff]
        %v4599 = vld [vmem:[%s2562 + $0xda] sm:$0xff]
        %v4600 = vld [vmem:[%s2562 + $0xe2] sm:$0xff]
        %v4601 = vld [vmem:[%s2562 + $0xf2] sm:$0xff]
        %v4602 = vld [vmem:[%s2562 + $0xfa] sm:$0xff]
        %v4603 = vld [vmem:[%s2562 + $0x10a] sm:$0xff]
        %v4604 = vld [vmem:[%s2562 + $0x112] sm:$0xff]
        %v4605 = vld [vmem:[%s2562 + $0x122] sm:$0xff]
        %v4606 = vld [vmem:[%s2562 + $0x12a] sm:$0xff]
        %v4607 = vld [vmem:[%s2562 + $0x13a] sm:$0xff]
        %v4608 = vld [vmem:[%s2562 + $0x142] sm:$0xff]
        %v4609 = vld [vmem:[%s2562 + $0x152] sm:$0xff]
        %v4610 = vld [vmem:[%s2562 + $0x15a] sm:$0xff]
        %v4611 = vld [vmem:[%s2562 + $0x16a] sm:$0xff]
        %v4612 = vld [vmem:[%s2562 + $0x172] sm:$0xff]
        %v4613 = vld [vmem:[%s2787] sm:$0xff]
        %v4614 = vld [vmem:[%s2787 + $0x8] sm:$0xff]
        %v4615 = vld [vmem:[%s2787 + $0x18] sm:$0xff]
        %v4616 = vld [vmem:[%s2787 + $0x20] sm:$0xff]
        %v4617 = vld [vmem:[%s2787 + $0x30] sm:$0xff]
        %v4618 = vld [vmem:[%s2787 + $0x38] sm:$0xff]
        %v4619 = vld [vmem:[%s2787 + $0x48] sm:$0xff]
        %v4620 = vld [vmem:[%s2787 + $0x50] sm:$0xff]
        %v4621 = vld [vmem:[%s2787 + $0x60] sm:$0xff]
        %v4622 = vld [vmem:[%s2787 + $0x68] sm:$0xff]
        %v4623 = vld [vmem:[%s2787 + $0x78] sm:$0xff]
        %v4624 = vld [vmem:[%s2787 + $0x80] sm:$0xff]
        %v4625 = vld [vmem:[%s2787 + $0x90] sm:$0xff]
        %v4626 = vld [vmem:[%s2787 + $0x98] sm:$0xff]
        %v4627 = vld [vmem:[%s2787 + $0xa8] sm:$0xff]
        %v4628 = vld [vmem:[%s2787 + $0xb0] sm:$0xff]
        %v4629 = vld [vmem:[%s2787 + $0xc0] sm:$0xff]
        %v4630 = vld [vmem:[%s2787 + $0xc8] sm:$0xff]
        %v4631 = vld [vmem:[%s2787 + $0xd8] sm:$0xff]
        %v4632 = vld [vmem:[%s2787 + $0xe0] sm:$0xff]
        %v4633 = vld [vmem:[%s2787 + $0xf0] sm:$0xff]
        %v4634 = vld [vmem:[%s2787 + $0xf8] sm:$0xff]
        %v4635 = vld [vmem:[%s2787 + $0x108] sm:$0xff]
        %v4636 = vld [vmem:[%s2787 + $0x110] sm:$0xff]
        %v4637 = vld [vmem:[%s2787 + $0x120] sm:$0xff]
        %v4638 = vld [vmem:[%s2787 + $0x128] sm:$0xff]
        %v4639 = vld [vmem:[%s2787 + $0x138] sm:$0xff]
        %v4640 = vld [vmem:[%s2787 + $0x140] sm:$0xff]
        %v4641 = vld [vmem:[%s2787 + $0x150] sm:$0xff]
        %v4642 = vld [vmem:[%s2787 + $0x158] sm:$0xff]
        %v4643 = vld [vmem:[%s2787 + $0x168] sm:$0xff]
        %v4644 = vld [vmem:[%s2787 + $0x170] sm:$0xff]
        %v4645 = vld [vmem:[%s2787 + $0x1] sm:$0xff]
        %v4646 = vld [vmem:[%s2787 + $0x9] sm:$0xff]
        %v4647 = vld [vmem:[%s2787 + $0x19] sm:$0xff]
        %v4648 = vld [vmem:[%s2787 + $0x21] sm:$0xff]
        %v4649 = vld [vmem:[%s2787 + $0x31] sm:$0xff]
        %v4650 = vld [vmem:[%s2787 + $0x39] sm:$0xff]
        %v4651 = vld [vmem:[%s2787 + $0x49] sm:$0xff]
        %v4652 = vld [vmem:[%s2787 + $0x51] sm:$0xff]
        %v4653 = vld [vmem:[%s2787 + $0x61] sm:$0xff]
        %v4654 = vld [vmem:[%s2787 + $0x69] sm:$0xff]
        %v4655 = vld [vmem:[%s2787 + $0x79] sm:$0xff]
        %v4656 = vld [vmem:[%s2787 + $0x81] sm:$0xff]
        %v4657 = vld [vmem:[%s2787 + $0x91] sm:$0xff]
        %v4658 = vld [vmem:[%s2787 + $0x99] sm:$0xff]
        %v4659 = vld [vmem:[%s2787 + $0xa9] sm:$0xff]
        %v4660 = vld [vmem:[%s2787 + $0xb1] sm:$0xff]
        %v4661 = vld [vmem:[%s2787 + $0xc1] sm:$0xff]
        %v4662 = vld [vmem:[%s2787 + $0xc9] sm:$0xff]
        %v4663 = vld [vmem:[%s2787 + $0xd9] sm:$0xff]
        %v4664 = vld [vmem:[%s2787 + $0xe1] sm:$0xff]
        %v4665 = vld [vmem:[%s2787 + $0xf1] sm:$0xff]
        %v4666 = vld [vmem:[%s2787 + $0xf9] sm:$0xff]
        %v4667 = vld [vmem:[%s2787 + $0x109] sm:$0xff]
        %v4668 = vld [vmem:[%s2787 + $0x111] sm:$0xff]
        %v4669 = vld [vmem:[%s2787 + $0x121] sm:$0xff]
        %v4670 = vld [vmem:[%s2787 + $0x129] sm:$0xff]
        %v4671 = vld [vmem:[%s2787 + $0x139] sm:$0xff]
        %v4672 = vld [vmem:[%s2787 + $0x141] sm:$0xff]
        %v4673 = vld [vmem:[%s2787 + $0x151] sm:$0xff]
        %v4674 = vld [vmem:[%s2787 + $0x159] sm:$0xff]
        %v4675 = vld [vmem:[%s2787 + $0x169] sm:$0xff]
        %v4676 = vld [vmem:[%s2787 + $0x171] sm:$0xff]
        %v4677 = vld [vmem:[%s2787 + $0x2] sm:$0xff]
        %v4678 = vld [vmem:[%s2787 + $0xa] sm:$0xff]
        %v4679 = vld [vmem:[%s2787 + $0x1a] sm:$0xff]
        %v4680 = vld [vmem:[%s2787 + $0x22] sm:$0xff]
        %v4681 = vld [vmem:[%s2787 + $0x32] sm:$0xff]
        %v4682 = vld [vmem:[%s2787 + $0x3a] sm:$0xff]
        %v4683 = vld [vmem:[%s2787 + $0x4a] sm:$0xff]
        %v4684 = vld [vmem:[%s2787 + $0x52] sm:$0xff]
        %v4685 = vld [vmem:[%s2787 + $0x62] sm:$0xff]
        %v4686 = vld [vmem:[%s2787 + $0x6a] sm:$0xff]
        %v4687 = vld [vmem:[%s2787 + $0x7a] sm:$0xff]
        %v4688 = vld [vmem:[%s2787 + $0x82] sm:$0xff]
        %v4689 = vld [vmem:[%s2787 + $0x92] sm:$0xff]
        %v4690 = vld [vmem:[%s2787 + $0x9a] sm:$0xff]
        %v4691 = vld [vmem:[%s2787 + $0xaa] sm:$0xff]
        %v4692 = vld [vmem:[%s2787 + $0xb2] sm:$0xff]
        %v4693 = vld [vmem:[%s2787 + $0xc2] sm:$0xff]
        %v4694 = vld [vmem:[%s2787 + $0xca] sm:$0xff]
        %v4695 = vld [vmem:[%s2787 + $0xda] sm:$0xff]
        %v4696 = vld [vmem:[%s2787 + $0xe2] sm:$0xff]
        %v4697 = vld [vmem:[%s2787 + $0xf2] sm:$0xff]
        %v4698 = vld [vmem:[%s2787 + $0xfa] sm:$0xff]
        %v4699 = vld [vmem:[%s2787 + $0x10a] sm:$0xff]
        %v4700 = vld [vmem:[%s2787 + $0x112] sm:$0xff]
        %v4701 = vld [vmem:[%s2787 + $0x122] sm:$0xff]
        %v4702 = vld [vmem:[%s2787 + $0x12a] sm:$0xff]
        %v4703 = vld [vmem:[%s2787 + $0x13a] sm:$0xff]
        %v4704 = vld [vmem:[%s2787 + $0x142] sm:$0xff]
        %v4705 = vld [vmem:[%s2787 + $0x152] sm:$0xff]
        %v4706 = vld [vmem:[%s2787 + $0x15a] sm:$0xff]
        %v4707 = vld [vmem:[%s2787 + $0x16a] sm:$0xff]
        %v4708 = vld [vmem:[%s2787 + $0x172] sm:$0xff]
        %4741 = vrot.lane.b32.xlu0 %v4453, 32
        %v4742 = vpop.permute.xlu0 %4741
        %4743 = vrot.lane.b32.xlu0 %v4454, 32
        %v4744 = vpop.permute.xlu0 %4743
        %4745 = vrot.lane.b32.xlu0 %v4455, 32
        %v4746 = vpop.permute.xlu0 %4745
        %4747 = vrot.lane.b32.xlu0 %v4456, 32
        %v4748 = vpop.permute.xlu0 %4747
        %4749 = vrot.lane.b32.xlu0 %v4457, 32
        %v4750 = vpop.permute.xlu0 %4749
        %4751 = vrot.lane.b32.xlu0 %v4458, 32
        %v4752 = vpop.permute.xlu0 %4751
        %4753 = vrot.lane.b32.xlu0 %v4459, 32
        %v4754 = vpop.permute.xlu0 %4753
        %4755 = vrot.lane.b32.xlu0 %v4460, 32
        %v4756 = vpop.permute.xlu0 %4755
        %4757 = vrot.lane.b32.xlu0 %v4461, 32
        %v4758 = vpop.permute.xlu0 %4757
        %4759 = vrot.lane.b32.xlu0 %v4462, 32
        %v4760 = vpop.permute.xlu0 %4759
        %4761 = vrot.lane.b32.xlu0 %v4463, 32
        %v4762 = vpop.permute.xlu0 %4761
        %4763 = vrot.lane.b32.xlu0 %v4464, 32
        %v4764 = vpop.permute.xlu0 %4763
        %4765 = vrot.lane.b32.xlu0 %v4465, 32
        %v4766 = vpop.permute.xlu0 %4765
        %4767 = vrot.lane.b32.xlu0 %v4466, 32
        %v4768 = vpop.permute.xlu0 %4767
        %4769 = vrot.lane.b32.xlu0 %v4467, 32
        %v4770 = vpop.permute.xlu0 %4769
        %4771 = vrot.lane.b32.xlu0 %v4468, 32
        %v4772 = vpop.permute.xlu0 %4771
        %4773 = vrot.lane.b32.xlu0 %v4469, 32
        %v4774 = vpop.permute.xlu0 %4773
        %4775 = vrot.lane.b32.xlu0 %v4470, 32
        %v4776 = vpop.permute.xlu0 %4775
        %4777 = vrot.lane.b32.xlu0 %v4471, 32
        %v4778 = vpop.permute.xlu0 %4777
        %4779 = vrot.lane.b32.xlu0 %v4472, 32
        %v4780 = vpop.permute.xlu0 %4779
        %4781 = vrot.lane.b32.xlu0 %v4473, 32
        %v4782 = vpop.permute.xlu0 %4781
        %4783 = vrot.lane.b32.xlu0 %v4474, 32
        %v4784 = vpop.permute.xlu0 %4783
        %4785 = vrot.lane.b32.xlu0 %v4475, 32
        %v4786 = vpop.permute.xlu0 %4785
        %4787 = vrot.lane.b32.xlu0 %v4476, 32
        %v4788 = vpop.permute.xlu0 %4787
        %4789 = vrot.lane.b32.xlu0 %v4477, 32
        %v4790 = vpop.permute.xlu0 %4789
        %4791 = vrot.lane.b32.xlu0 %v4478, 32
        %v4792 = vpop.permute.xlu0 %4791
        %4793 = vrot.lane.b32.xlu0 %v4479, 32
        %v4794 = vpop.permute.xlu0 %4793
        %4795 = vrot.lane.b32.xlu0 %v4480, 32
        %v4796 = vpop.permute.xlu0 %4795
        %4797 = vrot.lane.b32.xlu0 %v4481, 32
        %v4798 = vpop.permute.xlu0 %4797
        %4799 = vrot.lane.b32.xlu0 %v4482, 32
        %v4800 = vpop.permute.xlu0 %4799
        %4801 = vrot.lane.b32.xlu0 %v4483, 32
        %v4802 = vpop.permute.xlu0 %4801
        %4803 = vrot.lane.b32.xlu0 %v4484, 32
        %v4804 = vpop.permute.xlu0 %4803
        %4869 = vrot.lane.b32.xlu0 %v4485, 64
        %v4870 = vpop.permute.xlu0 %4869
        %4871 = vrot.lane.b32.xlu0 %v4486, 64
        %v4872 = vpop.permute.xlu0 %4871
        %4873 = vrot.lane.b32.xlu0 %v4487, 64
        %v4874 = vpop.permute.xlu0 %4873
        %4875 = vrot.lane.b32.xlu0 %v4488, 64
        %v4876 = vpop.permute.xlu0 %4875
        %4877 = vrot.lane.b32.xlu0 %v4489, 64
        %v4878 = vpop.permute.xlu0 %4877
        %4879 = vrot.lane.b32.xlu0 %v4490, 64
        %v4880 = vpop.permute.xlu0 %4879
        %4881 = vrot.lane.b32.xlu0 %v4491, 64
        %v4882 = vpop.permute.xlu0 %4881
        %4883 = vrot.lane.b32.xlu0 %v4492, 64
        %v4884 = vpop.permute.xlu0 %4883
        %4885 = vrot.lane.b32.xlu0 %v4493, 64
        %v4886 = vpop.permute.xlu0 %4885
        %4887 = vrot.lane.b32.xlu0 %v4494, 64
        %v4888 = vpop.permute.xlu0 %4887
        %4889 = vrot.lane.b32.xlu0 %v4495, 64
        %v4890 = vpop.permute.xlu0 %4889
        %4891 = vrot.lane.b32.xlu0 %v4496, 64
        %v4892 = vpop.permute.xlu0 %4891
        %4893 = vrot.lane.b32.xlu0 %v4497, 64
        %v4894 = vpop.permute.xlu0 %4893
        %4895 = vrot.lane.b32.xlu0 %v4498, 64
        %v4896 = vpop.permute.xlu0 %4895
        %4897 = vrot.lane.b32.xlu0 %v4499, 64
        %v4898 = vpop.permute.xlu0 %4897
        %4899 = vrot.lane.b32.xlu0 %v4500, 64
        %v4900 = vpop.permute.xlu0 %4899
        %4901 = vrot.lane.b32.xlu0 %v4501, 64
        %v4902 = vpop.permute.xlu0 %4901
        %4903 = vrot.lane.b32.xlu0 %v4502, 64
        %v4904 = vpop.permute.xlu0 %4903
        %4905 = vrot.lane.b32.xlu0 %v4503, 64
        %v4906 = vpop.permute.xlu0 %4905
        %4907 = vrot.lane.b32.xlu0 %v4504, 64
        %v4908 = vpop.permute.xlu0 %4907
        %4909 = vrot.lane.b32.xlu0 %v4505, 64
        %v4910 = vpop.permute.xlu0 %4909
        %4911 = vrot.lane.b32.xlu0 %v4506, 64
        %v4912 = vpop.permute.xlu0 %4911
        %4913 = vrot.lane.b32.xlu0 %v4507, 64
        %v4914 = vpop.permute.xlu0 %4913
        %4915 = vrot.lane.b32.xlu0 %v4508, 64
        %v4916 = vpop.permute.xlu0 %4915
        %4917 = vrot.lane.b32.xlu0 %v4509, 64
        %v4918 = vpop.permute.xlu0 %4917
        %4919 = vrot.lane.b32.xlu0 %v4510, 64
        %v4920 = vpop.permute.xlu0 %4919
        %4921 = vrot.lane.b32.xlu0 %v4511, 64
        %v4922 = vpop.permute.xlu0 %4921
        %4923 = vrot.lane.b32.xlu0 %v4512, 64
        %v4924 = vpop.permute.xlu0 %4923
        %4925 = vrot.lane.b32.xlu0 %v4513, 64
        %v4926 = vpop.permute.xlu0 %4925
        %4927 = vrot.lane.b32.xlu0 %v4514, 64
        %v4928 = vpop.permute.xlu0 %4927
        %4929 = vrot.lane.b32.xlu0 %v4515, 64
        %v4930 = vpop.permute.xlu0 %4929
        %4931 = vrot.lane.b32.xlu0 %v4516, 64
        %v4932 = vpop.permute.xlu0 %4931
        %4997 = vrot.lane.b32.xlu0 %v4517, 96
        %v4998 = vpop.permute.xlu0 %4997
        %4999 = vrot.lane.b32.xlu0 %v4518, 96
        %v5000 = vpop.permute.xlu0 %4999
        %5001 = vrot.lane.b32.xlu0 %v4519, 96
        %v5002 = vpop.permute.xlu0 %5001
        %5003 = vrot.lane.b32.xlu0 %v4520, 96
        %v5004 = vpop.permute.xlu0 %5003
        %5005 = vrot.lane.b32.xlu0 %v4521, 96
        %v5006 = vpop.permute.xlu0 %5005
        %5007 = vrot.lane.b32.xlu0 %v4522, 96
        %v5008 = vpop.permute.xlu0 %5007
        %5009 = vrot.lane.b32.xlu0 %v4523, 96
        %v5010 = vpop.permute.xlu0 %5009
        %5011 = vrot.lane.b32.xlu0 %v4524, 96
        %v5012 = vpop.permute.xlu0 %5011
        %5013 = vrot.lane.b32.xlu0 %v4525, 96
        %v5014 = vpop.permute.xlu0 %5013
        %5015 = vrot.lane.b32.xlu0 %v4526, 96
        %v5016 = vpop.permute.xlu0 %5015
        %5017 = vrot.lane.b32.xlu0 %v4527, 96
        %v5018 = vpop.permute.xlu0 %5017
        %5019 = vrot.lane.b32.xlu0 %v4528, 96
        %v5020 = vpop.permute.xlu0 %5019
        %5021 = vrot.lane.b32.xlu0 %v4529, 96
        %v5022 = vpop.permute.xlu0 %5021
        %5023 = vrot.lane.b32.xlu0 %v4530, 96
        %v5024 = vpop.permute.xlu0 %5023
        %5025 = vrot.lane.b32.xlu0 %v4531, 96
        %v5026 = vpop.permute.xlu0 %5025
        %5027 = vrot.lane.b32.xlu0 %v4532, 96
        %v5028 = vpop.permute.xlu0 %5027
        %5029 = vrot.lane.b32.xlu0 %v4533, 96
        %v5030 = vpop.permute.xlu0 %5029
        %5031 = vrot.lane.b32.xlu0 %v4534, 96
        %v5032 = vpop.permute.xlu0 %5031
        %5033 = vrot.lane.b32.xlu0 %v4535, 96
        %v5034 = vpop.permute.xlu0 %5033
        %5035 = vrot.lane.b32.xlu0 %v4536, 96
        %v5036 = vpop.permute.xlu0 %5035
        %5037 = vrot.lane.b32.xlu0 %v4537, 96
        %v5038 = vpop.permute.xlu0 %5037
        %5039 = vrot.lane.b32.xlu0 %v4538, 96
        %v5040 = vpop.permute.xlu0 %5039
        %5041 = vrot.lane.b32.xlu0 %v4539, 96
        %v5042 = vpop.permute.xlu0 %5041
        %5043 = vrot.lane.b32.xlu0 %v4540, 96
        %v5044 = vpop.permute.xlu0 %5043
        %5045 = vrot.lane.b32.xlu0 %v4541, 96
        %v5046 = vpop.permute.xlu0 %5045
        %5047 = vrot.lane.b32.xlu0 %v4542, 96
        %v5048 = vpop.permute.xlu0 %5047
        %5049 = vrot.lane.b32.xlu0 %v4543, 96
        %v5050 = vpop.permute.xlu0 %5049
        %5051 = vrot.lane.b32.xlu0 %v4544, 96
        %v5052 = vpop.permute.xlu0 %5051
        %5053 = vrot.lane.b32.xlu0 %v4545, 96
        %v5054 = vpop.permute.xlu0 %5053
        %5055 = vrot.lane.b32.xlu0 %v4546, 96
        %v5056 = vpop.permute.xlu0 %5055
        %5057 = vrot.lane.b32.xlu0 %v4547, 96
        %v5058 = vpop.permute.xlu0 %5057
        %5059 = vrot.lane.b32.xlu0 %v4548, 96
        %v5060 = vpop.permute.xlu0 %5059
        %5125 = vrot.lane.b32.xlu0 %v4581, 32
        %v5126 = vpop.permute.xlu0 %5125
        %5127 = vrot.lane.b32.xlu0 %v4582, 32
        %v5128 = vpop.permute.xlu0 %5127
        %5129 = vrot.lane.b32.xlu0 %v4583, 32
        %v5130 = vpop.permute.xlu0 %5129
        %5131 = vrot.lane.b32.xlu0 %v4584, 32
        %v5132 = vpop.permute.xlu0 %5131
        %5133 = vrot.lane.b32.xlu0 %v4585, 32
        %v5134 = vpop.permute.xlu0 %5133
        %5135 = vrot.lane.b32.xlu0 %v4586, 32
        %v5136 = vpop.permute.xlu0 %5135
        %5137 = vrot.lane.b32.xlu0 %v4587, 32
        %v5138 = vpop.permute.xlu0 %5137
        %5139 = vrot.lane.b32.xlu0 %v4588, 32
        %v5140 = vpop.permute.xlu0 %5139
        %5141 = vrot.lane.b32.xlu0 %v4589, 32
        %v5142 = vpop.permute.xlu0 %5141
        %5143 = vrot.lane.b32.xlu0 %v4590, 32
        %v5144 = vpop.permute.xlu0 %5143
        %5145 = vrot.lane.b32.xlu0 %v4591, 32
        %v5146 = vpop.permute.xlu0 %5145
        %5147 = vrot.lane.b32.xlu0 %v4592, 32
        %v5148 = vpop.permute.xlu0 %5147
        %5149 = vrot.lane.b32.xlu0 %v4593, 32
        %v5150 = vpop.permute.xlu0 %5149
        %5151 = vrot.lane.b32.xlu0 %v4594, 32
        %v5152 = vpop.permute.xlu0 %5151
        %5153 = vrot.lane.b32.xlu0 %v4595, 32
        %v5154 = vpop.permute.xlu0 %5153
        %5155 = vrot.lane.b32.xlu0 %v4596, 32
        %v5156 = vpop.permute.xlu0 %5155
        %5157 = vrot.lane.b32.xlu0 %v4597, 32
        %v5158 = vpop.permute.xlu0 %5157
        %5159 = vrot.lane.b32.xlu0 %v4598, 32
        %v5160 = vpop.permute.xlu0 %5159
        %5161 = vrot.lane.b32.xlu0 %v4599, 32
        %v5162 = vpop.permute.xlu0 %5161
        %5163 = vrot.lane.b32.xlu0 %v4600, 32
        %v5164 = vpop.permute.xlu0 %5163
        %5165 = vrot.lane.b32.xlu0 %v4601, 32
        %v5166 = vpop.permute.xlu0 %5165
        %5167 = vrot.lane.b32.xlu0 %v4602, 32
        %v5168 = vpop.permute.xlu0 %5167
        %5169 = vrot.lane.b32.xlu0 %v4603, 32
        %v5170 = vpop.permute.xlu0 %5169
        %5171 = vrot.lane.b32.xlu0 %v4604, 32
        %v5172 = vpop.permute.xlu0 %5171
        %5173 = vrot.lane.b32.xlu0 %v4605, 32
        %v5174 = vpop.permute.xlu0 %5173
        %5175 = vrot.lane.b32.xlu0 %v4606, 32
        %v5176 = vpop.permute.xlu0 %5175
        %5177 = vrot.lane.b32.xlu0 %v4607, 32
        %v5178 = vpop.permute.xlu0 %5177
        %5179 = vrot.lane.b32.xlu0 %v4608, 32
        %v5180 = vpop.permute.xlu0 %5179
        %5181 = vrot.lane.b32.xlu0 %v4609, 32
        %v5182 = vpop.permute.xlu0 %5181
        %5183 = vrot.lane.b32.xlu0 %v4610, 32
        %v5184 = vpop.permute.xlu0 %5183
        %5185 = vrot.lane.b32.xlu0 %v4611, 32
        %v5186 = vpop.permute.xlu0 %5185
        %5187 = vrot.lane.b32.xlu0 %v4612, 32
        %v5188 = vpop.permute.xlu0 %5187
        %5253 = vrot.lane.b32.xlu0 %v4613, 64
        %v5254 = vpop.permute.xlu0 %5253
        %5255 = vrot.lane.b32.xlu0 %v4614, 64
        %v5256 = vpop.permute.xlu0 %5255
        %5257 = vrot.lane.b32.xlu0 %v4615, 64
        %v5258 = vpop.permute.xlu0 %5257
        %5259 = vrot.lane.b32.xlu0 %v4616, 64
        %v5260 = vpop.permute.xlu0 %5259
        %5261 = vrot.lane.b32.xlu0 %v4617, 64
        %v5262 = vpop.permute.xlu0 %5261
        %5263 = vrot.lane.b32.xlu0 %v4618, 64
        %v5264 = vpop.permute.xlu0 %5263
        %5265 = vrot.lane.b32.xlu0 %v4619, 64
        %v5266 = vpop.permute.xlu0 %5265
        %5267 = vrot.lane.b32.xlu0 %v4620, 64
        %v5268 = vpop.permute.xlu0 %5267
        %5269 = vrot.lane.b32.xlu0 %v4621, 64
        %v5270 = vpop.permute.xlu0 %5269
        %5271 = vrot.lane.b32.xlu0 %v4622, 64
        %v5272 = vpop.permute.xlu0 %5271
        %5273 = vrot.lane.b32.xlu0 %v4623, 64
        %v5274 = vpop.permute.xlu0 %5273
        %5275 = vrot.lane.b32.xlu0 %v4624, 64
        %v5276 = vpop.permute.xlu0 %5275
        %5277 = vrot.lane.b32.xlu0 %v4625, 64
        %v5278 = vpop.permute.xlu0 %5277
        %5279 = vrot.lane.b32.xlu0 %v4626, 64
        %v5280 = vpop.permute.xlu0 %5279
        %5281 = vrot.lane.b32.xlu0 %v4627, 64
        %v5282 = vpop.permute.xlu0 %5281
        %5283 = vrot.lane.b32.xlu0 %v4628, 64
        %v5284 = vpop.permute.xlu0 %5283
        %5285 = vrot.lane.b32.xlu0 %v4629, 64
        %v5286 = vpop.permute.xlu0 %5285
        %5287 = vrot.lane.b32.xlu0 %v4630, 64
        %v5288 = vpop.permute.xlu0 %5287
        %5289 = vrot.lane.b32.xlu0 %v4631, 64
        %v5290 = vpop.permute.xlu0 %5289
        %5291 = vrot.lane.b32.xlu0 %v4632, 64
        %v5292 = vpop.permute.xlu0 %5291
        %5293 = vrot.lane.b32.xlu0 %v4633, 64
        %v5294 = vpop.permute.xlu0 %5293
        %5295 = vrot.lane.b32.xlu0 %v4634, 64
        %v5296 = vpop.permute.xlu0 %5295
        %5297 = vrot.lane.b32.xlu0 %v4635, 64
        %v5298 = vpop.permute.xlu0 %5297
        %5299 = vrot.lane.b32.xlu0 %v4636, 64
        %v5300 = vpop.permute.xlu0 %5299
        %5301 = vrot.lane.b32.xlu0 %v4637, 64
        %v5302 = vpop.permute.xlu0 %5301
        %5303 = vrot.lane.b32.xlu0 %v4638, 64
        %v5304 = vpop.permute.xlu0 %5303
        %5305 = vrot.lane.b32.xlu0 %v4639, 64
        %v5306 = vpop.permute.xlu0 %5305
        %5307 = vrot.lane.b32.xlu0 %v4640, 64
        %v5308 = vpop.permute.xlu0 %5307
        %5309 = vrot.lane.b32.xlu0 %v4641, 64
        %v5310 = vpop.permute.xlu0 %5309
        %5311 = vrot.lane.b32.xlu0 %v4642, 64
        %v5312 = vpop.permute.xlu0 %5311
        %5313 = vrot.lane.b32.xlu0 %v4643, 64
        %v5314 = vpop.permute.xlu0 %5313
        %5315 = vrot.lane.b32.xlu0 %v4644, 64
        %v5316 = vpop.permute.xlu0 %5315
        %5381 = vrot.lane.b32.xlu0 %v4645, 96
        %v5382 = vpop.permute.xlu0 %5381
        %5383 = vrot.lane.b32.xlu0 %v4646, 96
        %v5384 = vpop.permute.xlu0 %5383
        %5385 = vrot.lane.b32.xlu0 %v4647, 96
        %v5386 = vpop.permute.xlu0 %5385
        %5387 = vrot.lane.b32.xlu0 %v4648, 96
        %v5388 = vpop.permute.xlu0 %5387
        %5389 = vrot.lane.b32.xlu0 %v4649, 96
        %v5390 = vpop.permute.xlu0 %5389
        %5391 = vrot.lane.b32.xlu0 %v4650, 96
        %v5392 = vpop.permute.xlu0 %5391
        %5393 = vrot.lane.b32.xlu0 %v4651, 96
        %v5394 = vpop.permute.xlu0 %5393
        %5395 = vrot.lane.b32.xlu0 %v4652, 96
        %v5396 = vpop.permute.xlu0 %5395
        %5397 = vrot.lane.b32.xlu0 %v4653, 96
        %v5398 = vpop.permute.xlu0 %5397
        %5399 = vrot.lane.b32.xlu0 %v4654, 96
        %v5400 = vpop.permute.xlu0 %5399
        %5401 = vrot.lane.b32.xlu0 %v4655, 96
        %v5402 = vpop.permute.xlu0 %5401
        %5403 = vrot.lane.b32.xlu0 %v4656, 96
        %v5404 = vpop.permute.xlu0 %5403
        %5405 = vrot.lane.b32.xlu0 %v4657, 96
        %v5406 = vpop.permute.xlu0 %5405
        %5407 = vrot.lane.b32.xlu0 %v4658, 96
        %v5408 = vpop.permute.xlu0 %5407
        %5409 = vrot.lane.b32.xlu0 %v4659, 96
        %v5410 = vpop.permute.xlu0 %5409
        %5411 = vrot.lane.b32.xlu0 %v4660, 96
        %v5412 = vpop.permute.xlu0 %5411
        %5413 = vrot.lane.b32.xlu0 %v4661, 96
        %v5414 = vpop.permute.xlu0 %5413
        %5415 = vrot.lane.b32.xlu0 %v4662, 96
        %v5416 = vpop.permute.xlu0 %5415
        %5417 = vrot.lane.b32.xlu0 %v4663, 96
        %v5418 = vpop.permute.xlu0 %5417
        %5419 = vrot.lane.b32.xlu0 %v4664, 96
        %v5420 = vpop.permute.xlu0 %5419
        %5421 = vrot.lane.b32.xlu0 %v4665, 96
        %v5422 = vpop.permute.xlu0 %5421
        %5423 = vrot.lane.b32.xlu0 %v4666, 96
        %v5424 = vpop.permute.xlu0 %5423
        %5425 = vrot.lane.b32.xlu0 %v4667, 96
        %v5426 = vpop.permute.xlu0 %5425
        %5427 = vrot.lane.b32.xlu0 %v4668, 96
        %v5428 = vpop.permute.xlu0 %5427
        %5429 = vrot.lane.b32.xlu0 %v4669, 96
        %v5430 = vpop.permute.xlu0 %5429
        %5431 = vrot.lane.b32.xlu0 %v4670, 96
        %v5432 = vpop.permute.xlu0 %5431
        %5433 = vrot.lane.b32.xlu0 %v4671, 96
        %v5434 = vpop.permute.xlu0 %5433
        %5435 = vrot.lane.b32.xlu0 %v4672, 96
        %v5436 = vpop.permute.xlu0 %5435
        %5437 = vrot.lane.b32.xlu0 %v4673, 96
        %v5438 = vpop.permute.xlu0 %5437
        %5439 = vrot.lane.b32.xlu0 %v4674, 96
        %v5440 = vpop.permute.xlu0 %5439
        %5441 = vrot.lane.b32.xlu0 %v4675, 96
        %v5442 = vpop.permute.xlu0 %5441
        %5443 = vrot.lane.b32.xlu0 %v4676, 96
        %v5444 = vpop.permute.xlu0 %5443
        %v5477 = vsel %vm2260, %v4421, %v4742
        %v5478 = vsel %vm2260, %v4422, %v4744
        %v5479 = vsel %vm2260, %v4423, %v4746
        %v5480 = vsel %vm2260, %v4424, %v4748
        %v5481 = vsel %vm2260, %v4425, %v4750
        %v5482 = vsel %vm2260, %v4426, %v4752
        %v5483 = vsel %vm2260, %v4427, %v4754
        %v5484 = vsel %vm2260, %v4428, %v4756
        %v5485 = vsel %vm2260, %v4429, %v4758
        %v5486 = vsel %vm2260, %v4430, %v4760
        %v5487 = vsel %vm2260, %v4431, %v4762
        %v5488 = vsel %vm2260, %v4432, %v4764
        %v5489 = vsel %vm2260, %v4433, %v4766
        %v5490 = vsel %vm2260, %v4434, %v4768
        %v5491 = vsel %vm2260, %v4435, %v4770
        %v5492 = vsel %vm2260, %v4436, %v4772
        %v5493 = vsel %vm2260, %v4437, %v4774
        %v5494 = vsel %vm2260, %v4438, %v4776
        %v5495 = vsel %vm2260, %v4439, %v4778
        %v5496 = vsel %vm2260, %v4440, %v4780
        %v5497 = vsel %vm2260, %v4441, %v4782
        %v5498 = vsel %vm2260, %v4442, %v4784
        %v5499 = vsel %vm2260, %v4443, %v4786
        %v5500 = vsel %vm2260, %v4444, %v4788
        %v5501 = vsel %vm2260, %v4445, %v4790
        %v5502 = vsel %vm2260, %v4446, %v4792
        %v5503 = vsel %vm2260, %v4447, %v4794
        %v5504 = vsel %vm2260, %v4448, %v4796
        %v5505 = vsel %vm2260, %v4449, %v4798
        %v5506 = vsel %vm2260, %v4450, %v4800
        %v5507 = vsel %vm2260, %v4451, %v4802
        %v5508 = vsel %vm2260, %v4452, %v4804
        %v5509 = vsel %vm3684, %v5477, %v4870
        %v5510 = vsel %vm3684, %v5478, %v4872
        %v5511 = vsel %vm3684, %v5479, %v4874
        %v5512 = vsel %vm3684, %v5480, %v4876
        %v5513 = vsel %vm3684, %v5481, %v4878
        %v5514 = vsel %vm3684, %v5482, %v4880
        %v5515 = vsel %vm3684, %v5483, %v4882
        %v5516 = vsel %vm3684, %v5484, %v4884
        %v5517 = vsel %vm3684, %v5485, %v4886
        %v5518 = vsel %vm3684, %v5486, %v4888
        %v5519 = vsel %vm3684, %v5487, %v4890
        %v5520 = vsel %vm3684, %v5488, %v4892
        %v5521 = vsel %vm3684, %v5489, %v4894
        %v5522 = vsel %vm3684, %v5490, %v4896
        %v5523 = vsel %vm3684, %v5491, %v4898
        %v5524 = vsel %vm3684, %v5492, %v4900
        %v5525 = vsel %vm3684, %v5493, %v4902
        %v5526 = vsel %vm3684, %v5494, %v4904
        %v5527 = vsel %vm3684, %v5495, %v4906
        %v5528 = vsel %vm3684, %v5496, %v4908
        %v5529 = vsel %vm3684, %v5497, %v4910
        %v5530 = vsel %vm3684, %v5498, %v4912
        %v5531 = vsel %vm3684, %v5499, %v4914
        %v5532 = vsel %vm3684, %v5500, %v4916
        %v5533 = vsel %vm3684, %v5501, %v4918
        %v5534 = vsel %vm3684, %v5502, %v4920
        %v5535 = vsel %vm3684, %v5503, %v4922
        %v5536 = vsel %vm3684, %v5504, %v4924
        %v5537 = vsel %vm3684, %v5505, %v4926
        %v5538 = vsel %vm3684, %v5506, %v4928
        %v5539 = vsel %vm3684, %v5507, %v4930
        %v5540 = vsel %vm3684, %v5508, %v4932
        %v5541 = vsel %vm3717, %v5509, %v4998
        %v5542 = vsel %vm3717, %v5510, %v5000
        %v5543 = vsel %vm3717, %v5511, %v5002
        %v5544 = vsel %vm3717, %v5512, %v5004
        %v5545 = vsel %vm3717, %v5513, %v5006
        %v5546 = vsel %vm3717, %v5514, %v5008
        %v5547 = vsel %vm3717, %v5515, %v5010
        %v5548 = vsel %vm3717, %v5516, %v5012
        %v5549 = vsel %vm3717, %v5517, %v5014
        %v5550 = vsel %vm3717, %v5518, %v5016
        %v5551 = vsel %vm3717, %v5519, %v5018
        %v5552 = vsel %vm3717, %v5520, %v5020
        %v5553 = vsel %vm3717, %v5521, %v5022
        %v5554 = vsel %vm3717, %v5522, %v5024
        %v5555 = vsel %vm3717, %v5523, %v5026
        %v5556 = vsel %vm3717, %v5524, %v5028
        %v5557 = vsel %vm3717, %v5525, %v5030
        %v5558 = vsel %vm3717, %v5526, %v5032
        %v5559 = vsel %vm3717, %v5527, %v5034
        %v5560 = vsel %vm3717, %v5528, %v5036
        %v5561 = vsel %vm3717, %v5529, %v5038
        %v5562 = vsel %vm3717, %v5530, %v5040
        %v5563 = vsel %vm3717, %v5531, %v5042
        %v5564 = vsel %vm3717, %v5532, %v5044
        %v5565 = vsel %vm3717, %v5533, %v5046
        %v5566 = vsel %vm3717, %v5534, %v5048
        %v5567 = vsel %vm3717, %v5535, %v5050
        %v5568 = vsel %vm3717, %v5536, %v5052
        %v5569 = vsel %vm3717, %v5537, %v5054
        %v5570 = vsel %vm3717, %v5538, %v5056
        %v5571 = vsel %vm3717, %v5539, %v5058
        %v5572 = vsel %vm3717, %v5540, %v5060
        %v5573 = vsel %vm2260, %v4549, %v5126
        %v5574 = vsel %vm2260, %v4550, %v5128
        %v5575 = vsel %vm2260, %v4551, %v5130
        %v5576 = vsel %vm2260, %v4552, %v5132
        %v5577 = vsel %vm2260, %v4553, %v5134
        %v5578 = vsel %vm2260, %v4554, %v5136
        %v5579 = vsel %vm2260, %v4555, %v5138
        %v5580 = vsel %vm2260, %v4556, %v5140
        %v5581 = vsel %vm2260, %v4557, %v5142
        %v5582 = vsel %vm2260, %v4558, %v5144
        %v5583 = vsel %vm2260, %v4559, %v5146
        %v5584 = vsel %vm2260, %v4560, %v5148
        %v5585 = vsel %vm2260, %v4561, %v5150
        %v5586 = vsel %vm2260, %v4562, %v5152
        %v5587 = vsel %vm2260, %v4563, %v5154
        %v5588 = vsel %vm2260, %v4564, %v5156
        %v5589 = vsel %vm2260, %v4565, %v5158
        %v5590 = vsel %vm2260, %v4566, %v5160
        %v5591 = vsel %vm2260, %v4567, %v5162
        %v5592 = vsel %vm2260, %v4568, %v5164
        %v5593 = vsel %vm2260, %v4569, %v5166
        %v5594 = vsel %vm2260, %v4570, %v5168
        %v5595 = vsel %vm2260, %v4571, %v5170
        %v5596 = vsel %vm2260, %v4572, %v5172
        %v5597 = vsel %vm2260, %v4573, %v5174
        %v5598 = vsel %vm2260, %v4574, %v5176
        %v5599 = vsel %vm2260, %v4575, %v5178
        %v5600 = vsel %vm2260, %v4576, %v5180
        %v5601 = vsel %vm2260, %v4577, %v5182
        %v5602 = vsel %vm2260, %v4578, %v5184
        %v5603 = vsel %vm2260, %v4579, %v5186
        %v5604 = vsel %vm2260, %v4580, %v5188
        %v5605 = vsel %vm3684, %v5573, %v5254
        %v5606 = vsel %vm3684, %v5574, %v5256
        %v5607 = vsel %vm3684, %v5575, %v5258
        %v5608 = vsel %vm3684, %v5576, %v5260
        %v5609 = vsel %vm3684, %v5577, %v5262
        %v5610 = vsel %vm3684, %v5578, %v5264
        %v5611 = vsel %vm3684, %v5579, %v5266
        %v5612 = vsel %vm3684, %v5580, %v5268
        %v5613 = vsel %vm3684, %v5581, %v5270
        %v5614 = vsel %vm3684, %v5582, %v5272
        %v5615 = vsel %vm3684, %v5583, %v5274
        %v5616 = vsel %vm3684, %v5584, %v5276
        %v5617 = vsel %vm3684, %v5585, %v5278
        %v5618 = vsel %vm3684, %v5586, %v5280
        %v5619 = vsel %vm3684, %v5587, %v5282
        %v5620 = vsel %vm3684, %v5588, %v5284
        %v5621 = vsel %vm3684, %v5589, %v5286
        %v5622 = vsel %vm3684, %v5590, %v5288
        %v5623 = vsel %vm3684, %v5591, %v5290
        %v5624 = vsel %vm3684, %v5592, %v5292
        %v5625 = vsel %vm3684, %v5593, %v5294
        %v5626 = vsel %vm3684, %v5594, %v5296
        %v5627 = vsel %vm3684, %v5595, %v5298
        %v5628 = vsel %vm3684, %v5596, %v5300
        %v5629 = vsel %vm3684, %v5597, %v5302
        %v5630 = vsel %vm3684, %v5598, %v5304
        %v5631 = vsel %vm3684, %v5599, %v5306
        %v5632 = vsel %vm3684, %v5600, %v5308
        %v5633 = vsel %vm3684, %v5601, %v5310
        %v5634 = vsel %vm3684, %v5602, %v5312
        %v5635 = vsel %vm3684, %v5603, %v5314
        %v5636 = vsel %vm3684, %v5604, %v5316
        %v5637 = vsel %vm3717, %v5605, %v5382
        %v5638 = vsel %vm3717, %v5606, %v5384
        %v5639 = vsel %vm3717, %v5607, %v5386
        %v5640 = vsel %vm3717, %v5608, %v5388
        %v5641 = vsel %vm3717, %v5609, %v5390
        %v5642 = vsel %vm3717, %v5610, %v5392
        %v5643 = vsel %vm3717, %v5611, %v5394
        %v5644 = vsel %vm3717, %v5612, %v5396
        %v5645 = vsel %vm3717, %v5613, %v5398
        %v5646 = vsel %vm3717, %v5614, %v5400
        %v5647 = vsel %vm3717, %v5615, %v5402
        %v5648 = vsel %vm3717, %v5616, %v5404
        %v5649 = vsel %vm3717, %v5617, %v5406
        %v5650 = vsel %vm3717, %v5618, %v5408
        %v5651 = vsel %vm3717, %v5619, %v5410
        %v5652 = vsel %vm3717, %v5620, %v5412
        %v5653 = vsel %vm3717, %v5621, %v5414
        %v5654 = vsel %vm3717, %v5622, %v5416
        %v5655 = vsel %vm3717, %v5623, %v5418
        %v5656 = vsel %vm3717, %v5624, %v5420
        %v5657 = vsel %vm3717, %v5625, %v5422
        %v5658 = vsel %vm3717, %v5626, %v5424
        %v5659 = vsel %vm3717, %v5627, %v5426
        %v5660 = vsel %vm3717, %v5628, %v5428
        %v5661 = vsel %vm3717, %v5629, %v5430
        %v5662 = vsel %vm3717, %v5630, %v5432
        %v5663 = vsel %vm3717, %v5631, %v5434
        %v5664 = vsel %vm3717, %v5632, %v5436
        %v5665 = vsel %vm3717, %v5633, %v5438
        %v5666 = vsel %vm3717, %v5634, %v5440
        %v5667 = vsel %vm3717, %v5635, %v5442
        %v5668 = vsel %vm3717, %v5636, %v5444
        %v5669 = vpack.c.bf16 %v5542, %v5541
        %v5670 = vpack.c.bf16 %v5638, %v5637
        %v5671 = vpack.c.bf16 %v4678, %v4677
        %v5672 = vpack.c.bf16 %v5544, %v5543
        %v5673 = vpack.c.bf16 %v5640, %v5639
        %v5674 = vpack.c.bf16 %v4680, %v4679
        %v5675 = vpack.c.bf16 %v5546, %v5545
        %v5676 = vpack.c.bf16 %v5642, %v5641
        %v5677 = vpack.c.bf16 %v4682, %v4681
        %v5678 = vpack.c.bf16 %v5548, %v5547
        %v5679 = vpack.c.bf16 %v5644, %v5643
        %v5680 = vpack.c.bf16 %v4684, %v4683
        %v5681 = vpack.c.bf16 %v5550, %v5549
        %v5682 = vpack.c.bf16 %v5646, %v5645
        %v5683 = vpack.c.bf16 %v4686, %v4685
        %v5684 = vpack.c.bf16 %v5552, %v5551
        %v5685 = vpack.c.bf16 %v5648, %v5647
        %v5686 = vpack.c.bf16 %v4688, %v4687
        %v5687 = vpack.c.bf16 %v5554, %v5553
        %v5688 = vpack.c.bf16 %v5650, %v5649
        %v5689 = vpack.c.bf16 %v4690, %v4689
        %v5690 = vpack.c.bf16 %v5556, %v5555
        %v5691 = vpack.c.bf16 %v5652, %v5651
        %v5692 = vpack.c.bf16 %v4692, %v4691
        %v5693 = vpack.c.bf16 %v5558, %v5557
        %v5694 = vpack.c.bf16 %v5654, %v5653
        %v5695 = vpack.c.bf16 %v4694, %v4693
        %v5696 = vpack.c.bf16 %v5560, %v5559
        %v5697 = vpack.c.bf16 %v5656, %v5655
        %v5698 = vpack.c.bf16 %v4696, %v4695
        %v5699 = vpack.c.bf16 %v5562, %v5561
        %v5700 = vpack.c.bf16 %v5658, %v5657
        %v5701 = vpack.c.bf16 %v4698, %v4697
        %v5702 = vpack.c.bf16 %v5564, %v5563
        %v5703 = vpack.c.bf16 %v5660, %v5659
        %v5704 = vpack.c.bf16 %v4700, %v4699
        %v5705 = vpack.c.bf16 %v5566, %v5565
        %v5706 = vpack.c.bf16 %v5662, %v5661
        %v5707 = vpack.c.bf16 %v4702, %v4701
        %v5708 = vpack.c.bf16 %v5568, %v5567
        %v5709 = vpack.c.bf16 %v5664, %v5663
        %v5710 = vpack.c.bf16 %v4704, %v4703
        %v5711 = vpack.c.bf16 %v5570, %v5569
        %v5712 = vpack.c.bf16 %v5666, %v5665
        %v5713 = vpack.c.bf16 %v4706, %v4705
        %v5714 = vpack.c.bf16 %v5572, %v5571
        %v5715 = vpack.c.bf16 %v5668, %v5667
        %v5716 = vpack.c.bf16 %v4708, %v4707
        %v5717 = vld [vmem:[%s8] sm:$0xf]
        %v5718 = vld [vmem:[%s8 + $0x4] sm:$0xf]
        %v5719 = vld [vmem:[%s8 + $0x8] sm:$0xf]
        %v5720 = vld [vmem:[%s8 + $0xc] sm:$0xf]
        %v5721 = vld [vmem:[%s8 + $0x10] sm:$0xf]
        %v5722 = vld [vmem:[%s8 + $0x14] sm:$0xf]
        %v5723 = vld [vmem:[%s8 + $0x18] sm:$0xf]
        %v5724 = vld [vmem:[%s8 + $0x1c] sm:$0xf]
        %v5725 = vld [vmem:[%s8 + $0x20] sm:$0xf]
        %v5726 = vld [vmem:[%s8 + $0x24] sm:$0xf]
        %v5727 = vld [vmem:[%s8 + $0x28] sm:$0xf]
        %v5728 = vld [vmem:[%s8 + $0x2c] sm:$0xf]
        %v5729 = vld [vmem:[%s8 + $0x30] sm:$0xf]
        %v5730 = vld [vmem:[%s8 + $0x34] sm:$0xf]
        %v5731 = vld [vmem:[%s8 + $0x38] sm:$0xf]
        %v5732 = vld [vmem:[%s8 + $0x3c] sm:$0xf]
        %v5733 = vld [vmem:[%s8 + $0x40] sm:$0xf]
        %v5734 = vld [vmem:[%s8 + $0x44] sm:$0xf]
        %v5735 = vld [vmem:[%s8 + $0x48] sm:$0xf]
        %v5736 = vld [vmem:[%s8 + $0x4c] sm:$0xf]
        %v5737 = vld [vmem:[%s8 + $0x50] sm:$0xf]
        %v5738 = vld [vmem:[%s8 + $0x54] sm:$0xf]
        %v5739 = vld [vmem:[%s8 + $0x58] sm:$0xf]
        %v5740 = vld [vmem:[%s8 + $0x5c] sm:$0xf]
        %v5741 = vld [vmem:[%s8 + $0x60] sm:$0xf]
        %v5742 = vld [vmem:[%s8 + $0x64] sm:$0xf]
        %v5743 = vld [vmem:[%s8 + $0x68] sm:$0xf]
        %v5744 = vld [vmem:[%s8 + $0x6c] sm:$0xf]
        %v5745 = vld [vmem:[%s8 + $0x70] sm:$0xf]
        %v5746 = vld [vmem:[%s8 + $0x74] sm:$0xf]
        %v5747 = vld [vmem:[%s8 + $0x78] sm:$0xf]
        %v5748 = vld [vmem:[%s8 + $0x7c] sm:$0xf]
        %v5749 = vld [vmem:[%s8 + $0x80] sm:$0xf]
        %v5750 = vld [vmem:[%s8 + $0x84] sm:$0xf]
        %v5751 = vld [vmem:[%s8 + $0x88] sm:$0xf]
        %v5752 = vld [vmem:[%s8 + $0x8c] sm:$0xf]
        %v5753 = vld [vmem:[%s9] sm:$0x1]
        %v5755 = vperm.slane %v5753, 0
        %v5793 = vunpack.c.l.b16 %v5717
        %v5794 = vunpack.c.l.b16 %v5718
        %v5795 = vunpack.c.l.b16 %v5719
        %v5796 = vunpack.c.l.b16 %v5720
        %v5797 = vunpack.c.l.b16 %v5721
        %v5798 = vunpack.c.l.b16 %v5722
        %v5799 = vunpack.c.l.b16 %v5723
        %v5800 = vunpack.c.l.b16 %v5724
        %v5801 = vunpack.c.l.b16 %v5725
        %v5802 = vunpack.c.l.b16 %v5726
        %v5803 = vunpack.c.l.b16 %v5727
        %v5804 = vunpack.c.l.b16 %v5728
        %v5805 = vunpack.c.l.b16 %v5729
        %v5806 = vunpack.c.l.b16 %v5730
        %v5807 = vunpack.c.l.b16 %v5731
        %v5808 = vunpack.c.l.b16 %v5732
        %v5809 = vunpack.c.l.b16 %v5733
        %v5810 = vunpack.c.l.b16 %v5734
        %v5811 = vunpack.c.l.b16 %v5735
        %v5812 = vunpack.c.l.b16 %v5736
        %v5813 = vunpack.c.l.b16 %v5737
        %v5814 = vunpack.c.l.b16 %v5738
        %v5815 = vunpack.c.l.b16 %v5739
        %v5816 = vunpack.c.l.b16 %v5740
        %v5817 = vunpack.c.l.b16 %v5741
        %v5818 = vunpack.c.l.b16 %v5742
        %v5819 = vunpack.c.l.b16 %v5743
        %v5820 = vunpack.c.l.b16 %v5744
        %v5821 = vunpack.c.l.b16 %v5745
        %v5822 = vunpack.c.l.b16 %v5746
        %v5823 = vunpack.c.l.b16 %v5747
        %v5824 = vunpack.c.l.b16 %v5748
        %v5825 = vunpack.c.l.b16 %v5749
        %v5826 = vunpack.c.l.b16 %v5750
        %v5827 = vunpack.c.l.b16 %v5751
        %v5828 = vunpack.c.l.b16 %v5752
        %v5829 = vpack.c.b16 %v5794, %v5793
        %v5830 = vpack.c.b16 %v5796, %v5795
        %v5831 = vpack.c.b16 %v5798, %v5797
        %v5832 = vpack.c.b16 %v5800, %v5799
        %v5833 = vpack.c.b16 %v5802, %v5801
        %v5834 = vpack.c.b16 %v5804, %v5803
        %v5835 = vpack.c.b16 %v5806, %v5805
        %v5836 = vpack.c.b16 %v5808, %v5807
        %v5837 = vpack.c.b16 %v5810, %v5809
        %v5838 = vpack.c.b16 %v5812, %v5811
        %v5839 = vpack.c.b16 %v5814, %v5813
        %v5840 = vpack.c.b16 %v5816, %v5815
        %v5841 = vpack.c.b16 %v5818, %v5817
        %v5842 = vpack.c.b16 %v5820, %v5819
        %v5843 = vpack.c.b16 %v5822, %v5821
        %v5844 = vpack.c.b16 %v5824, %v5823
        %v5845 = vpack.c.b16 %v5826, %v5825
        %v5846 = vpack.c.b16 %v5828, %v5827
        %v5866 = vsel %vm2260, %v5671, 0
        %v5869 = vsel %vm2260, %v5674, 0
        %v5872 = vsel %vm2260, %v5677, 0
        %v5875 = vsel %vm2260, %v5680, 0
        %v5878 = vsel %vm2260, %v5683, 0
        %v5881 = vsel %vm2260, %v5686, 0
        %v5884 = vsel %vm2260, %v5689, 0
        %v5887 = vsel %vm2260, %v5692, 0
        %v5890 = vsel %vm2260, %v5695, 0
        %v5893 = vsel %vm2260, %v5698, 0
        %v5896 = vsel %vm2260, %v5701, 0
        %v5899 = vsel %vm2260, %v5704, 0
        %v5902 = vsel %vm2260, %v5707, 0
        %v5905 = vsel %vm2260, %v5710, 0
        %v5908 = vsel %vm2260, %v5713, 0
        %v5911 = vsel %vm2260, %v5716, 0
        %5913 = vmatpush.bf16.msra.mxu0 %v5836
        %5914 = vmatpush.bf16.msra.mxu0 %v5835
        %5915 = vmatpush.bf16.msra.mxu0 %v5834
        %5916 = vmatpush.bf16.msra.mxu0 %v5833
        %5917 = vmatpush.bf16.msra.mxu0 %v5832
        %5918 = vmatpush.bf16.msra.mxu0 %v5831
        %5919 = vmatpush.bf16.msra.mxu0 %v5830
        %5920 = vmatpush.bf16.msra.mxu0 %v5829
        %5921 = vmatmul.bf16.gmra.mxu0 %v5669
        %v5922 = vpop.f32.mrf.mxu0
        %v5923 = vadd.f32 %v5755, %v5922
        %v5924 = vpop.f32.mrf.mxu0
        %v5925 = vadd.f32 %v5755, %v5924
        %5926 = vmatmul.bf16.gmra.mxu0 %v5672
        %v5927 = vpop.f32.mrf.mxu0
        %v5928 = vadd.f32 %v5755, %v5927
        %v5929 = vpop.f32.mrf.mxu0
        %v5930 = vadd.f32 %v5755, %v5929
        %5931 = vmatmul.bf16.gmra.mxu0 %v5675
        %v5932 = vpop.f32.mrf.mxu0
        %v5933 = vadd.f32 %v5755, %v5932
        %v5934 = vpop.f32.mrf.mxu0
        %v5935 = vadd.f32 %v5755, %v5934
        %5936 = vmatmul.bf16.gmra.mxu0 %v5678
        %v5937 = vpop.f32.mrf.mxu0
        %v5938 = vadd.f32 %v5755, %v5937
        %v5939 = vpop.f32.mrf.mxu0
        %v5940 = vadd.f32 %v5755, %v5939
        %5941 = vmatmul.bf16.gmra.mxu0 %v5681
        %v5942 = vpop.f32.mrf.mxu0
        %v5943 = vadd.f32 %v5755, %v5942
        %v5944 = vpop.f32.mrf.mxu0
        %v5945 = vadd.f32 %v5755, %v5944
        %5946 = vmatmul.bf16.gmra.mxu0 %v5684
        %v5947 = vpop.f32.mrf.mxu0
        %v5948 = vadd.f32 %v5755, %v5947
        %v5949 = vpop.f32.mrf.mxu0
        %v5950 = vadd.f32 %v5755, %v5949
        %5951 = vmatmul.bf16.gmra.mxu0 %v5687
        %v5952 = vpop.f32.mrf.mxu0
        %v5953 = vadd.f32 %v5755, %v5952
        %v5954 = vpop.f32.mrf.mxu0
        %v5955 = vadd.f32 %v5755, %v5954
        %5956 = vmatmul.bf16.gmra.mxu0 %v5690
        %v5957 = vpop.f32.mrf.mxu0
        %v5958 = vadd.f32 %v5755, %v5957
        %v5959 = vpop.f32.mrf.mxu0
        %v5960 = vadd.f32 %v5755, %v5959
        %5961 = vmatmul.bf16.gmra.mxu0 %v5693
        %v5962 = vpop.f32.mrf.mxu0
        %v5963 = vadd.f32 %v5755, %v5962
        %v5964 = vpop.f32.mrf.mxu0
        %v5965 = vadd.f32 %v5755, %v5964
        %5966 = vmatmul.bf16.gmra.mxu0 %v5696
        %v5967 = vpop.f32.mrf.mxu0
        %v5968 = vadd.f32 %v5755, %v5967
        %v5969 = vpop.f32.mrf.mxu0
        %v5970 = vadd.f32 %v5755, %v5969
        %5971 = vmatmul.bf16.gmra.mxu0 %v5699
        %v5972 = vpop.f32.mrf.mxu0
        %v5973 = vadd.f32 %v5755, %v5972
        %v5974 = vpop.f32.mrf.mxu0
        %v5975 = vadd.f32 %v5755, %v5974
        %5976 = vmatmul.bf16.gmra.mxu0 %v5702
        %v5977 = vpop.f32.mrf.mxu0
        %v5978 = vadd.f32 %v5755, %v5977
        %v5979 = vpop.f32.mrf.mxu0
        %v5980 = vadd.f32 %v5755, %v5979
        %5981 = vmatmul.bf16.gmra.mxu0 %v5705
        %v5982 = vpop.f32.mrf.mxu0
        %v5983 = vadd.f32 %v5755, %v5982
        %v5984 = vpop.f32.mrf.mxu0
        %v5985 = vadd.f32 %v5755, %v5984
        %5986 = vmatmul.bf16.gmra.mxu0 %v5708
        %v5987 = vpop.f32.mrf.mxu0
        %v5988 = vadd.f32 %v5755, %v5987
        %v5989 = vpop.f32.mrf.mxu0
        %v5990 = vadd.f32 %v5755, %v5989
        %5991 = vmatmul.bf16.gmra.mxu0 %v5711
        %v5992 = vpop.f32.mrf.mxu0
        %v5993 = vadd.f32 %v5755, %v5992
        %v5994 = vpop.f32.mrf.mxu0
        %v5995 = vadd.f32 %v5755, %v5994
        %5996 = vmatmul.bf16.gmra.mxu0 %v5714
        %v5997 = vpop.f32.mrf.mxu0
        %v5998 = vadd.f32 %v5755, %v5997
        %v5999 = vpop.f32.mrf.mxu0
        %v6000 = vadd.f32 %v5755, %v5999
        %6001 = vdwg.mxu0
        %6002 = vmatpush.bf16.msra.mxu0 %v5844
        %6003 = vmatpush.bf16.msra.mxu0 %v5843
        %6004 = vmatpush.bf16.msra.mxu0 %v5842
        %6005 = vmatpush.bf16.msra.mxu0 %v5841
        %6006 = vmatpush.bf16.msra.mxu0 %v5840
        %6007 = vmatpush.bf16.msra.mxu0 %v5839
        %6008 = vmatpush.bf16.msra.mxu0 %v5838
        %6009 = vmatpush.bf16.msra.mxu0 %v5837
        %6010 = vmatmul.bf16.gmra.mxu0 %v5670
        %v6011 = vpop.f32.mrf.mxu0
        %v6012 = vadd.f32 %v5923, %v6011
        %v6013 = vpop.f32.mrf.mxu0
        %v6014 = vadd.f32 %v5925, %v6013
        %6015 = vmatmul.bf16.gmra.mxu0 %v5673
        %v6016 = vpop.f32.mrf.mxu0
        %v6017 = vadd.f32 %v5928, %v6016
        %v6018 = vpop.f32.mrf.mxu0
        %v6019 = vadd.f32 %v5930, %v6018
        %6020 = vmatmul.bf16.gmra.mxu0 %v5676
        %v6021 = vpop.f32.mrf.mxu0
        %v6022 = vadd.f32 %v5933, %v6021
        %v6023 = vpop.f32.mrf.mxu0
        %v6024 = vadd.f32 %v5935, %v6023
        %6025 = vmatmul.bf16.gmra.mxu0 %v5679
        %v6026 = vpop.f32.mrf.mxu0
        %v6027 = vadd.f32 %v5938, %v6026
        %v6028 = vpop.f32.mrf.mxu0
        %v6029 = vadd.f32 %v5940, %v6028
        %6030 = vmatmul.bf16.gmra.mxu0 %v5682
        %v6031 = vpop.f32.mrf.mxu0
        %v6032 = vadd.f32 %v5943, %v6031
        %v6033 = vpop.f32.mrf.mxu0
        %v6034 = vadd.f32 %v5945, %v6033
        %6035 = vmatmul.bf16.gmra.mxu0 %v5685
        %v6036 = vpop.f32.mrf.mxu0
        %v6037 = vadd.f32 %v5948, %v6036
        %v6038 = vpop.f32.mrf.mxu0
        %v6039 = vadd.f32 %v5950, %v6038
        %6040 = vmatmul.bf16.gmra.mxu0 %v5688
        %v6041 = vpop.f32.mrf.mxu0
        %v6042 = vadd.f32 %v5953, %v6041
        %v6043 = vpop.f32.mrf.mxu0
        %v6044 = vadd.f32 %v5955, %v6043
        %6045 = vmatmul.bf16.gmra.mxu0 %v5691
        %v6046 = vpop.f32.mrf.mxu0
        %v6047 = vadd.f32 %v5958, %v6046
        %v6048 = vpop.f32.mrf.mxu0
        %v6049 = vadd.f32 %v5960, %v6048
        %6050 = vmatmul.bf16.gmra.mxu0 %v5694
        %v6051 = vpop.f32.mrf.mxu0
        %v6052 = vadd.f32 %v5963, %v6051
        %v6053 = vpop.f32.mrf.mxu0
        %v6054 = vadd.f32 %v5965, %v6053
        %6055 = vmatmul.bf16.gmra.mxu0 %v5697
        %v6056 = vpop.f32.mrf.mxu0
        %v6057 = vadd.f32 %v5968, %v6056
        %v6058 = vpop.f32.mrf.mxu0
        %v6059 = vadd.f32 %v5970, %v6058
        %6060 = vmatmul.bf16.gmra.mxu0 %v5700
        %v6061 = vpop.f32.mrf.mxu0
        %v6062 = vadd.f32 %v5973, %v6061
        %v6063 = vpop.f32.mrf.mxu0
        %v6064 = vadd.f32 %v5975, %v6063
        %6065 = vmatmul.bf16.gmra.mxu0 %v5703
        %v6066 = vpop.f32.mrf.mxu0
        %v6067 = vadd.f32 %v5978, %v6066
        %v6068 = vpop.f32.mrf.mxu0
        %v6069 = vadd.f32 %v5980, %v6068
        %6070 = vmatmul.bf16.gmra.mxu0 %v5706
        %v6071 = vpop.f32.mrf.mxu0
        %v6072 = vadd.f32 %v5983, %v6071
        %v6073 = vpop.f32.mrf.mxu0
        %v6074 = vadd.f32 %v5985, %v6073
        %6075 = vmatmul.bf16.gmra.mxu0 %v5709
        %v6076 = vpop.f32.mrf.mxu0
        %v6077 = vadd.f32 %v5988, %v6076
        %v6078 = vpop.f32.mrf.mxu0
        %v6079 = vadd.f32 %v5990, %v6078
        %6080 = vmatmul.bf16.gmra.mxu0 %v5712
        %v6081 = vpop.f32.mrf.mxu0
        %v6082 = vadd.f32 %v5993, %v6081
        %v6083 = vpop.f32.mrf.mxu0
        %v6084 = vadd.f32 %v5995, %v6083
        %6085 = vmatmul.bf16.gmra.mxu0 %v5715
        %v6086 = vpop.f32.mrf.mxu0
        %v6087 = vadd.f32 %v5998, %v6086
        %v6088 = vpop.f32.mrf.mxu0
        %v6089 = vadd.f32 %v6000, %v6088
        %6090 = vdwg.mxu0
        %6091 = vmatpush.bf16.msra.mxu0 0
        %6092 = vmatpush.bf16.msra.mxu0 0
        %6093 = vmatpush.bf16.msra.mxu0 0
        %6094 = vmatpush.bf16.msra.mxu0 0
        %6095 = vmatpush.bf16.msra.mxu0 0
        %6096 = vmatpush.bf16.msra.mxu0 0
        %6097 = vmatpush.bf16.msra.mxu0 %v5846
        %6098 = vmatpush.bf16.msra.mxu0 %v5845
        %6099 = vmatmul.bf16.gmra.mxu0 %v5866
        %v6100 = vpop.f32.mrf.mxu0
        %v6101 = vadd.f32 %v6012, %v6100
        %v6102 = vpop.f32.mrf.mxu0
        %v6103 = vadd.f32 %v6014, %v6102
        %6104 = vmatmul.bf16.gmra.mxu0 %v5869
        %v6105 = vpop.f32.mrf.mxu0
        %v6106 = vadd.f32 %v6017, %v6105
        %v6107 = vpop.f32.mrf.mxu0
        %v6108 = vadd.f32 %v6019, %v6107
        %6109 = vmatmul.bf16.gmra.mxu0 %v5872
        %v6110 = vpop.f32.mrf.mxu0
        %v6111 = vadd.f32 %v6022, %v6110
        %v6112 = vpop.f32.mrf.mxu0
        %v6113 = vadd.f32 %v6024, %v6112
        %6114 = vmatmul.bf16.gmra.mxu0 %v5875
        %v6115 = vpop.f32.mrf.mxu0
        %v6116 = vadd.f32 %v6027, %v6115
        %v6117 = vpop.f32.mrf.mxu0
        %v6118 = vadd.f32 %v6029, %v6117
        %6119 = vmatmul.bf16.gmra.mxu0 %v5878
        %v6120 = vpop.f32.mrf.mxu0
        %v6121 = vadd.f32 %v6032, %v6120
        %v6122 = vpop.f32.mrf.mxu0
        %v6123 = vadd.f32 %v6034, %v6122
        %6124 = vmatmul.bf16.gmra.mxu0 %v5881
        %v6125 = vpop.f32.mrf.mxu0
        %v6126 = vadd.f32 %v6037, %v6125
        %v6127 = vpop.f32.mrf.mxu0
        %v6128 = vadd.f32 %v6039, %v6127
        %6129 = vmatmul.bf16.gmra.mxu0 %v5884
        %v6130 = vpop.f32.mrf.mxu0
        %v6131 = vadd.f32 %v6042, %v6130
        %v6132 = vpop.f32.mrf.mxu0
        %v6133 = vadd.f32 %v6044, %v6132
        %6134 = vmatmul.bf16.gmra.mxu0 %v5887
        %v6135 = vpop.f32.mrf.mxu0
        %v6136 = vadd.f32 %v6047, %v6135
        %v6137 = vpop.f32.mrf.mxu0
        %v6138 = vadd.f32 %v6049, %v6137
        %6139 = vmatmul.bf16.gmra.mxu0 %v5890
        %v6140 = vpop.f32.mrf.mxu0
        %v6141 = vadd.f32 %v6052, %v6140
        %v6142 = vpop.f32.mrf.mxu0
        %v6143 = vadd.f32 %v6054, %v6142
        %6144 = vmatmul.bf16.gmra.mxu0 %v5893
        %v6145 = vpop.f32.mrf.mxu0
        %v6146 = vadd.f32 %v6057, %v6145
        %v6147 = vpop.f32.mrf.mxu0
        %v6148 = vadd.f32 %v6059, %v6147
        %6149 = vmatmul.bf16.gmra.mxu0 %v5896
        %v6150 = vpop.f32.mrf.mxu0
        %v6151 = vadd.f32 %v6062, %v6150
        %v6152 = vpop.f32.mrf.mxu0
        %v6153 = vadd.f32 %v6064, %v6152
        %6154 = vmatmul.bf16.gmra.mxu0 %v5899
        %v6155 = vpop.f32.mrf.mxu0
        %v6156 = vadd.f32 %v6067, %v6155
        %v6157 = vpop.f32.mrf.mxu0
        %v6158 = vadd.f32 %v6069, %v6157
        %6159 = vmatmul.bf16.gmra.mxu0 %v5902
        %v6160 = vpop.f32.mrf.mxu0
        %v6161 = vadd.f32 %v6072, %v6160
        %v6162 = vpop.f32.mrf.mxu0
        %v6163 = vadd.f32 %v6074, %v6162
        %6164 = vmatmul.bf16.gmra.mxu0 %v5905
        %v6165 = vpop.f32.mrf.mxu0
        %v6166 = vadd.f32 %v6077, %v6165
        %v6167 = vpop.f32.mrf.mxu0
        %v6168 = vadd.f32 %v6079, %v6167
        %6169 = vmatmul.bf16.gmra.mxu0 %v5908
        %v6170 = vpop.f32.mrf.mxu0
        %v6171 = vadd.f32 %v6082, %v6170
        %v6172 = vpop.f32.mrf.mxu0
        %v6173 = vadd.f32 %v6084, %v6172
        %6174 = vmatmul.bf16.gmra.mxu0 %v5911
        %v6175 = vpop.f32.mrf.mxu0
        %v6176 = vadd.f32 %v6087, %v6175
        %v6177 = vpop.f32.mrf.mxu0
        %v6178 = vadd.f32 %v6089, %v6177
        %6179 = vdwg.mxu0
        %v6180 = vsub.f32 %v562, %v6101
        %v6181 = vsub.f32 %v563, %v6103
        %v6182 = vsub.f32 %v564, %v6106
        %v6183 = vsub.f32 %v565, %v6108
        %v6184 = vsub.f32 %v566, %v6111
        %v6185 = vsub.f32 %v567, %v6113
        %v6186 = vsub.f32 %v568, %v6116
        %v6187 = vsub.f32 %v569, %v6118
        %v6188 = vsub.f32 %v570, %v6121
        %v6189 = vsub.f32 %v571, %v6123
        %v6190 = vsub.f32 %v572, %v6126
        %v6191 = vsub.f32 %v573, %v6128
        %v6192 = vsub.f32 %v574, %v6131
        %v6193 = vsub.f32 %v575, %v6133
        %v6194 = vsub.f32 %v576, %v6136
        %v6195 = vsub.f32 %v577, %v6138
        %v6196 = vsub.f32 %v578, %v6141
        %v6197 = vsub.f32 %v579, %v6143
        %v6198 = vsub.f32 %v580, %v6146
        %v6199 = vsub.f32 %v581, %v6148
        %v6200 = vsub.f32 %v582, %v6151
        %v6201 = vsub.f32 %v583, %v6153
        %v6202 = vsub.f32 %v584, %v6156
        %v6203 = vsub.f32 %v585, %v6158
        %v6204 = vsub.f32 %v586, %v6161
        %v6205 = vsub.f32 %v587, %v6163
        %v6206 = vsub.f32 %v588, %v6166
        %v6207 = vsub.f32 %v589, %v6168
        %v6208 = vsub.f32 %v590, %v6171
        %v6209 = vsub.f32 %v591, %v6173
        %v6210 = vsub.f32 %v592, %v6176
        %v6211 = vsub.f32 %v593, %v6178
        %v6212 = vstv %s457
        %v6213 = vmul.f32 %v6212, %v497
        %v6214 = vmul.f32 %v6212, %v498
        %v6215 = vmul.f32 %v6212, %v499
        %v6216 = vmul.f32 %v6212, %v500
        %v6217 = vmul.f32 %v6212, %v501
        %v6218 = vmul.f32 %v6212, %v502
        %v6219 = vmul.f32 %v6212, %v503
        %v6220 = vmul.f32 %v6212, %v504
        %v6221 = vmul.f32 %v6212, %v505
        %v6222 = vmul.f32 %v6212, %v506
        %v6223 = vmul.f32 %v6212, %v507
        %v6224 = vmul.f32 %v6212, %v508
        %v6225 = vmul.f32 %v6212, %v509
        %v6226 = vmul.f32 %v6212, %v510
        %v6227 = vmul.f32 %v6212, %v511
        %v6228 = vmul.f32 %v6212, %v512
        %v6229 = vmul.f32 %v6212, %v513
        %v6230 = vmul.f32 %v6212, %v514
        %v6231 = vmul.f32 %v6212, %v515
        %v6232 = vmul.f32 %v6212, %v516
        %v6233 = vmul.f32 %v6212, %v517
        %v6234 = vmul.f32 %v6212, %v518
        %v6235 = vmul.f32 %v6212, %v519
        %v6236 = vmul.f32 %v6212, %v520
        %v6237 = vmul.f32 %v6212, %v521
        %v6238 = vmul.f32 %v6212, %v522
        %v6239 = vmul.f32 %v6212, %v523
        %v6240 = vmul.f32 %v6212, %v524
        %v6241 = vmul.f32 %v6212, %v525
        %v6242 = vmul.f32 %v6212, %v526
        %v6243 = vmul.f32 %v6212, %v527
        %v6244 = vmul.f32 %v6212, %v528
        %v6245 = vadd.f32 %v6180, %v6213
        %v6246 = vadd.f32 %v6181, %v6214
        %v6247 = vadd.f32 %v6182, %v6215
        %v6248 = vadd.f32 %v6183, %v6216
        %v6249 = vadd.f32 %v6184, %v6217
        %v6250 = vadd.f32 %v6185, %v6218
        %v6251 = vadd.f32 %v6186, %v6219
        %v6252 = vadd.f32 %v6187, %v6220
        %v6253 = vadd.f32 %v6188, %v6221
        %v6254 = vadd.f32 %v6189, %v6222
        %v6255 = vadd.f32 %v6190, %v6223
        %v6256 = vadd.f32 %v6191, %v6224
        %v6257 = vadd.f32 %v6192, %v6225
        %v6258 = vadd.f32 %v6193, %v6226
        %v6259 = vadd.f32 %v6194, %v6227
        %v6260 = vadd.f32 %v6195, %v6228
        %v6261 = vadd.f32 %v6196, %v6229
        %v6262 = vadd.f32 %v6197, %v6230
        %v6263 = vadd.f32 %v6198, %v6231
        %v6264 = vadd.f32 %v6199, %v6232
        %v6265 = vadd.f32 %v6200, %v6233
        %v6266 = vadd.f32 %v6201, %v6234
        %v6267 = vadd.f32 %v6202, %v6235
        %v6268 = vadd.f32 %v6203, %v6236
        %v6269 = vadd.f32 %v6204, %v6237
        %v6270 = vadd.f32 %v6205, %v6238
        %v6271 = vadd.f32 %v6206, %v6239
        %v6272 = vadd.f32 %v6207, %v6240
        %v6273 = vadd.f32 %v6208, %v6241
        %v6274 = vadd.f32 %v6209, %v6242
        %v6275 = vadd.f32 %v6210, %v6243
        %v6276 = vadd.f32 %v6211, %v6244
        %v6277 = vstv %s458
        %v6278 = vmul.f32 %v6245, %v6277
        %v6279 = vmul.f32 %v6246, %v6277
        %v6280 = vmul.f32 %v6247, %v6277
        %v6281 = vmul.f32 %v6248, %v6277
        %v6282 = vmul.f32 %v6249, %v6277
        %v6283 = vmul.f32 %v6250, %v6277
        %v6284 = vmul.f32 %v6251, %v6277
        %v6285 = vmul.f32 %v6252, %v6277
        %v6286 = vmul.f32 %v6253, %v6277
        %v6287 = vmul.f32 %v6254, %v6277
        %v6288 = vmul.f32 %v6255, %v6277
        %v6289 = vmul.f32 %v6256, %v6277
        %v6290 = vmul.f32 %v6257, %v6277
        %v6291 = vmul.f32 %v6258, %v6277
        %v6292 = vmul.f32 %v6259, %v6277
        %v6293 = vmul.f32 %v6260, %v6277
        %v6294 = vmul.f32 %v6261, %v6277
        %v6295 = vmul.f32 %v6262, %v6277
        %v6296 = vmul.f32 %v6263, %v6277
        %v6297 = vmul.f32 %v6264, %v6277
        %v6298 = vmul.f32 %v6265, %v6277
        %v6299 = vmul.f32 %v6266, %v6277
        %v6300 = vmul.f32 %v6267, %v6277
        %v6301 = vmul.f32 %v6268, %v6277
        %v6302 = vmul.f32 %v6269, %v6277
        %v6303 = vmul.f32 %v6270, %v6277
        %v6304 = vmul.f32 %v6271, %v6277
        %v6305 = vmul.f32 %v6272, %v6277
        %v6306 = vmul.f32 %v6273, %v6277
        %v6307 = vmul.f32 %v6274, %v6277
        %v6308 = vmul.f32 %v6275, %v6277
        %v6309 = vmul.f32 %v6276, %v6277
        %v6310 = vstv %s459
        %v6311 = vmul.f32 %v6310, %v6278
        %v6312 = vmul.f32 %v6310, %v6279
        %v6313 = vmul.f32 %v6310, %v6280
        %v6314 = vmul.f32 %v6310, %v6281
        %v6315 = vmul.f32 %v6310, %v6282
        %v6316 = vmul.f32 %v6310, %v6283
        %v6317 = vmul.f32 %v6310, %v6284
        %v6318 = vmul.f32 %v6310, %v6285
        %v6319 = vmul.f32 %v6310, %v6286
        %v6320 = vmul.f32 %v6310, %v6287
        %v6321 = vmul.f32 %v6310, %v6288
        %v6322 = vmul.f32 %v6310, %v6289
        %v6323 = vmul.f32 %v6310, %v6290
        %v6324 = vmul.f32 %v6310, %v6291
        %v6325 = vmul.f32 %v6310, %v6292
        %v6326 = vmul.f32 %v6310, %v6293
        %v6327 = vmul.f32 %v6310, %v6294
        %v6328 = vmul.f32 %v6310, %v6295
        %v6329 = vmul.f32 %v6310, %v6296
        %v6330 = vmul.f32 %v6310, %v6297
        %v6331 = vmul.f32 %v6310, %v6298
        %v6332 = vmul.f32 %v6310, %v6299
        %v6333 = vmul.f32 %v6310, %v6300
        %v6334 = vmul.f32 %v6310, %v6301
        %v6335 = vmul.f32 %v6310, %v6302
        %v6336 = vmul.f32 %v6310, %v6303
        %v6337 = vmul.f32 %v6310, %v6304
        %v6338 = vmul.f32 %v6310, %v6305
        %v6339 = vmul.f32 %v6310, %v6306
        %v6340 = vmul.f32 %v6310, %v6307
        %v6341 = vmul.f32 %v6310, %v6308
        %v6342 = vmul.f32 %v6310, %v6309
        %v6343 = vsub.f32 %v465, %v6311
        %v6344 = vsub.f32 %v466, %v6312
        %v6345 = vsub.f32 %v467, %v6313
        %v6346 = vsub.f32 %v468, %v6314
        %v6347 = vsub.f32 %v469, %v6315
        %v6348 = vsub.f32 %v470, %v6316
        %v6349 = vsub.f32 %v471, %v6317
        %v6350 = vsub.f32 %v472, %v6318
        %v6351 = vsub.f32 %v473, %v6319
        %v6352 = vsub.f32 %v474, %v6320
        %v6353 = vsub.f32 %v475, %v6321
        %v6354 = vsub.f32 %v476, %v6322
        %v6355 = vsub.f32 %v477, %v6323
        %v6356 = vsub.f32 %v478, %v6324
        %v6357 = vsub.f32 %v479, %v6325
        %v6358 = vsub.f32 %v480, %v6326
        %v6359 = vsub.f32 %v481, %v6327
        %v6360 = vsub.f32 %v482, %v6328
        %v6361 = vsub.f32 %v483, %v6329
        %v6362 = vsub.f32 %v484, %v6330
        %v6363 = vsub.f32 %v485, %v6331
        %v6364 = vsub.f32 %v486, %v6332
        %v6365 = vsub.f32 %v487, %v6333
        %v6366 = vsub.f32 %v488, %v6334
        %v6367 = vsub.f32 %v489, %v6335
        %v6368 = vsub.f32 %v490, %v6336
        %v6369 = vsub.f32 %v491, %v6337
        %v6370 = vsub.f32 %v492, %v6338
        %v6371 = vsub.f32 %v493, %v6339
        %v6372 = vsub.f32 %v494, %v6340
        %v6373 = vsub.f32 %v495, %v6341
        %v6374 = vsub.f32 %v496, %v6342
        %v6375 = vstv %s460
        %v6376 = vmul.f32 %v6343, %v6375
        %v6377 = vmul.f32 %v6344, %v6375
        %v6378 = vmul.f32 %v6345, %v6375
        %v6379 = vmul.f32 %v6346, %v6375
        %v6380 = vmul.f32 %v6347, %v6375
        %v6381 = vmul.f32 %v6348, %v6375
        %v6382 = vmul.f32 %v6349, %v6375
        %v6383 = vmul.f32 %v6350, %v6375
        %v6384 = vmul.f32 %v6351, %v6375
        %v6385 = vmul.f32 %v6352, %v6375
        %v6386 = vmul.f32 %v6353, %v6375
        %v6387 = vmul.f32 %v6354, %v6375
        %v6388 = vmul.f32 %v6355, %v6375
        %v6389 = vmul.f32 %v6356, %v6375
        %v6390 = vmul.f32 %v6357, %v6375
        %v6391 = vmul.f32 %v6358, %v6375
        %v6392 = vmul.f32 %v6359, %v6375
        %v6393 = vmul.f32 %v6360, %v6375
        %v6394 = vmul.f32 %v6361, %v6375
        %v6395 = vmul.f32 %v6362, %v6375
        %v6396 = vmul.f32 %v6363, %v6375
        %v6397 = vmul.f32 %v6364, %v6375
        %v6398 = vmul.f32 %v6365, %v6375
        %v6399 = vmul.f32 %v6366, %v6375
        %v6400 = vmul.f32 %v6367, %v6375
        %v6401 = vmul.f32 %v6368, %v6375
        %v6402 = vmul.f32 %v6369, %v6375
        %v6403 = vmul.f32 %v6370, %v6375
        %v6404 = vmul.f32 %v6371, %v6375
        %v6405 = vmul.f32 %v6372, %v6375
        %v6406 = vmul.f32 %v6373, %v6375
        %v6407 = vmul.f32 %v6374, %v6375
        %v6408 = vstv %s461
        %v6409 = vmul.f32 %v6408, %v6278
        %v6410 = vmul.f32 %v6408, %v6279
        %v6411 = vmul.f32 %v6408, %v6280
        %v6412 = vmul.f32 %v6408, %v6281
        %v6413 = vmul.f32 %v6408, %v6282
        %v6414 = vmul.f32 %v6408, %v6283
        %v6415 = vmul.f32 %v6408, %v6284
        %v6416 = vmul.f32 %v6408, %v6285
        %v6417 = vmul.f32 %v6408, %v6286
        %v6418 = vmul.f32 %v6408, %v6287
        %v6419 = vmul.f32 %v6408, %v6288
        %v6420 = vmul.f32 %v6408, %v6289
        %v6421 = vmul.f32 %v6408, %v6290
        %v6422 = vmul.f32 %v6408, %v6291
        %v6423 = vmul.f32 %v6408, %v6292
        %v6424 = vmul.f32 %v6408, %v6293
        %v6425 = vmul.f32 %v6408, %v6294
        %v6426 = vmul.f32 %v6408, %v6295
        %v6427 = vmul.f32 %v6408, %v6296
        %v6428 = vmul.f32 %v6408, %v6297
        %v6429 = vmul.f32 %v6408, %v6298
        %v6430 = vmul.f32 %v6408, %v6299
        %v6431 = vmul.f32 %v6408, %v6300
        %v6432 = vmul.f32 %v6408, %v6301
        %v6433 = vmul.f32 %v6408, %v6302
        %v6434 = vmul.f32 %v6408, %v6303
        %v6435 = vmul.f32 %v6408, %v6304
        %v6436 = vmul.f32 %v6408, %v6305
        %v6437 = vmul.f32 %v6408, %v6306
        %v6438 = vmul.f32 %v6408, %v6307
        %v6439 = vmul.f32 %v6408, %v6308
        %v6440 = vmul.f32 %v6408, %v6309
        %v6441 = vstv %s464
        %v6442 = vmul.f32 %v6441, %v6376
        %v6443 = vmul.f32 %v6441, %v6377
        %v6444 = vmul.f32 %v6441, %v6378
        %v6445 = vmul.f32 %v6441, %v6379
        %v6446 = vmul.f32 %v6441, %v6380
        %v6447 = vmul.f32 %v6441, %v6381
        %v6448 = vmul.f32 %v6441, %v6382
        %v6449 = vmul.f32 %v6441, %v6383
        %v6450 = vmul.f32 %v6441, %v6384
        %v6451 = vmul.f32 %v6441, %v6385
        %v6452 = vmul.f32 %v6441, %v6386
        %v6453 = vmul.f32 %v6441, %v6387
        %v6454 = vmul.f32 %v6441, %v6388
        %v6455 = vmul.f32 %v6441, %v6389
        %v6456 = vmul.f32 %v6441, %v6390
        %v6457 = vmul.f32 %v6441, %v6391
        %v6458 = vmul.f32 %v6441, %v6392
        %v6459 = vmul.f32 %v6441, %v6393
        %v6460 = vmul.f32 %v6441, %v6394
        %v6461 = vmul.f32 %v6441, %v6395
        %v6462 = vmul.f32 %v6441, %v6396
        %v6463 = vmul.f32 %v6441, %v6397
        %v6464 = vmul.f32 %v6441, %v6398
        %v6465 = vmul.f32 %v6441, %v6399
        %v6466 = vmul.f32 %v6441, %v6400
        %v6467 = vmul.f32 %v6441, %v6401
        %v6468 = vmul.f32 %v6441, %v6402
        %v6469 = vmul.f32 %v6441, %v6403
        %v6470 = vmul.f32 %v6441, %v6404
        %v6471 = vmul.f32 %v6441, %v6405
        %v6472 = vmul.f32 %v6441, %v6406
        %v6473 = vmul.f32 %v6441, %v6407
        %v6474 = vstv %s463
        %v6475 = vmul.f32 %v6474, %v529
        %v6476 = vmul.f32 %v6474, %v530
        %v6477 = vmul.f32 %v6474, %v531
        %v6478 = vmul.f32 %v6474, %v532
        %v6479 = vmul.f32 %v6474, %v533
        %v6480 = vmul.f32 %v6474, %v534
        %v6481 = vmul.f32 %v6474, %v535
        %v6482 = vmul.f32 %v6474, %v536
        %v6483 = vmul.f32 %v6474, %v537
        %v6484 = vmul.f32 %v6474, %v538
        %v6485 = vmul.f32 %v6474, %v539
        %v6486 = vmul.f32 %v6474, %v540
        %v6487 = vmul.f32 %v6474, %v541
        %v6488 = vmul.f32 %v6474, %v542
        %v6489 = vmul.f32 %v6474, %v543
        %v6490 = vmul.f32 %v6474, %v544
        %v6491 = vmul.f32 %v6474, %v545
        %v6492 = vmul.f32 %v6474, %v546
        %v6493 = vmul.f32 %v6474, %v547
        %v6494 = vmul.f32 %v6474, %v548
        %v6495 = vmul.f32 %v6474, %v549
        %v6496 = vmul.f32 %v6474, %v550
        %v6497 = vmul.f32 %v6474, %v551
        %v6498 = vmul.f32 %v6474, %v552
        %v6499 = vmul.f32 %v6474, %v553
        %v6500 = vmul.f32 %v6474, %v554
        %v6501 = vmul.f32 %v6474, %v555
        %v6502 = vmul.f32 %v6474, %v556
        %v6503 = vmul.f32 %v6474, %v557
        %v6504 = vmul.f32 %v6474, %v558
        %v6505 = vmul.f32 %v6474, %v559
        %v6506 = vmul.f32 %v6474, %v560
        %v6507 = vadd.f32 %v6442, %v6475
        %v6508 = vadd.f32 %v6443, %v6476
        %v6509 = vadd.f32 %v6444, %v6477
        %v6510 = vadd.f32 %v6445, %v6478
        %v6511 = vadd.f32 %v6446, %v6479
        %v6512 = vadd.f32 %v6447, %v6480
        %v6513 = vadd.f32 %v6448, %v6481
        %v6514 = vadd.f32 %v6449, %v6482
        %v6515 = vadd.f32 %v6450, %v6483
        %v6516 = vadd.f32 %v6451, %v6484
        %v6517 = vadd.f32 %v6452, %v6485
        %v6518 = vadd.f32 %v6453, %v6486
        %v6519 = vadd.f32 %v6454, %v6487
        %v6520 = vadd.f32 %v6455, %v6488
        %v6521 = vadd.f32 %v6456, %v6489
        %v6522 = vadd.f32 %v6457, %v6490
        %v6523 = vadd.f32 %v6458, %v6491
        %v6524 = vadd.f32 %v6459, %v6492
        %v6525 = vadd.f32 %v6460, %v6493
        %v6526 = vadd.f32 %v6461, %v6494
        %v6527 = vadd.f32 %v6462, %v6495
        %v6528 = vadd.f32 %v6463, %v6496
        %v6529 = vadd.f32 %v6464, %v6497
        %v6530 = vadd.f32 %v6465, %v6498
        %v6531 = vadd.f32 %v6466, %v6499
        %v6532 = vadd.f32 %v6467, %v6500
        %v6533 = vadd.f32 %v6468, %v6501
        %v6534 = vadd.f32 %v6469, %v6502
        %v6535 = vadd.f32 %v6470, %v6503
        %v6536 = vadd.f32 %v6471, %v6504
        %v6537 = vadd.f32 %v6472, %v6505
        %v6538 = vadd.f32 %v6473, %v6506
        %v6539 = vstv %s462
        %v6540 = vmul.f32 %v6539, %v6507
        %v6541 = vmul.f32 %v6539, %v6508
        %v6542 = vmul.f32 %v6539, %v6509
        %v6543 = vmul.f32 %v6539, %v6510
        %v6544 = vmul.f32 %v6539, %v6511
        %v6545 = vmul.f32 %v6539, %v6512
        %v6546 = vmul.f32 %v6539, %v6513
        %v6547 = vmul.f32 %v6539, %v6514
        %v6548 = vmul.f32 %v6539, %v6515
        %v6549 = vmul.f32 %v6539, %v6516
        %v6550 = vmul.f32 %v6539, %v6517
        %v6551 = vmul.f32 %v6539, %v6518
        %v6552 = vmul.f32 %v6539, %v6519
        %v6553 = vmul.f32 %v6539, %v6520
        %v6554 = vmul.f32 %v6539, %v6521
        %v6555 = vmul.f32 %v6539, %v6522
        %v6556 = vmul.f32 %v6539, %v6523
        %v6557 = vmul.f32 %v6539, %v6524
        %v6558 = vmul.f32 %v6539, %v6525
        %v6559 = vmul.f32 %v6539, %v6526
        %v6560 = vmul.f32 %v6539, %v6527
        %v6561 = vmul.f32 %v6539, %v6528
        %v6562 = vmul.f32 %v6539, %v6529
        %v6563 = vmul.f32 %v6539, %v6530
        %v6564 = vmul.f32 %v6539, %v6531
        %v6565 = vmul.f32 %v6539, %v6532
        %v6566 = vmul.f32 %v6539, %v6533
        %v6567 = vmul.f32 %v6539, %v6534
        %v6568 = vmul.f32 %v6539, %v6535
        %v6569 = vmul.f32 %v6539, %v6536
        %v6570 = vmul.f32 %v6539, %v6537
        %v6571 = vmul.f32 %v6539, %v6538
        %v6572 = vadd.f32 %v6409, %v6540
        %v6573 = vadd.f32 %v6410, %v6541
        %v6574 = vadd.f32 %v6411, %v6542
        %v6575 = vadd.f32 %v6412, %v6543
        %v6576 = vadd.f32 %v6413, %v6544
        %v6577 = vadd.f32 %v6414, %v6545
        %v6578 = vadd.f32 %v6415, %v6546
        %v6579 = vadd.f32 %v6416, %v6547
        %v6580 = vadd.f32 %v6417, %v6548
        %v6581 = vadd.f32 %v6418, %v6549
        %v6582 = vadd.f32 %v6419, %v6550
        %v6583 = vadd.f32 %v6420, %v6551
        %v6584 = vadd.f32 %v6421, %v6552
        %v6585 = vadd.f32 %v6422, %v6553
        %v6586 = vadd.f32 %v6423, %v6554
        %v6587 = vadd.f32 %v6424, %v6555
        %v6588 = vadd.f32 %v6425, %v6556
        %v6589 = vadd.f32 %v6426, %v6557
        %v6590 = vadd.f32 %v6427, %v6558
        %v6591 = vadd.f32 %v6428, %v6559
        %v6592 = vadd.f32 %v6429, %v6560
        %v6593 = vadd.f32 %v6430, %v6561
        %v6594 = vadd.f32 %v6431, %v6562
        %v6595 = vadd.f32 %v6432, %v6563
        %v6596 = vadd.f32 %v6433, %v6564
        %v6597 = vadd.f32 %v6434, %v6565
        %v6598 = vadd.f32 %v6435, %v6566
        %v6599 = vadd.f32 %v6436, %v6567
        %v6600 = vadd.f32 %v6437, %v6568
        %v6601 = vadd.f32 %v6438, %v6569
        %v6602 = vadd.f32 %v6439, %v6570
        %v6603 = vadd.f32 %v6440, %v6571
        %6604 = vst.msk [vmem:[%s448] sm:$0xff] %vm651, %v6572
        %6605 = vst.msk [vmem:[%s448 + $0x8] sm:$0xff] %vm651, %v6573
        %6606 = vst.msk [vmem:[%s448 + $0x10] sm:$0xff] %vm651, %v6574
        %6607 = vst.msk [vmem:[%s448 + $0x18] sm:$0xff] %vm651, %v6575
        %6608 = vst.msk [vmem:[%s448 + $0x20] sm:$0xff] %vm651, %v6576
        %6609 = vst.msk [vmem:[%s448 + $0x28] sm:$0xff] %vm651, %v6577
        %6610 = vst.msk [vmem:[%s448 + $0x30] sm:$0xff] %vm651, %v6578
        %6611 = vst.msk [vmem:[%s448 + $0x38] sm:$0xff] %vm651, %v6579
        %6612 = vst.msk [vmem:[%s448 + $0x40] sm:$0xff] %vm651, %v6580
        %6613 = vst.msk [vmem:[%s448 + $0x48] sm:$0xff] %vm651, %v6581
        %6614 = vst.msk [vmem:[%s448 + $0x50] sm:$0xff] %vm651, %v6582
        %6615 = vst.msk [vmem:[%s448 + $0x58] sm:$0xff] %vm651, %v6583
        %6616 = vst.msk [vmem:[%s448 + $0x60] sm:$0xff] %vm651, %v6584
        %6617 = vst.msk [vmem:[%s448 + $0x68] sm:$0xff] %vm651, %v6585
        %6618 = vst.msk [vmem:[%s448 + $0x70] sm:$0xff] %vm651, %v6586
        %6619 = vst.msk [vmem:[%s448 + $0x78] sm:$0xff] %vm651, %v6587
        %6620 = vst.msk [vmem:[%s448 + $0x80] sm:$0xff] %vm651, %v6588
        %6621 = vst.msk [vmem:[%s448 + $0x88] sm:$0xff] %vm651, %v6589
        %6622 = vst.msk [vmem:[%s448 + $0x90] sm:$0xff] %vm651, %v6590
        %6623 = vst.msk [vmem:[%s448 + $0x98] sm:$0xff] %vm651, %v6591
        %6624 = vst.msk [vmem:[%s448 + $0xa0] sm:$0xff] %vm651, %v6592
        %6625 = vst.msk [vmem:[%s448 + $0xa8] sm:$0xff] %vm651, %v6593
        %6626 = vst.msk [vmem:[%s448 + $0xb0] sm:$0xff] %vm651, %v6594
        %6627 = vst.msk [vmem:[%s448 + $0xb8] sm:$0xff] %vm651, %v6595
        %6628 = vst.msk [vmem:[%s448 + $0xc0] sm:$0xff] %vm651, %v6596
        %6629 = vst.msk [vmem:[%s448 + $0xc8] sm:$0xff] %vm651, %v6597
        %6630 = vst.msk [vmem:[%s448 + $0xd0] sm:$0xff] %vm651, %v6598
        %6631 = vst.msk [vmem:[%s448 + $0xd8] sm:$0xff] %vm651, %v6599
        %6632 = vst.msk [vmem:[%s448 + $0xe0] sm:$0xff] %vm651, %v6600
        %6633 = vst.msk [vmem:[%s448 + $0xe8] sm:$0xff] %vm651, %v6601
        %6634 = vst.msk [vmem:[%s448 + $0xf0] sm:$0xff] %vm651, %v6602
        %6635 = vst.msk [vmem:[%s448 + $0xf8] sm:$0xff] %vm651, %v6603
        %6636 = vst.msk [vmem:[%s453] sm:$0xff] %vm651, %v6278
        %6637 = vst.msk [vmem:[%s453 + $0x8] sm:$0xff] %vm651, %v6279
        %6638 = vst.msk [vmem:[%s453 + $0x10] sm:$0xff] %vm651, %v6280
        %6639 = vst.msk [vmem:[%s453 + $0x18] sm:$0xff] %vm651, %v6281
        %6640 = vst.msk [vmem:[%s453 + $0x20] sm:$0xff] %vm651, %v6282
        %6641 = vst.msk [vmem:[%s453 + $0x28] sm:$0xff] %vm651, %v6283
        %6642 = vst.msk [vmem:[%s453 + $0x30] sm:$0xff] %vm651, %v6284
        %6643 = vst.msk [vmem:[%s453 + $0x38] sm:$0xff] %vm651, %v6285
        %6644 = vst.msk [vmem:[%s453 + $0x40] sm:$0xff] %vm651, %v6286
        %6645 = vst.msk [vmem:[%s453 + $0x48] sm:$0xff] %vm651, %v6287
        %6646 = vst.msk [vmem:[%s453 + $0x50] sm:$0xff] %vm651, %v6288
        %6647 = vst.msk [vmem:[%s453 + $0x58] sm:$0xff] %vm651, %v6289
        %6648 = vst.msk [vmem:[%s453 + $0x60] sm:$0xff] %vm651, %v6290
        %6649 = vst.msk [vmem:[%s453 + $0x68] sm:$0xff] %vm651, %v6291
        %6650 = vst.msk [vmem:[%s453 + $0x70] sm:$0xff] %vm651, %v6292
        %6651 = vst.msk [vmem:[%s453 + $0x78] sm:$0xff] %vm651, %v6293
        %6652 = vst.msk [vmem:[%s453 + $0x80] sm:$0xff] %vm651, %v6294
        %6653 = vst.msk [vmem:[%s453 + $0x88] sm:$0xff] %vm651, %v6295
        %6654 = vst.msk [vmem:[%s453 + $0x90] sm:$0xff] %vm651, %v6296
        %6655 = vst.msk [vmem:[%s453 + $0x98] sm:$0xff] %vm651, %v6297
        %6656 = vst.msk [vmem:[%s453 + $0xa0] sm:$0xff] %vm651, %v6298
        %6657 = vst.msk [vmem:[%s453 + $0xa8] sm:$0xff] %vm651, %v6299
        %6658 = vst.msk [vmem:[%s453 + $0xb0] sm:$0xff] %vm651, %v6300
        %6659 = vst.msk [vmem:[%s453 + $0xb8] sm:$0xff] %vm651, %v6301
        %6660 = vst.msk [vmem:[%s453 + $0xc0] sm:$0xff] %vm651, %v6302
        %6661 = vst.msk [vmem:[%s453 + $0xc8] sm:$0xff] %vm651, %v6303
        %6662 = vst.msk [vmem:[%s453 + $0xd0] sm:$0xff] %vm651, %v6304
        %6663 = vst.msk [vmem:[%s453 + $0xd8] sm:$0xff] %vm651, %v6305
        %6664 = vst.msk [vmem:[%s453 + $0xe0] sm:$0xff] %vm651, %v6306
        %6665 = vst.msk [vmem:[%s453 + $0xe8] sm:$0xff] %vm651, %v6307
        %6666 = vst.msk [vmem:[%s453 + $0xf0] sm:$0xff] %vm651, %v6308
        %6667 = vst.msk [vmem:[%s453 + $0xf8] sm:$0xff] %vm651, %v6309
        %p6668 = scmp.lt.s32.totalorder %s24, 1
        %s6669 = scalar_select %p6668, %s24, 1
        %s6670 = smul.addr %s6669, 32
        %s6671 = smul.addr %s6670, 8
        %s6672 = scalar_lea.vmem %s10, %s6671
        %p6673 = scmp.lt.s32.totalorder %s24, 1
        %s6674 = scalar_select %p6673, %s24, 1
        %s6675 = smul.addr %s6674, 32
        %s6676 = smul.addr %s6675, 8
        %s6677 = scalar_lea.vmem %s11, %s6676
        // Predicated region
        $region65: #{_fused_step.1} parent=59 // pred_check
          %p6678 = pneg %p267
        $region66: #{_fused_step.1} parent=59 // pred_check_branch
          %6680 = sbr.rel (%p6678) target = $region68
        $region67: #{_fused_step.1} parent=59 // pred_region
          _
        $region68: #{_fused_step.1} parent=59 // pred_fallthru
          _
        // Predicated region
        $region69: #{_fused_step.1} parent=59 // pred_check
          %p6681 = pneg %p293
        $region70: #{_fused_step.1} parent=59 // pred_check_branch
          %6683 = sbr.rel (%p6681) target = $region72
        $region71: #{_fused_step.1} parent=59 // pred_region
          _
        $region72: #{_fused_step.1} parent=59 // pred_fallthru
          _
      $region60: #{_fused_step.1} parent=5 // pred_fallthru
        _
      %p6684 = scmp.le.s32.totalorder 2, %s19
      // Predicated region
      $region73: #{_fused_step.1} parent=5 // pred_check
        %p6685 = pneg %p6684
      $region74: #{_fused_step.1} parent=5 // pred_check_branch
        %6687 = sbr.rel (%p6685) target = $region76
      $region75: #{_fused_step.1} parent=5 // pred_region
        %s6688 = ssub.s32 %s19, 2
        // Predicated region
        $region77: #{_fused_step.1} parent=75 // pred_check
          %p6689 = pneg %p273
        $region78: #{_fused_step.1} parent=75 // pred_check_branch
          %6691 = sbr.rel (%p6689) target = $region80
        $region79: #{_fused_step.1} parent=75 // pred_region
          %p6692 = scmp.lt.s32.totalorder %s25, 1
          %s6693 = scalar_select %p6692, %s25, 1
          %s6694 = smul.addr %s6693, 32
          %s6695 = smul.addr %s6694, 8
          %s6696 = scalar_lea.vmem %s10, %s6695
        $region80: #{_fused_step.1} parent=75 // pred_fallthru
          _
        // Predicated region
        $region81: #{_fused_step.1} parent=75 // pred_check
          %p6697 = pneg %p299
        $region82: #{_fused_step.1} parent=75 // pred_check_branch
          %6699 = sbr.rel (%p6697) target = $region84
        $region83: #{_fused_step.1} parent=75 // pred_region
          %p6700 = scmp.lt.s32.totalorder %s25, 1
          %s6701 = scalar_select %p6700, %s25, 1
          %s6702 = smul.addr %s6701, 32
          %s6703 = smul.addr %s6702, 8
          %s6704 = scalar_lea.vmem %s11, %s6703
        $region84: #{_fused_step.1} parent=75 // pred_fallthru
          _
      $region76: #{_fused_step.1} parent=5 // pred_fallthru
        _
    $region6: #{_fused_step.1} parent=1 // loop_footer
      %s23 = sadd.s32 1, %s19
    $region7: #{_fused_step.1} parent=1 // loop_footer_branch
      %18 = sbr.rel target = $region3
    $region8: #{_fused_step.1} parent=1 // loop_exit
      _
    %6705 = vsyncpa [#allocation5], 1
    %s6706 = scalar_lea.sflag [#allocation5], 1
    %6707 = vsyncpa %s6706, 1

</llo_original>
